<compile_context>
chip_gen: v5e
topology: v5e:2x2
jax: 0.10.0
libtpu: 0.0.40
codegen_flags: <defaults>
</compile_context>

<pallas_src>
import functools

import numpy as np
import jax
import jax.numpy as jnp
from jax import lax
from jax.experimental import pallas as pl
from jax.experimental.pallas import tpu as pltpu


# Images per grid step, packed along the sublane (row) axis.  Multiple of 8
# (f32 tile) and 16 (bf16 tile) so every row slice/offset is tile-aligned.
# 32 fills v6e/v7x MXU rows even further if batches allow.
B_TILE = 16


# ---------------------------------------------------------------------------
# Layer geometry
# ---------------------------------------------------------------------------
def _geometry(grid_shape):
    K = int(grid_shape * 3 / 10)
    enc_ch = [(1, 4), (4, 8), (8, 16)]
    dec_ch = [(16, 8), (8, 4), (4, 1)]
    sizes = [grid_shape - i * (K - 1) for i in range(4)]  # e.g. 16,13,10,7
    assert sizes[-1] >= 1, "grid_shape too small for 3 conv layers"
    layers = []
    for i, (cin, cout) in enumerate(enc_ch):
        layers.append(dict(kind="conv", cin=cin, cout=cout,
                           H=sizes[i], W=sizes[i], Ho=sizes[i + 1], Wo=sizes[i + 1]))
    for i, (cin, cout) in enumerate(dec_ch):
        layers.append(dict(kind="convT", cin=cin, cout=cout,
                           H=sizes[3 - i], W=sizes[3 - i], Ho=sizes[2 - i], Wo=sizes[2 - i]))
    return K, layers


# ---------------------------------------------------------------------------
# Parameter init (deterministic, PyTorch-style uniform(-1/sqrt(fan_in), ...)).
# Raw weights kept bf16-representable so kernel and f32 reference share the
# exact same weight values.
# ---------------------------------------------------------------------------
def init_params(key, grid_shape):
    K, layers = _geometry(grid_shape)
    params = {}
    keys = jax.random.split(key, 2 * len(layers))
    for i, L in enumerate(layers):
        cin, cout = L["cin"], L["cout"]
        if L["kind"] == "conv":
            wshape = (cout, cin, K, K)
            fan_in = cin * K * K
        else:  # ConvTranspose2d: weight (Cin, Cout, K, K), fan_in = Cout*K*K
            wshape = (cin, cout, K, K)
            fan_in = cout * K * K
        bound = 1.0 / float(np.sqrt(fan_in))
        w = jax.random.uniform(keys[2 * i], wshape, jnp.float32, -bound, bound)
        b = jax.random.uniform(keys[2 * i + 1], (cout,), jnp.float32, -bound, bound)
        params[f"w{i}"] = w.astype(jnp.bfloat16).astype(jnp.float32)
        params[f"b{i}"] = b
    return params


# ---------------------------------------------------------------------------
# Init-time weight prep: banded matrices (one per vertical tap dy).
#
# Activation layout: A[h*B_TILE + b, xin*Cin + ci].  Per layer (per image b):
#   out[h, x*Cout + co] = sum_dy ( A_in[h+dy, :] @ WB[dy] )[x*Cout + co] + bias
# encoder (valid conv):   WB[dy, xin*Cin+ci, x*Cout+co] = W[co,ci,dy,xin-x],  0<=xin-x<K
# decoder (ConvTranspose, rows pre-padded by K-1 zero row-groups top/bottom):
#                         WB[dy, xin*Cin+ci, x*Cout+co] = W[ci,co,K-1-dy,x-xin], 0<=x-xin<K
# ---------------------------------------------------------------------------
def _banded_conv(w_oihw, W_in):
    Cout, Cin, K, _ = w_oihw.shape
    Wo = W_in - K + 1
    WB = np.zeros((K, W_in * Cin, Wo * Cout), np.float32)
    for dy in range(K):
        for x in range(Wo):
            for dx in range(K):
                xin = x + dx
                WB[dy, xin * Cin:(xin + 1) * Cin, x * Cout:(x + 1) * Cout] = \
                    w_oihw[:, :, dy, dx].T
    return WB


def _banded_convT(w_iokk, W_in):
    Cin, Cout, K, _ = w_iokk.shape
    Wo = W_in + K - 1
    WB = np.zeros((K, W_in * Cin, Wo * Cout), np.float32)
    for dy in range(K):
        for xin in range(W_in):
            for x in range(xin, xin + K):          # 0 <= x - xin < K
                WB[dy, xin * Cin:(xin + 1) * Cin, x * Cout:(x + 1) * Cout] = \
                    w_iokk[:, :, K - 1 - dy, x - xin]
    return WB


def prep_kernel_params(params, grid_shape):
    K, layers = _geometry(grid_shape)
    Ws, Bs = [], []
    for i, L in enumerate(layers):
        w = np.asarray(params[f"w{i}"], np.float32)
        b = np.asarray(params[f"b{i}"], np.float32)
        if L["kind"] == "conv":
            wb = _banded_conv(w, L["W"])
        else:
            wb = _banded_convT(w, L["W"])
        Ws.append(jnp.asarray(wb, jnp.bfloat16))                           # (K, W*Cin, Wo*Cout)
        Bs.append(jnp.asarray(np.tile(b, L["Wo"])[None, :], jnp.float32))  # (1, Wo*Cout)
    return tuple(Ws), tuple(Bs)


# ---------------------------------------------------------------------------
# Fused Pallas kernel: whole 6-layer forward for B_TILE images per grid step.
# All activation buffers are (H*B_TILE, W*C) with row index = h*B_TILE + b.
# ---------------------------------------------------------------------------
def _fused_autoencoder_kernel(x_ref, w0, w1, w2, w3, w4, w5,
                              b0, b1, b2, b3, b4, b5,
                              o_ref, s1, s2, p3, p4, p5, *, kk, bt):
    pad = kk - 1

    def layer(in_ref, w_ref, b_ref, out_ref, out_off, act):
        ho = in_ref.shape[0] // bt - pad          # output height per image
        r = ho * bt                               # LHS rows for the matmuls
        acc = jnp.dot(in_ref[0:r, :], w_ref[0],
                      preferred_element_type=jnp.float32)
        for dy in range(1, kk):
            acc = acc + jnp.dot(in_ref[dy * bt:dy * bt + r, :], w_ref[dy],
                                preferred_element_type=jnp.float32)
        acc = acc + b_ref[...]
        if act:
            acc = jnp.maximum(acc, 0.01 * acc)    # LeakyReLU(0.01)
        o = out_off * bt
        out_ref[o:o + r, :] = acc.astype(out_ref.dtype)

    # Zero ONLY the K-1 pad row-groups of the decoder inputs (interior rows
    # are fully overwritten every step; pad rows are never written by layers).
    # Unconditional (not program_id==0-gated) so it is correct under megacore
    # grid partitioning where each core has its own scratch.
    for p in (p3, p4, p5):
        zrows = jnp.zeros((pad * bt, p.shape[1]), p.dtype)
        p[0:pad * bt, :] = zrows
        p[p.shape[0] - pad * bt:, :] = zrows

    # encoder
    layer(x_ref, w0, b0, s1, 0, True)
    layer(s1,    w1, b1, s2, 0, True)
    layer(s2,    w2, b2, p3, pad, True)
    # decoder (full conv on row-padded inputs; cols folded into banded weights)
    layer(p3,    w3, b3, p4, pad, True)
    layer(p4,    w4, b4, p5, pad, True)
    layer(p5,    w5, b5, o_ref, 0, False)


# ---------------------------------------------------------------------------
# Wrapper: one pallas_call for the whole forward pass.
# ---------------------------------------------------------------------------
def autoencoder_forward(x, Ws, Bs, grid_shape, b_tile=B_TILE):
    K, layers = _geometry(grid_shape)
    G = grid_shape
    pad = K - 1

    x = x.reshape(-1, G, G)
    B = x.shape[0]
    n_t = -(-B // b_tile)               # number of grid steps (>=2 keeps both
    Bp = n_t * b_tile                   # v7x TensorCores busy for BATCH>=2*b_tile)
    if Bp != B:
        x = jnp.concatenate([x, jnp.zeros((Bp - B, G, G), x.dtype)], axis=0)

    # Layout plumbing: batch into the sublane axis (row = h*b_tile + b), bf16.
    xk = (x.astype(jnp.bfloat16)
           .reshape(n_t, b_tile, G, G)
           .transpose(0, 2, 1, 3)
           .reshape(n_t, G * b_tile, G))

    # Scratch: inter-layer activations in bf16, rows = H*b_tile, lanes = W*C.
    scratch = [
        pltpu.VMEM((layers[0]["Ho"] * b_tile, layers[0]["Wo"] * layers[0]["cout"]), jnp.bfloat16),
        pltpu.VMEM((layers[1]["Ho"] * b_tile, layers[1]["Wo"] * layers[1]["cout"]), jnp.bfloat16),
    ]
    for li in (2, 3, 4):  # decoder inputs: row-padded by K-1 row-groups top+bottom
        scratch.append(pltpu.VMEM(((layers[li]["Ho"] + 2 * pad) * b_tile,
                                   layers[li]["Wo"] * layers[li]["cout"]), jnp.bfloat16))

    in_specs = [pl.BlockSpec((None, G * b_tile, G), lambda i: (i, 0, 0))]
    in_specs += [pl.BlockSpec(w.shape, lambda i: (0, 0, 0)) for w in Ws]
    in_specs += [pl.BlockSpec(bb.shape, lambda i: (0, 0)) for bb in Bs]
    out_specs = pl.BlockSpec((None, G * b_tile, G), lambda i: (i, 0, 0))

    flops = 2 * Bp * sum(K * L["Ho"] * (L["W"] * L["cin"]) * (L["Wo"] * L["cout"])
                         for L in layers)
    bytes_accessed = Bp * G * G * 2 + Bp * G * G * 4 \
        + sum(int(np.prod(w.shape)) * 2 for w in Ws) \
        + sum(int(np.prod(bb.shape)) * 4 for bb in Bs)

    out = pl.pallas_call(
        functools.partial(_fused_autoencoder_kernel, kk=K, bt=b_tile),
        out_shape=jax.ShapeDtypeStruct((n_t, G * b_tile, G), jnp.float32),
        grid_spec=pltpu.PrefetchScalarGridSpec(
            num_scalar_prefetch=0,
            grid=(n_t,),
            in_specs=in_specs,
            out_specs=out_specs,
            scratch_shapes=scratch,
        ),
        compiler_params=pltpu.CompilerParams(dimension_semantics=("parallel",)),
        cost_estimate=pl.CostEstimate(flops=flops, transcendentals=0,
                                      bytes_accessed=bytes_accessed),
    )(xk, *Ws, *Bs)

    out = (out.reshape(n_t, G, b_tile, G)
              .transpose(0, 2, 1, 3)
              .reshape(Bp, G, G))[:B]
    return out.reshape(-1, 1, G, G)


# ---------------------------------------------------------------------------
# Pure-JAX reference (f32) for correctness checking.
# ---------------------------------------------------------------------------
def reference_forward(x, params, grid_shape):
    K, layers = _geometry(grid_shape)
    G = grid_shape
    y = jnp.transpose(x.reshape(-1, 1, G, G), (0, 2, 3, 1))  # NHWC
    dn = ("NHWC", "HWIO", "NHWC")
    for i, L in enumerate(layers):
        w = params[f"w{i}"]
        b = params[f"b{i}"]
        if L["kind"] == "conv":
            rhs = jnp.transpose(w, (2, 3, 1, 0))                    # (K,K,Cin,Cout)
            y = lax.conv_general_dilated(y, rhs, (1, 1), "VALID",
                                         dimension_numbers=dn,
                                         precision=lax.Precision.HIGHEST)
        else:  # ConvTranspose2d == full conv with spatially-flipped kernel
            rhs = jnp.transpose(jnp.flip(w, (2, 3)), (2, 3, 0, 1))  # (K,K,Cin,Cout)
            y = lax.conv_general_dilated(y, rhs, (1, 1),
                                         [(K - 1, K - 1), (K - 1, K - 1)],
                                         dimension_numbers=dn,
                                         precision=lax.Precision.HIGHEST)
        y = y + b
        if i < len(layers) - 1:
            y = jnp.where(y > 0, y, 0.01 * y)
    return jnp.transpose(y, (0, 3, 1, 2)).reshape(-1, 1, G, G)


if __name__ == "__main__":
    GRID = 16    # kernel_size = int(16*3/10) = 4
    BATCH = 32   # 2 grid steps of B_TILE=16 images -> feeds both v7x TensorCores

    key = jax.random.PRNGKey(0)
    pkey, xkey = jax.random.split(key)
    params = init_params(pkey, GRID)
    Ws, Bs = prep_kernel_params(params, GRID)
    x = jax.random.normal(xkey, (BATCH, 1, GRID, GRID), jnp.float32)

    fwd = jax.jit(functools.partial(autoencoder_forward, grid_shape=GRID))
    out = jax.block_until_ready(fwd(x, Ws, Bs))

    assert out.shape == (BATCH, 1, GRID, GRID), out.shape
    assert bool(jnp.all(jnp.isfinite(out)))

    ref = jax.block_until_ready(reference_forward(x, params, GRID))
    rel = float(jnp.linalg.norm(out - ref) / (jnp.linalg.norm(ref) + 1e-12))
    assert rel < 0.08, f"relative error vs reference too large: {rel}"

    print("KERNEL_OK")
</pallas_src>

<mosaic_0001>
module attributes {stable_mosaic.version = 11 : i64} {
  func.func @_fused_autoencoder_kernel(%arg0: i32, %arg1: memref<1x256x16xbf16, #tpu.memory_space<vmem>>, %arg2: memref<4x16x52xbf16, #tpu.memory_space<vmem>>, %arg3: memref<4x52x80xbf16, #tpu.memory_space<vmem>>, %arg4: memref<4x80x112xbf16, #tpu.memory_space<vmem>>, %arg5: memref<4x112x80xbf16, #tpu.memory_space<vmem>>, %arg6: memref<4x80x52xbf16, #tpu.memory_space<vmem>>, %arg7: memref<4x52x16xbf16, #tpu.memory_space<vmem>>, %arg8: memref<1x52xf32, #tpu.memory_space<vmem>>, %arg9: memref<1x80xf32, #tpu.memory_space<vmem>>, %arg10: memref<1x112xf32, #tpu.memory_space<vmem>>, %arg11: memref<1x80xf32, #tpu.memory_space<vmem>>, %arg12: memref<1x52xf32, #tpu.memory_space<vmem>>, %arg13: memref<1x16xf32, #tpu.memory_space<vmem>>, %arg14: memref<1x256x16xf32, #tpu.memory_space<vmem>>, %arg15: memref<208x52xbf16, #tpu.memory_space<vmem>>, %arg16: memref<160x80xbf16, #tpu.memory_space<vmem>>, %arg17: memref<208x112xbf16, #tpu.memory_space<vmem>>, %arg18: memref<256x80xbf16, #tpu.memory_space<vmem>>, %arg19: memref<304x52xbf16, #tpu.memory_space<vmem>>) attributes {dimension_semantics = [#tpu.dimension_semantics<parallel>], iteration_bounds = array<i64: 2>, scalar_prefetch = 0 : i64, scratch_operands = 5 : i64, tpu.core_type = #tpu.core_type<tc>, window_params = [{transform_indices = @transform_0, window_bounds = array<i64: 1, 256, 16>}, {pipeline_mode = #tpu.pipeline_mode<synchronous>, transform_indices = @transform_1, window_bounds = array<i64: 4, 16, 52>}, {pipeline_mode = #tpu.pipeline_mode<synchronous>, transform_indices = @transform_2, window_bounds = array<i64: 4, 52, 80>}, {pipeline_mode = #tpu.pipeline_mode<synchronous>, transform_indices = @transform_3, window_bounds = array<i64: 4, 80, 112>}, {pipeline_mode = #tpu.pipeline_mode<synchronous>, transform_indices = @transform_4, window_bounds = array<i64: 4, 112, 80>}, {pipeline_mode = #tpu.pipeline_mode<synchronous>, transform_indices = @transform_5, window_bounds = array<i64: 4, 80, 52>}, {pipeline_mode = #tpu.pipeline_mode<synchronous>, transform_indices = @transform_6, window_bounds = array<i64: 4, 52, 16>}, {pipeline_mode = #tpu.pipeline_mode<synchronous>, transform_indices = @transform_7, window_bounds = array<i64: 1, 52>}, {pipeline_mode = #tpu.pipeline_mode<synchronous>, transform_indices = @transform_8, window_bounds = array<i64: 1, 80>}, {pipeline_mode = #tpu.pipeline_mode<synchronous>, transform_indices = @transform_9, window_bounds = array<i64: 1, 112>}, {pipeline_mode = #tpu.pipeline_mode<synchronous>, transform_indices = @transform_10, window_bounds = array<i64: 1, 80>}, {pipeline_mode = #tpu.pipeline_mode<synchronous>, transform_indices = @transform_11, window_bounds = array<i64: 1, 52>}, {pipeline_mode = #tpu.pipeline_mode<synchronous>, transform_indices = @transform_12, window_bounds = array<i64: 1, 16>}, {transform_indices = @transform_13, window_bounds = array<i64: 1, 256, 16>}]} {
    %cst = arith.constant 0.000000e+00 : bf16
    %0 = vector.broadcast %cst : bf16 to vector<48x112xbf16>
    %c0 = arith.constant 0 : index
    %c0_0 = arith.constant 0 : index
    %1 = vector.load %arg17[%c0, %c0_0] : memref<208x112xbf16, #tpu.memory_space<vmem>>, vector<48x112xbf16>
    tpu.vector_store %arg17[%c0, %c0_0], %0 {strides = array<i32>} : memref<208x112xbf16, #tpu.memory_space<vmem>>, vector<48x112xbf16>,
    %c160 = arith.constant 160 : index
    %c0_1 = arith.constant 0 : index
    %2 = vector.load %arg17[%c160, %c0_1] : memref<208x112xbf16, #tpu.memory_space<vmem>>, vector<48x112xbf16>
    tpu.vector_store %arg17[%c160, %c0_1], %0 {strides = array<i32>} : memref<208x112xbf16, #tpu.memory_space<vmem>>, vector<48x112xbf16>,
    %cst_2 = arith.constant 0.000000e+00 : bf16
    %3 = vector.broadcast %cst_2 : bf16 to vector<48x80xbf16>
    %c0_3 = arith.constant 0 : index
    %c0_4 = arith.constant 0 : index
    %4 = vector.load %arg18[%c0_3, %c0_4] : memref<256x80xbf16, #tpu.memory_space<vmem>>, vector<48x80xbf16>
    tpu.vector_store %arg18[%c0_3, %c0_4], %3 {strides = array<i32>} : memref<256x80xbf16, #tpu.memory_space<vmem>>, vector<48x80xbf16>,
    %c208 = arith.constant 208 : index
    %c0_5 = arith.constant 0 : index
    %5 = vector.load %arg18[%c208, %c0_5] : memref<256x80xbf16, #tpu.memory_space<vmem>>, vector<48x80xbf16>
    tpu.vector_store %arg18[%c208, %c0_5], %3 {strides = array<i32>} : memref<256x80xbf16, #tpu.memory_space<vmem>>, vector<48x80xbf16>,
    %cst_6 = arith.constant 0.000000e+00 : bf16
    %6 = vector.broadcast %cst_6 : bf16 to vector<48x52xbf16>
    %c0_7 = arith.constant 0 : index
    %c0_8 = arith.constant 0 : index
    %7 = vector.load %arg19[%c0_7, %c0_8] : memref<304x52xbf16, #tpu.memory_space<vmem>>, vector<48x52xbf16>
    tpu.vector_store %arg19[%c0_7, %c0_8], %6 {strides = array<i32>} : memref<304x52xbf16, #tpu.memory_space<vmem>>, vector<48x52xbf16>,
    %c256 = arith.constant 256 : index
    %c0_9 = arith.constant 0 : index
    %8 = vector.load %arg19[%c256, %c0_9] : memref<304x52xbf16, #tpu.memory_space<vmem>>, vector<48x52xbf16>
    tpu.vector_store %arg19[%c256, %c0_9], %6 {strides = array<i32>} : memref<304x52xbf16, #tpu.memory_space<vmem>>, vector<48x52xbf16>,
    %c0_10 = arith.constant 0 : index
    %c0_11 = arith.constant 0 : index
    %c0_12 = arith.constant 0 : index
    %9 = vector.load %arg1[%c0_10, %c0_11, %c0_12] : memref<1x256x16xbf16, #tpu.memory_space<vmem>>, vector<1x208x16xbf16>
    %10 = vector.shape_cast %9 : vector<1x208x16xbf16> to vector<208x16xbf16>
    %c0_13 = arith.constant 0 : index
    %c0_14 = arith.constant 0 : index
    %c0_15 = arith.constant 0 : index
    %11 = vector.load %arg2[%c0_13, %c0_14, %c0_15] : memref<4x16x52xbf16, #tpu.memory_space<vmem>>, vector<1x16x52xbf16>
    %12 = vector.shape_cast %11 : vector<1x16x52xbf16> to vector<16x52xbf16>
    %cst_16 = arith.constant dense<0.000000e+00> : vector<208x52xf32>
    %13 = tpu.matmul %10, %12, %cst_16 {dimension_numbers = #tpu.dot_dimension_numbers<[1], [0], [0], [1], [0, 0, 1, 1], [], []>} : vector<208x16xbf16>, vector<16x52xbf16>, vector<208x52xf32> -> vector<208x52xf32>
    %c0_17 = arith.constant 0 : index
    %c16 = arith.constant 16 : index
    %c0_18 = arith.constant 0 : index
    %14 = vector.load %arg1[%c0_17, %c16, %c0_18] : memref<1x256x16xbf16, #tpu.memory_space<vmem>>, vector<1x208x16xbf16>
    %15 = vector.shape_cast %14 : vector<1x208x16xbf16> to vector<208x16xbf16>
    %c1 = arith.constant 1 : index
    %c0_19 = arith.constant 0 : index
    %c0_20 = arith.constant 0 : index
    %16 = vector.load %arg2[%c1, %c0_19, %c0_20] : memref<4x16x52xbf16, #tpu.memory_space<vmem>>, vector<1x16x52xbf16>
    %17 = vector.shape_cast %16 : vector<1x16x52xbf16> to vector<16x52xbf16>
    %cst_21 = arith.constant dense<0.000000e+00> : vector<208x52xf32>
    %18 = tpu.matmul %15, %17, %cst_21 {dimension_numbers = #tpu.dot_dimension_numbers<[1], [0], [0], [1], [0, 0, 1, 1], [], []>} : vector<208x16xbf16>, vector<16x52xbf16>, vector<208x52xf32> -> vector<208x52xf32>
    %19 = arith.addf %13, %18 : vector<208x52xf32>
    %c0_22 = arith.constant 0 : index
    %c32 = arith.constant 32 : index
    %c0_23 = arith.constant 0 : index
    %20 = vector.load %arg1[%c0_22, %c32, %c0_23] : memref<1x256x16xbf16, #tpu.memory_space<vmem>>, vector<1x208x16xbf16>
    %21 = vector.shape_cast %20 : vector<1x208x16xbf16> to vector<208x16xbf16>
    %c2 = arith.constant 2 : index
    %c0_24 = arith.constant 0 : index
    %c0_25 = arith.constant 0 : index
    %22 = vector.load %arg2[%c2, %c0_24, %c0_25] : memref<4x16x52xbf16, #tpu.memory_space<vmem>>, vector<1x16x52xbf16>
    %23 = vector.shape_cast %22 : vector<1x16x52xbf16> to vector<16x52xbf16>
    %cst_26 = arith.constant dense<0.000000e+00> : vector<208x52xf32>
    %24 = tpu.matmul %21, %23, %cst_26 {dimension_numbers = #tpu.dot_dimension_numbers<[1], [0], [0], [1], [0, 0, 1, 1], [], []>} : vector<208x16xbf16>, vector<16x52xbf16>, vector<208x52xf32> -> vector<208x52xf32>
    %25 = arith.addf %19, %24 : vector<208x52xf32>
    %c0_27 = arith.constant 0 : index
    %c48 = arith.constant 48 : index
    %c0_28 = arith.constant 0 : index
    %26 = vector.load %arg1[%c0_27, %c48, %c0_28] : memref<1x256x16xbf16, #tpu.memory_space<vmem>>, vector<1x208x16xbf16>
    %27 = vector.shape_cast %26 : vector<1x208x16xbf16> to vector<208x16xbf16>
    %c3 = arith.constant 3 : index
    %c0_29 = arith.constant 0 : index
    %c0_30 = arith.constant 0 : index
    %28 = vector.load %arg2[%c3, %c0_29, %c0_30] : memref<4x16x52xbf16, #tpu.memory_space<vmem>>, vector<1x16x52xbf16>
    %29 = vector.shape_cast %28 : vector<1x16x52xbf16> to vector<16x52xbf16>
    %cst_31 = arith.constant dense<0.000000e+00> : vector<208x52xf32>
    %30 = tpu.matmul %27, %29, %cst_31 {dimension_numbers = #tpu.dot_dimension_numbers<[1], [0], [0], [1], [0, 0, 1, 1], [], []>} : vector<208x16xbf16>, vector<16x52xbf16>, vector<208x52xf32> -> vector<208x52xf32>
    %31 = arith.addf %25, %30 : vector<208x52xf32>
    %c0_32 = arith.constant 0 : index
    %c0_33 = arith.constant 0 : index
    %32 = vector.load %arg8[%c0_32, %c0_33] : memref<1x52xf32, #tpu.memory_space<vmem>>, vector<1x52xf32>
    %33 = vector.broadcast %32 : vector<1x52xf32> to vector<208x52xf32>
    %34 = arith.addf %31, %33 : vector<208x52xf32>
    %cst_34 = arith.constant 0.00999999977 : f32
    %35 = vector.broadcast %cst_34 : f32 to vector<208x52xf32>
    %36 = arith.mulf %35, %34 : vector<208x52xf32>
    %37 = arith.maximumf %34, %36 : vector<208x52xf32>
    %38 = arith.truncf %37 : vector<208x52xf32> to vector<208x52xbf16>
    %c0_35 = arith.constant 0 : index
    %c0_36 = arith.constant 0 : index
    %39 = vector.load %arg15[%c0_35, %c0_36] : memref<208x52xbf16, #tpu.memory_space<vmem>>, vector<208x52xbf16>
    tpu.vector_store %arg15[%c0_35, %c0_36], %38 {strides = array<i32>} : memref<208x52xbf16, #tpu.memory_space<vmem>>, vector<208x52xbf16>,
    %c0_37 = arith.constant 0 : index
    %c0_38 = arith.constant 0 : index
    %40 = vector.load %arg15[%c0_37, %c0_38] : memref<208x52xbf16, #tpu.memory_space<vmem>>, vector<160x52xbf16>
    %c0_39 = arith.constant 0 : index
    %c0_40 = arith.constant 0 : index
    %c0_41 = arith.constant 0 : index
    %41 = vector.load %arg3[%c0_39, %c0_40, %c0_41] : memref<4x52x80xbf16, #tpu.memory_space<vmem>>, vector<1x52x80xbf16>
    %42 = vector.shape_cast %41 : vector<1x52x80xbf16> to vector<52x80xbf16>
    %cst_42 = arith.constant dense<0.000000e+00> : vector<160x80xf32>
    %43 = tpu.matmul %40, %42, %cst_42 {dimension_numbers = #tpu.dot_dimension_numbers<[1], [0], [0], [1], [0, 0, 1, 1], [], []>} : vector<160x52xbf16>, vector<52x80xbf16>, vector<160x80xf32> -> vector<160x80xf32>
    %c16_43 = arith.constant 16 : index
    %c0_44 = arith.constant 0 : index
    %44 = vector.load %arg15[%c16_43, %c0_44] : memref<208x52xbf16, #tpu.memory_space<vmem>>, vector<160x52xbf16>
    %c1_45 = arith.constant 1 : index
    %c0_46 = arith.constant 0 : index
    %c0_47 = arith.constant 0 : index
    %45 = vector.load %arg3[%c1_45, %c0_46, %c0_47] : memref<4x52x80xbf16, #tpu.memory_space<vmem>>, vector<1x52x80xbf16>
    %46 = vector.shape_cast %45 : vector<1x52x80xbf16> to vector<52x80xbf16>
    %cst_48 = arith.constant dense<0.000000e+00> : vector<160x80xf32>
    %47 = tpu.matmul %44, %46, %cst_48 {dimension_numbers = #tpu.dot_dimension_numbers<[1], [0], [0], [1], [0, 0, 1, 1], [], []>} : vector<160x52xbf16>, vector<52x80xbf16>, vector<160x80xf32> -> vector<160x80xf32>
    %48 = arith.addf %43, %47 : vector<160x80xf32>
    %c32_49 = arith.constant 32 : index
    %c0_50 = arith.constant 0 : index
    %49 = vector.load %arg15[%c32_49, %c0_50] : memref<208x52xbf16, #tpu.memory_space<vmem>>, vector<160x52xbf16>
    %c2_51 = arith.constant 2 : index
    %c0_52 = arith.constant 0 : index
    %c0_53 = arith.constant 0 : index
    %50 = vector.load %arg3[%c2_51, %c0_52, %c0_53] : memref<4x52x80xbf16, #tpu.memory_space<vmem>>, vector<1x52x80xbf16>
    %51 = vector.shape_cast %50 : vector<1x52x80xbf16> to vector<52x80xbf16>
    %cst_54 = arith.constant dense<0.000000e+00> : vector<160x80xf32>
    %52 = tpu.matmul %49, %51, %cst_54 {dimension_numbers = #tpu.dot_dimension_numbers<[1], [0], [0], [1], [0, 0, 1, 1], [], []>} : vector<160x52xbf16>, vector<52x80xbf16>, vector<160x80xf32> -> vector<160x80xf32>
    %53 = arith.addf %48, %52 : vector<160x80xf32>
    %c48_55 = arith.constant 48 : index
    %c0_56 = arith.constant 0 : index
    %54 = vector.load %arg15[%c48_55, %c0_56] : memref<208x52xbf16, #tpu.memory_space<vmem>>, vector<160x52xbf16>
    %c3_57 = arith.constant 3 : index
    %c0_58 = arith.constant 0 : index
    %c0_59 = arith.constant 0 : index
    %55 = vector.load %arg3[%c3_57, %c0_58, %c0_59] : memref<4x52x80xbf16, #tpu.memory_space<vmem>>, vector<1x52x80xbf16>
    %56 = vector.shape_cast %55 : vector<1x52x80xbf16> to vector<52x80xbf16>
    %cst_60 = arith.constant dense<0.000000e+00> : vector<160x80xf32>
    %57 = tpu.matmul %54, %56, %cst_60 {dimension_numbers = #tpu.dot_dimension_numbers<[1], [0], [0], [1], [0, 0, 1, 1], [], []>} : vector<160x52xbf16>, vector<52x80xbf16>, vector<160x80xf32> -> vector<160x80xf32>
    %58 = arith.addf %53, %57 : vector<160x80xf32>
    %c0_61 = arith.constant 0 : index
    %c0_62 = arith.constant 0 : index
    %59 = vector.load %arg9[%c0_61, %c0_62] : memref<1x80xf32, #tpu.memory_space<vmem>>, vector<1x80xf32>
    %60 = vector.broadcast %59 : vector<1x80xf32> to vector<160x80xf32>
    %61 = arith.addf %58, %60 : vector<160x80xf32>
    %cst_63 = arith.constant 0.00999999977 : f32
    %62 = vector.broadcast %cst_63 : f32 to vector<160x80xf32>
    %63 = arith.mulf %62, %61 : vector<160x80xf32>
    %64 = arith.maximumf %61, %63 : vector<160x80xf32>
    %65 = arith.truncf %64 : vector<160x80xf32> to vector<160x80xbf16>
    %c0_64 = arith.constant 0 : index
    %c0_65 = arith.constant 0 : index
    %66 = vector.load %arg16[%c0_64, %c0_65] : memref<160x80xbf16, #tpu.memory_space<vmem>>, vector<160x80xbf16>
    tpu.vector_store %arg16[%c0_64, %c0_65], %65 {strides = array<i32>} : memref<160x80xbf16, #tpu.memory_space<vmem>>, vector<160x80xbf16>,
    %c0_66 = arith.constant 0 : index
    %c0_67 = arith.constant 0 : index
    %67 = vector.load %arg16[%c0_66, %c0_67] : memref<160x80xbf16, #tpu.memory_space<vmem>>, vector<112x80xbf16>
    %c0_68 = arith.constant 0 : index
    %c0_69 = arith.constant 0 : index
    %c0_70 = arith.constant 0 : index
    %68 = vector.load %arg4[%c0_68, %c0_69, %c0_70] : memref<4x80x112xbf16, #tpu.memory_space<vmem>>, vector<1x80x112xbf16>
    %69 = vector.shape_cast %68 : vector<1x80x112xbf16> to vector<80x112xbf16>
    %cst_71 = arith.constant dense<0.000000e+00> : vector<112x112xf32>
    %70 = tpu.matmul %67, %69, %cst_71 {dimension_numbers = #tpu.dot_dimension_numbers<[1], [0], [0], [1], [0, 0, 1, 1], [], []>} : vector<112x80xbf16>, vector<80x112xbf16>, vector<112x112xf32> -> vector<112x112xf32>
    %c16_72 = arith.constant 16 : index
    %c0_73 = arith.constant 0 : index
    %71 = vector.load %arg16[%c16_72, %c0_73] : memref<160x80xbf16, #tpu.memory_space<vmem>>, vector<112x80xbf16>
    %c1_74 = arith.constant 1 : index
    %c0_75 = arith.constant 0 : index
    %c0_76 = arith.constant 0 : index
    %72 = vector.load %arg4[%c1_74, %c0_75, %c0_76] : memref<4x80x112xbf16, #tpu.memory_space<vmem>>, vector<1x80x112xbf16>
    %73 = vector.shape_cast %72 : vector<1x80x112xbf16> to vector<80x112xbf16>
    %cst_77 = arith.constant dense<0.000000e+00> : vector<112x112xf32>
    %74 = tpu.matmul %71, %73, %cst_77 {dimension_numbers = #tpu.dot_dimension_numbers<[1], [0], [0], [1], [0, 0, 1, 1], [], []>} : vector<112x80xbf16>, vector<80x112xbf16>, vector<112x112xf32> -> vector<112x112xf32>
    %75 = arith.addf %70, %74 : vector<112x112xf32>
    %c32_78 = arith.constant 32 : index
    %c0_79 = arith.constant 0 : index
    %76 = vector.load %arg16[%c32_78, %c0_79] : memref<160x80xbf16, #tpu.memory_space<vmem>>, vector<112x80xbf16>
    %c2_80 = arith.constant 2 : index
    %c0_81 = arith.constant 0 : index
    %c0_82 = arith.constant 0 : index
    %77 = vector.load %arg4[%c2_80, %c0_81, %c0_82] : memref<4x80x112xbf16, #tpu.memory_space<vmem>>, vector<1x80x112xbf16>
    %78 = vector.shape_cast %77 : vector<1x80x112xbf16> to vector<80x112xbf16>
    %cst_83 = arith.constant dense<0.000000e+00> : vector<112x112xf32>
    %79 = tpu.matmul %76, %78, %cst_83 {dimension_numbers = #tpu.dot_dimension_numbers<[1], [0], [0], [1], [0, 0, 1, 1], [], []>} : vector<112x80xbf16>, vector<80x112xbf16>, vector<112x112xf32> -> vector<112x112xf32>
    %80 = arith.addf %75, %79 : vector<112x112xf32>
    %c48_84 = arith.constant 48 : index
    %c0_85 = arith.constant 0 : index
    %81 = vector.load %arg16[%c48_84, %c0_85] : memref<160x80xbf16, #tpu.memory_space<vmem>>, vector<112x80xbf16>
    %c3_86 = arith.constant 3 : index
    %c0_87 = arith.constant 0 : index
    %c0_88 = arith.constant 0 : index
    %82 = vector.load %arg4[%c3_86, %c0_87, %c0_88] : memref<4x80x112xbf16, #tpu.memory_space<vmem>>, vector<1x80x112xbf16>
    %83 = vector.shape_cast %82 : vector<1x80x112xbf16> to vector<80x112xbf16>
    %cst_89 = arith.constant dense<0.000000e+00> : vector<112x112xf32>
    %84 = tpu.matmul %81, %83, %cst_89 {dimension_numbers = #tpu.dot_dimension_numbers<[1], [0], [0], [1], [0, 0, 1, 1], [], []>} : vector<112x80xbf16>, vector<80x112xbf16>, vector<112x112xf32> -> vector<112x112xf32>
    %85 = arith.addf %80, %84 : vector<112x112xf32>
    %c0_90 = arith.constant 0 : index
    %c0_91 = arith.constant 0 : index
    %86 = vector.load %arg10[%c0_90, %c0_91] : memref<1x112xf32, #tpu.memory_space<vmem>>, vector<1x112xf32>
    %87 = vector.broadcast %86 : vector<1x112xf32> to vector<112x112xf32>
    %88 = arith.addf %85, %87 : vector<112x112xf32>
    %cst_92 = arith.constant 0.00999999977 : f32
    %89 = vector.broadcast %cst_92 : f32 to vector<112x112xf32>
    %90 = arith.mulf %89, %88 : vector<112x112xf32>
    %91 = arith.maximumf %88, %90 : vector<112x112xf32>
    %92 = arith.truncf %91 : vector<112x112xf32> to vector<112x112xbf16>
    %c48_93 = arith.constant 48 : index
    %c0_94 = arith.constant 0 : index
    %93 = vector.load %arg17[%c48_93, %c0_94] : memref<208x112xbf16, #tpu.memory_space<vmem>>, vector<112x112xbf16>
    tpu.vector_store %arg17[%c48_93, %c0_94], %92 {strides = array<i32>} : memref<208x112xbf16, #tpu.memory_space<vmem>>, vector<112x112xbf16>,
    %c0_95 = arith.constant 0 : index
    %c0_96 = arith.constant 0 : index
    %94 = vector.load %arg17[%c0_95, %c0_96] : memref<208x112xbf16, #tpu.memory_space<vmem>>, vector<160x112xbf16>
    %c0_97 = arith.constant 0 : index
    %c0_98 = arith.constant 0 : index
    %c0_99 = arith.constant 0 : index
    %95 = vector.load %arg5[%c0_97, %c0_98, %c0_99] : memref<4x112x80xbf16, #tpu.memory_space<vmem>>, vector<1x112x80xbf16>
    %96 = vector.shape_cast %95 : vector<1x112x80xbf16> to vector<112x80xbf16>
    %cst_100 = arith.constant dense<0.000000e+00> : vector<160x80xf32>
    %97 = tpu.matmul %94, %96, %cst_100 {dimension_numbers = #tpu.dot_dimension_numbers<[1], [0], [0], [1], [0, 0, 1, 1], [], []>} : vector<160x112xbf16>, vector<112x80xbf16>, vector<160x80xf32> -> vector<160x80xf32>
    %c16_101 = arith.constant 16 : index
    %c0_102 = arith.constant 0 : index
    %98 = vector.load %arg17[%c16_101, %c0_102] : memref<208x112xbf16, #tpu.memory_space<vmem>>, vector<160x112xbf16>
    %c1_103 = arith.constant 1 : index
    %c0_104 = arith.constant 0 : index
    %c0_105 = arith.constant 0 : index
    %99 = vector.load %arg5[%c1_103, %c0_104, %c0_105] : memref<4x112x80xbf16, #tpu.memory_space<vmem>>, vector<1x112x80xbf16>
    %100 = vector.shape_cast %99 : vector<1x112x80xbf16> to vector<112x80xbf16>
    %cst_106 = arith.constant dense<0.000000e+00> : vector<160x80xf32>
    %101 = tpu.matmul %98, %100, %cst_106 {dimension_numbers = #tpu.dot_dimension_numbers<[1], [0], [0], [1], [0, 0, 1, 1], [], []>} : vector<160x112xbf16>, vector<112x80xbf16>, vector<160x80xf32> -> vector<160x80xf32>
    %102 = arith.addf %97, %101 : vector<160x80xf32>
    %c32_107 = arith.constant 32 : index
    %c0_108 = arith.constant 0 : index
    %103 = vector.load %arg17[%c32_107, %c0_108] : memref<208x112xbf16, #tpu.memory_space<vmem>>, vector<160x112xbf16>
    %c2_109 = arith.constant 2 : index
    %c0_110 = arith.constant 0 : index
    %c0_111 = arith.constant 0 : index
    %104 = vector.load %arg5[%c2_109, %c0_110, %c0_111] : memref<4x112x80xbf16, #tpu.memory_space<vmem>>, vector<1x112x80xbf16>
    %105 = vector.shape_cast %104 : vector<1x112x80xbf16> to vector<112x80xbf16>
    %cst_112 = arith.constant dense<0.000000e+00> : vector<160x80xf32>
    %106 = tpu.matmul %103, %105, %cst_112 {dimension_numbers = #tpu.dot_dimension_numbers<[1], [0], [0], [1], [0, 0, 1, 1], [], []>} : vector<160x112xbf16>, vector<112x80xbf16>, vector<160x80xf32> -> vector<160x80xf32>
    %107 = arith.addf %102, %106 : vector<160x80xf32>
    %c48_113 = arith.constant 48 : index
    %c0_114 = arith.constant 0 : index
    %108 = vector.load %arg17[%c48_113, %c0_114] : memref<208x112xbf16, #tpu.memory_space<vmem>>, vector<160x112xbf16>
    %c3_115 = arith.constant 3 : index
    %c0_116 = arith.constant 0 : index
    %c0_117 = arith.constant 0 : index
    %109 = vector.load %arg5[%c3_115, %c0_116, %c0_117] : memref<4x112x80xbf16, #tpu.memory_space<vmem>>, vector<1x112x80xbf16>
    %110 = vector.shape_cast %109 : vector<1x112x80xbf16> to vector<112x80xbf16>
    %cst_118 = arith.constant dense<0.000000e+00> : vector<160x80xf32>
    %111 = tpu.matmul %108, %110, %cst_118 {dimension_numbers = #tpu.dot_dimension_numbers<[1], [0], [0], [1], [0, 0, 1, 1], [], []>} : vector<160x112xbf16>, vector<112x80xbf16>, vector<160x80xf32> -> vector<160x80xf32>
    %112 = arith.addf %107, %111 : vector<160x80xf32>
    %c0_119 = arith.constant 0 : index
    %c0_120 = arith.constant 0 : index
    %113 = vector.load %arg11[%c0_119, %c0_120] : memref<1x80xf32, #tpu.memory_space<vmem>>, vector<1x80xf32>
    %114 = vector.broadcast %113 : vector<1x80xf32> to vector<160x80xf32>
    %115 = arith.addf %112, %114 : vector<160x80xf32>
    %cst_121 = arith.constant 0.00999999977 : f32
    %116 = vector.broadcast %cst_121 : f32 to vector<160x80xf32>
    %117 = arith.mulf %116, %115 : vector<160x80xf32>
    %118 = arith.maximumf %115, %117 : vector<160x80xf32>
    %119 = arith.truncf %118 : vector<160x80xf32> to vector<160x80xbf16>
    %c48_122 = arith.constant 48 : index
    %c0_123 = arith.constant 0 : index
    %120 = vector.load %arg18[%c48_122, %c0_123] : memref<256x80xbf16, #tpu.memory_space<vmem>>, vector<160x80xbf16>
    tpu.vector_store %arg18[%c48_122, %c0_123], %119 {strides = array<i32>} : memref<256x80xbf16, #tpu.memory_space<vmem>>, vector<160x80xbf16>,
    %c0_124 = arith.constant 0 : index
    %c0_125 = arith.constant 0 : index
    %121 = vector.load %arg18[%c0_124, %c0_125] : memref<256x80xbf16, #tpu.memory_space<vmem>>, vector<208x80xbf16>
    %c0_126 = arith.constant 0 : index
    %c0_127 = arith.constant 0 : index
    %c0_128 = arith.constant 0 : index
    %122 = vector.load %arg6[%c0_126, %c0_127, %c0_128] : memref<4x80x52xbf16, #tpu.memory_space<vmem>>, vector<1x80x52xbf16>
    %123 = vector.shape_cast %122 : vector<1x80x52xbf16> to vector<80x52xbf16>
    %cst_129 = arith.constant dense<0.000000e+00> : vector<208x52xf32>
    %124 = tpu.matmul %121, %123, %cst_129 {dimension_numbers = #tpu.dot_dimension_numbers<[1], [0], [0], [1], [0, 0, 1, 1], [], []>} : vector<208x80xbf16>, vector<80x52xbf16>, vector<208x52xf32> -> vector<208x52xf32>
    %c16_130 = arith.constant 16 : index
    %c0_131 = arith.constant 0 : index
    %125 = vector.load %arg18[%c16_130, %c0_131] : memref<256x80xbf16, #tpu.memory_space<vmem>>, vector<208x80xbf16>
    %c1_132 = arith.constant 1 : index
    %c0_133 = arith.constant 0 : index
    %c0_134 = arith.constant 0 : index
    %126 = vector.load %arg6[%c1_132, %c0_133, %c0_134] : memref<4x80x52xbf16, #tpu.memory_space<vmem>>, vector<1x80x52xbf16>
    %127 = vector.shape_cast %126 : vector<1x80x52xbf16> to vector<80x52xbf16>
    %cst_135 = arith.constant dense<0.000000e+00> : vector<208x52xf32>
    %128 = tpu.matmul %125, %127, %cst_135 {dimension_numbers = #tpu.dot_dimension_numbers<[1], [0], [0], [1], [0, 0, 1, 1], [], []>} : vector<208x80xbf16>, vector<80x52xbf16>, vector<208x52xf32> -> vector<208x52xf32>
    %129 = arith.addf %124, %128 : vector<208x52xf32>
    %c32_136 = arith.constant 32 : index
    %c0_137 = arith.constant 0 : index
    %130 = vector.load %arg18[%c32_136, %c0_137] : memref<256x80xbf16, #tpu.memory_space<vmem>>, vector<208x80xbf16>
    %c2_138 = arith.constant 2 : index
    %c0_139 = arith.constant 0 : index
    %c0_140 = arith.constant 0 : index
    %131 = vector.load %arg6[%c2_138, %c0_139, %c0_140] : memref<4x80x52xbf16, #tpu.memory_space<vmem>>, vector<1x80x52xbf16>
    %132 = vector.shape_cast %131 : vector<1x80x52xbf16> to vector<80x52xbf16>
    %cst_141 = arith.constant dense<0.000000e+00> : vector<208x52xf32>
    %133 = tpu.matmul %130, %132, %cst_141 {dimension_numbers = #tpu.dot_dimension_numbers<[1], [0], [0], [1], [0, 0, 1, 1], [], []>} : vector<208x80xbf16>, vector<80x52xbf16>, vector<208x52xf32> -> vector<208x52xf32>
    %134 = arith.addf %129, %133 : vector<208x52xf32>
    %c48_142 = arith.constant 48 : index
    %c0_143 = arith.constant 0 : index
    %135 = vector.load %arg18[%c48_142, %c0_143] : memref<256x80xbf16, #tpu.memory_space<vmem>>, vector<208x80xbf16>
    %c3_144 = arith.constant 3 : index
    %c0_145 = arith.constant 0 : index
    %c0_146 = arith.constant 0 : index
    %136 = vector.load %arg6[%c3_144, %c0_145, %c0_146] : memref<4x80x52xbf16, #tpu.memory_space<vmem>>, vector<1x80x52xbf16>
    %137 = vector.shape_cast %136 : vector<1x80x52xbf16> to vector<80x52xbf16>
    %cst_147 = arith.constant dense<0.000000e+00> : vector<208x52xf32>
    %138 = tpu.matmul %135, %137, %cst_147 {dimension_numbers = #tpu.dot_dimension_numbers<[1], [0], [0], [1], [0, 0, 1, 1], [], []>} : vector<208x80xbf16>, vector<80x52xbf16>, vector<208x52xf32> -> vector<208x52xf32>
    %139 = arith.addf %134, %138 : vector<208x52xf32>
    %c0_148 = arith.constant 0 : index
    %c0_149 = arith.constant 0 : index
    %140 = vector.load %arg12[%c0_148, %c0_149] : memref<1x52xf32, #tpu.memory_space<vmem>>, vector<1x52xf32>
    %141 = vector.broadcast %140 : vector<1x52xf32> to vector<208x52xf32>
    %142 = arith.addf %139, %141 : vector<208x52xf32>
    %cst_150 = arith.constant 0.00999999977 : f32
    %143 = vector.broadcast %cst_150 : f32 to vector<208x52xf32>
    %144 = arith.mulf %143, %142 : vector<208x52xf32>
    %145 = arith.maximumf %142, %144 : vector<208x52xf32>
    %146 = arith.truncf %145 : vector<208x52xf32> to vector<208x52xbf16>
    %c48_151 = arith.constant 48 : index
    %c0_152 = arith.constant 0 : index
    %147 = vector.load %arg19[%c48_151, %c0_152] : memref<304x52xbf16, #tpu.memory_space<vmem>>, vector<208x52xbf16>
    tpu.vector_store %arg19[%c48_151, %c0_152], %146 {strides = array<i32>} : memref<304x52xbf16, #tpu.memory_space<vmem>>, vector<208x52xbf16>,
    %c0_153 = arith.constant 0 : index
    %c0_154 = arith.constant 0 : index
    %148 = vector.load %arg19[%c0_153, %c0_154] : memref<304x52xbf16, #tpu.memory_space<vmem>>, vector<256x52xbf16>
    %c0_155 = arith.constant 0 : index
    %c0_156 = arith.constant 0 : index
    %c0_157 = arith.constant 0 : index
    %149 = vector.load %arg7[%c0_155, %c0_156, %c0_157] : memref<4x52x16xbf16, #tpu.memory_space<vmem>>, vector<1x52x16xbf16>
    %150 = vector.shape_cast %149 : vector<1x52x16xbf16> to vector<52x16xbf16>
    %cst_158 = arith.constant dense<0.000000e+00> : vector<256x16xf32>
    %151 = tpu.matmul %148, %150, %cst_158 {dimension_numbers = #tpu.dot_dimension_numbers<[1], [0], [0], [1], [0, 0, 1, 1], [], []>} : vector<256x52xbf16>, vector<52x16xbf16>, vector<256x16xf32> -> vector<256x16xf32>
    %c16_159 = arith.constant 16 : index
    %c0_160 = arith.constant 0 : index
    %152 = vector.load %arg19[%c16_159, %c0_160] : memref<304x52xbf16, #tpu.memory_space<vmem>>, vector<256x52xbf16>
    %c1_161 = arith.constant 1 : index
    %c0_162 = arith.constant 0 : index
    %c0_163 = arith.constant 0 : index
    %153 = vector.load %arg7[%c1_161, %c0_162, %c0_163] : memref<4x52x16xbf16, #tpu.memory_space<vmem>>, vector<1x52x16xbf16>
    %154 = vector.shape_cast %153 : vector<1x52x16xbf16> to vector<52x16xbf16>
    %cst_164 = arith.constant dense<0.000000e+00> : vector<256x16xf32>
    %155 = tpu.matmul %152, %154, %cst_164 {dimension_numbers = #tpu.dot_dimension_numbers<[1], [0], [0], [1], [0, 0, 1, 1], [], []>} : vector<256x52xbf16>, vector<52x16xbf16>, vector<256x16xf32> -> vector<256x16xf32>
    %156 = arith.addf %151, %155 : vector<256x16xf32>
    %c32_165 = arith.constant 32 : index
    %c0_166 = arith.constant 0 : index
    %157 = vector.load %arg19[%c32_165, %c0_166] : memref<304x52xbf16, #tpu.memory_space<vmem>>, vector<256x52xbf16>
    %c2_167 = arith.constant 2 : index
    %c0_168 = arith.constant 0 : index
    %c0_169 = arith.constant 0 : index
    %158 = vector.load %arg7[%c2_167, %c0_168, %c0_169] : memref<4x52x16xbf16, #tpu.memory_space<vmem>>, vector<1x52x16xbf16>
    %159 = vector.shape_cast %158 : vector<1x52x16xbf16> to vector<52x16xbf16>
    %cst_170 = arith.constant dense<0.000000e+00> : vector<256x16xf32>
    %160 = tpu.matmul %157, %159, %cst_170 {dimension_numbers = #tpu.dot_dimension_numbers<[1], [0], [0], [1], [0, 0, 1, 1], [], []>} : vector<256x52xbf16>, vector<52x16xbf16>, vector<256x16xf32> -> vector<256x16xf32>
    %161 = arith.addf %156, %160 : vector<256x16xf32>
    %c48_171 = arith.constant 48 : index
    %c0_172 = arith.constant 0 : index
    %162 = vector.load %arg19[%c48_171, %c0_172] : memref<304x52xbf16, #tpu.memory_space<vmem>>, vector<256x52xbf16>
    %c3_173 = arith.constant 3 : index
    %c0_174 = arith.constant 0 : index
    %c0_175 = arith.constant 0 : index
    %163 = vector.load %arg7[%c3_173, %c0_174, %c0_175] : memref<4x52x16xbf16, #tpu.memory_space<vmem>>, vector<1x52x16xbf16>
    %164 = vector.shape_cast %163 : vector<1x52x16xbf16> to vector<52x16xbf16>
    %cst_176 = arith.constant dense<0.000000e+00> : vector<256x16xf32>
    %165 = tpu.matmul %162, %164, %cst_176 {dimension_numbers = #tpu.dot_dimension_numbers<[1], [0], [0], [1], [0, 0, 1, 1], [], []>} : vector<256x52xbf16>, vector<52x16xbf16>, vector<256x16xf32> -> vector<256x16xf32>
    %166 = arith.addf %161, %165 : vector<256x16xf32>
    %c0_177 = arith.constant 0 : index
    %c0_178 = arith.constant 0 : index
    %167 = vector.load %arg13[%c0_177, %c0_178] : memref<1x16xf32, #tpu.memory_space<vmem>>, vector<1x16xf32>
    %168 = vector.broadcast %167 : vector<1x16xf32> to vector<256x16xf32>
    %169 = arith.addf %166, %168 : vector<256x16xf32>
    %c0_179 = arith.constant 0 : index
    %c0_180 = arith.constant 0 : index
    %c0_181 = arith.constant 0 : index
    %170 = vector.load %arg14[%c0_179, %c0_180, %c0_181] : memref<1x256x16xf32, #tpu.memory_space<vmem>>, vector<1x256x16xf32>
    %171 = vector.shape_cast %170 : vector<1x256x16xf32> to vector<256x16xf32>
    %172 = vector.shape_cast %169 : vector<256x16xf32> to vector<1x256x16xf32>
    tpu.vector_store %arg14[%c0_179, %c0_180, %c0_181], %172 {strides = array<i32>} : memref<1x256x16xf32, #tpu.memory_space<vmem>>, vector<1x256x16xf32>,
    return
  }
  func.func @transform_0(%arg0: i32) -> (i32, i32, i32) {
    %c0_i32 = arith.constant 0 : i32
    %c0_i32_0 = arith.constant 0 : i32
    %c0_i32_1 = arith.constant 0 : i32
    return %arg0, %c0_i32, %c0_i32_0 : i32, i32, i32
  }
  func.func @transform_1(%arg0: i32) -> (i32, i32, i32) {
    %c0_i32 = arith.constant 0 : i32
    %c0_i32_0 = arith.constant 0 : i32
    %c0_i32_1 = arith.constant 0 : i32
    %c0_i32_2 = arith.constant 0 : i32
    return %c0_i32, %c0_i32_0, %c0_i32_1 : i32, i32, i32
  }
  func.func @transform_2(%arg0: i32) -> (i32, i32, i32) {
    %c0_i32 = arith.constant 0 : i32
    %c0_i32_0 = arith.constant 0 : i32
    %c0_i32_1 = arith.constant 0 : i32
    %c0_i32_2 = arith.constant 0 : i32
    return %c0_i32, %c0_i32_0, %c0_i32_1 : i32, i32, i32
  }
  func.func @transform_3(%arg0: i32) -> (i32, i32, i32) {
    %c0_i32 = arith.constant 0 : i32
    %c0_i32_0 = arith.constant 0 : i32
    %c0_i32_1 = arith.constant 0 : i32
    %c0_i32_2 = arith.constant 0 : i32
    return %c0_i32, %c0_i32_0, %c0_i32_1 : i32, i32, i32
  }
  func.func @transform_4(%arg0: i32) -> (i32, i32, i32) {
    %c0_i32 = arith.constant 0 : i32
    %c0_i32_0 = arith.constant 0 : i32
    %c0_i32_1 = arith.constant 0 : i32
    %c0_i32_2 = arith.constant 0 : i32
    return %c0_i32, %c0_i32_0, %c0_i32_1 : i32, i32, i32
  }
  func.func @transform_5(%arg0: i32) -> (i32, i32, i32) {
    %c0_i32 = arith.constant 0 : i32
    %c0_i32_0 = arith.constant 0 : i32
    %c0_i32_1 = arith.constant 0 : i32
    %c0_i32_2 = arith.constant 0 : i32
    return %c0_i32, %c0_i32_0, %c0_i32_1 : i32, i32, i32
  }
  func.func @transform_6(%arg0: i32) -> (i32, i32, i32) {
    %c0_i32 = arith.constant 0 : i32
    %c0_i32_0 = arith.constant 0 : i32
    %c0_i32_1 = arith.constant 0 : i32
    %c0_i32_2 = arith.constant 0 : i32
    return %c0_i32, %c0_i32_0, %c0_i32_1 : i32, i32, i32
  }
  func.func @transform_7(%arg0: i32) -> (i32, i32) {
    %c0_i32 = arith.constant 0 : i32
    %c0_i32_0 = arith.constant 0 : i32
    %c0_i32_1 = arith.constant 0 : i32
    return %c0_i32, %c0_i32_0 : i32, i32
  }
  func.func @transform_8(%arg0: i32) -> (i32, i32) {
    %c0_i32 = arith.constant 0 : i32
    %c0_i32_0 = arith.constant 0 : i32
    %c0_i32_1 = arith.constant 0 : i32
    return %c0_i32, %c0_i32_0 : i32, i32
  }
  func.func @transform_9(%arg0: i32) -> (i32, i32) {
    %c0_i32 = arith.constant 0 : i32
    %c0_i32_0 = arith.constant 0 : i32
    %c0_i32_1 = arith.constant 0 : i32
    return %c0_i32, %c0_i32_0 : i32, i32
  }
  func.func @transform_10(%arg0: i32) -> (i32, i32) {
    %c0_i32 = arith.constant 0 : i32
    %c0_i32_0 = arith.constant 0 : i32
    %c0_i32_1 = arith.constant 0 : i32
    return %c0_i32, %c0_i32_0 : i32, i32
  }
  func.func @transform_11(%arg0: i32) -> (i32, i32) {
    %c0_i32 = arith.constant 0 : i32
    %c0_i32_0 = arith.constant 0 : i32
    %c0_i32_1 = arith.constant 0 : i32
    return %c0_i32, %c0_i32_0 : i32, i32
  }
  func.func @transform_12(%arg0: i32) -> (i32, i32) {
    %c0_i32 = arith.constant 0 : i32
    %c0_i32_0 = arith.constant 0 : i32
    %c0_i32_1 = arith.constant 0 : i32
    return %c0_i32, %c0_i32_0 : i32, i32
  }
  func.func @transform_13(%arg0: i32) -> (i32, i32, i32) {
    %c0_i32 = arith.constant 0 : i32
    %c0_i32_0 = arith.constant 0 : i32
    %c0_i32_1 = arith.constant 0 : i32
    return %arg0, %c0_i32, %c0_i32_0 : i32, i32, i32
  }
}

</mosaic_0001>

<llo_original>
// kernel: autoencoder_forward.1
$region0: #{autoencoder_forward.1}
  #allocation0 [shape = 'u32[]', space=smem, size = 0x4, offset = 0x4, fixed_abs, tag = 'smem constant byte address 0x4 - core index']
  #allocation1 [shape = 'u32[72,128]{1,0:T(1,128)}', space=vmem, size = 0x9000, scoped, tag = 'internal scratch']
  #allocation2 [shape = 'bf16[208,52]{1,0:T(8,128)(2,1)}', space=vmem, size = 0xd000, scoped, tag = 'scratch operand']
  #allocation3 [shape = 'bf16[160,80]{1,0:T(8,128)(2,1)}', space=vmem, size = 0xa000, scoped, tag = 'scratch operand']
  #allocation4 [shape = 'bf16[208,112]{1,0:T(8,128)(2,1)}', space=vmem, size = 0xd000, scoped, tag = 'scratch operand']
  #allocation5 [shape = 'bf16[256,80]{1,0:T(8,128)(2,1)}', space=vmem, size = 0x10000, scoped, tag = 'scratch operand']
  #allocation6 [shape = 'bf16[304,52]{1,0:T(8,128)(2,1)}', space=vmem, size = 0x13000, scoped, tag = 'scratch operand']
  %s0 = inlined_call_operand.vmem [shape: bf16[2,256,16], index: 0, kind: input, shape index: {}]
  %s1 = inlined_call_operand.vmem [shape: bf16[4,16,52], index: 1, kind: input, shape index: {}]
  %s2 = inlined_call_operand.vmem [shape: bf16[4,52,80], index: 2, kind: input, shape index: {}]
  %s3 = inlined_call_operand.vmem [shape: bf16[4,80,112], index: 3, kind: input, shape index: {}]
  %s4 = inlined_call_operand.vmem [shape: bf16[4,112,80], index: 4, kind: input, shape index: {}]
  %s5 = inlined_call_operand.vmem [shape: bf16[4,80,52], index: 5, kind: input, shape index: {}]
  %s6 = inlined_call_operand.vmem [shape: bf16[4,52,16], index: 6, kind: input, shape index: {}]
  %s7 = inlined_call_operand.vmem [shape: f32[1,52], index: 7, kind: input, shape index: {}]
  %s8 = inlined_call_operand.vmem [shape: f32[1,80], index: 8, kind: input, shape index: {}]
  %s9 = inlined_call_operand.vmem [shape: f32[1,112], index: 9, kind: input, shape index: {}]
  %s10 = inlined_call_operand.vmem [shape: f32[1,80], index: 10, kind: input, shape index: {}]
  %s11 = inlined_call_operand.vmem [shape: f32[1,52], index: 11, kind: input, shape index: {}]
  %s12 = inlined_call_operand.vmem [shape: f32[1,16], index: 12, kind: input, shape index: {}]
  %s13 = inlined_call_operand.vmem [shape: f32[2,256,16], index: 13, kind: output, shape index: {}]
  %s14 = sld [smem:[#allocation0]]
  $region85: #{autoencoder_forward.1} parent=0
    _
  %s16 = ssub.s32 1, %s14
  %s17 = scalar_select 0, %s16, %s14
  loop: start=0, step=1, limit=4
  $region2: #{autoencoder_forward.1} parent=0 // loop_pre_header
    _
  $region3: #{autoencoder_forward.1} parent=0 // loop_header
    %s19 = sphi 0, %s23
    %p20 = scmp.ge.s32.totalorder %s19, 4
    %s29 = sphi 0, %s31
    %s32 = sphi 0, %s29
    %s33 = sphi 0, %s32
    %s49 = sphi 0, %s33
    %s53 = sphi 0, %s53
    %s55 = sphi 0, %s53
    %s56 = sphi 0, %s55
    %s70 = sphi 0, %s56
    %s74 = sphi 0, %s74
    %s76 = sphi 0, %s74
    %s77 = sphi 0, %s76
    %s91 = sphi 0, %s77
    %s95 = sphi 0, %s95
    %s97 = sphi 0, %s95
    %s98 = sphi 0, %s97
    %s112 = sphi 0, %s98
    %s116 = sphi 0, %s116
    %s118 = sphi 0, %s116
    %s119 = sphi 0, %s118
    %s133 = sphi 0, %s119
    %s137 = sphi 0, %s137
    %s139 = sphi 0, %s137
    %s140 = sphi 0, %s139
    %s154 = sphi 0, %s140
    %s158 = sphi 0, %s158
    %s160 = sphi 0, %s158
    %s161 = sphi 0, %s160
    %s175 = sphi 0, %s161
    %s179 = sphi 0, %s179
    %s181 = sphi 0, %s179
    %s182 = sphi 0, %s181
    %s196 = sphi 0, %s182
    %s200 = sphi 0, %s200
    %s202 = sphi 0, %s200
    %s203 = sphi 0, %s202
    %s217 = sphi 0, %s203
    %s221 = sphi 0, %s221
    %s223 = sphi 0, %s221
    %s224 = sphi 0, %s223
    %s238 = sphi 0, %s224
    %s242 = sphi 0, %s242
    %s244 = sphi 0, %s242
    %s245 = sphi 0, %s244
    %s259 = sphi 0, %s245
    %s263 = sphi 0, %s263
    %s265 = sphi 0, %s263
    %s266 = sphi 0, %s265
    %s280 = sphi 0, %s266
    %s284 = sphi 0, %s284
    %s286 = sphi 0, %s284
    %s287 = sphi 0, %s286
    %s301 = sphi 0, %s287
    %s307 = sphi 0, %s309
    %s310 = sphi 0, %s307
    %s311 = sphi 0, %s310
    %s327 = sphi 0, %s311
  $region4: #{autoencoder_forward.1} parent=0 // loop_header_branch
    %22 = sbr.rel (%p20) target = $region8
  $region5: #{autoencoder_forward.1} parent=0 // loop_body
    %s24 = ssub.s32 %s19, 1
    %s25 = ssub.s32 %s19, 2
    %s26 = sadd.s32 %s19, 1
    %s27 = ssub.s32 %s19, %s26
    %p28 = scmp.eq.s32.totalorder %s27, 0
    %s30 = sadd.s32 %s29, 1
    %s31 = scalar_select %p28, %s29, %s30
    %p34 = pneg %p28
    %p35 = scmp.eq.s32.totalorder %s19, 1
    %p36 = por %p34, %p35
    %p37 = scmp.ne.s32.totalorder %s29, %s32
    %p38 = scmp.eq.s32.totalorder %s19, 0
    %p39 = por %p37, %p38
    %p40 = scmp.ne.s32.totalorder %s29, %s32
    %p41 = scmp.eq.s32.totalorder %s24, 1
    %p42 = por %p40, %p41
    %p43 = scmp.ne.s32.totalorder %s32, %s33
    %p44 = scmp.eq.s32.totalorder %s24, 0
    %p45 = por %p43, %p44
    %p46 = scmp.ne.s32.totalorder %s32, %s33
    %p47 = scmp.eq.s32.totalorder %s25, 1
    %p48 = por %p46, %p47
    %p50 = scmp.ne.s32.totalorder %s33, %s49
    %p51 = scmp.eq.s32.totalorder %s25, 0
    %p52 = por %p50, %p51
    %s54 = sadd.s32 %s53, 1
    %p57 = scmp.eq.s32.totalorder %s19, 1
    %p58 = scmp.ne.s32.totalorder %s53, %s55
    %p59 = scmp.eq.s32.totalorder %s19, 0
    %p60 = por %p58, %p59
    %p61 = scmp.ne.s32.totalorder %s53, %s55
    %p62 = scmp.eq.s32.totalorder %s24, 1
    %p63 = por %p61, %p62
    %p64 = scmp.ne.s32.totalorder %s55, %s56
    %p65 = scmp.eq.s32.totalorder %s24, 0
    %p66 = por %p64, %p65
    %p67 = scmp.ne.s32.totalorder %s55, %s56
    %p68 = scmp.eq.s32.totalorder %s25, 1
    %p69 = por %p67, %p68
    %p71 = scmp.ne.s32.totalorder %s56, %s70
    %p72 = scmp.eq.s32.totalorder %s25, 0
    %p73 = por %p71, %p72
    %s75 = sadd.s32 %s74, 1
    %p78 = scmp.eq.s32.totalorder %s19, 1
    %p79 = scmp.ne.s32.totalorder %s74, %s76
    %p80 = scmp.eq.s32.totalorder %s19, 0
    %p81 = por %p79, %p80
    %p82 = scmp.ne.s32.totalorder %s74, %s76
    %p83 = scmp.eq.s32.totalorder %s24, 1
    %p84 = por %p82, %p83
    %p85 = scmp.ne.s32.totalorder %s76, %s77
    %p86 = scmp.eq.s32.totalorder %s24, 0
    %p87 = por %p85, %p86
    %p88 = scmp.ne.s32.totalorder %s76, %s77
    %p89 = scmp.eq.s32.totalorder %s25, 1
    %p90 = por %p88, %p89
    %p92 = scmp.ne.s32.totalorder %s77, %s91
    %p93 = scmp.eq.s32.totalorder %s25, 0
    %p94 = por %p92, %p93
    %s96 = sadd.s32 %s95, 1
    %p99 = scmp.eq.s32.totalorder %s19, 1
    %p100 = scmp.ne.s32.totalorder %s95, %s97
    %p101 = scmp.eq.s32.totalorder %s19, 0
    %p102 = por %p100, %p101
    %p103 = scmp.ne.s32.totalorder %s95, %s97
    %p104 = scmp.eq.s32.totalorder %s24, 1
    %p105 = por %p103, %p104
    %p106 = scmp.ne.s32.totalorder %s97, %s98
    %p107 = scmp.eq.s32.totalorder %s24, 0
    %p108 = por %p106, %p107
    %p109 = scmp.ne.s32.totalorder %s97, %s98
    %p110 = scmp.eq.s32.totalorder %s25, 1
    %p111 = por %p109, %p110
    %p113 = scmp.ne.s32.totalorder %s98, %s112
    %p114 = scmp.eq.s32.totalorder %s25, 0
    %p115 = por %p113, %p114
    %s117 = sadd.s32 %s116, 1
    %p120 = scmp.eq.s32.totalorder %s19, 1
    %p121 = scmp.ne.s32.totalorder %s116, %s118
    %p122 = scmp.eq.s32.totalorder %s19, 0
    %p123 = por %p121, %p122
    %p124 = scmp.ne.s32.totalorder %s116, %s118
    %p125 = scmp.eq.s32.totalorder %s24, 1
    %p126 = por %p124, %p125
    %p127 = scmp.ne.s32.totalorder %s118, %s119
    %p128 = scmp.eq.s32.totalorder %s24, 0
    %p129 = por %p127, %p128
    %p130 = scmp.ne.s32.totalorder %s118, %s119
    %p131 = scmp.eq.s32.totalorder %s25, 1
    %p132 = por %p130, %p131
    %p134 = scmp.ne.s32.totalorder %s119, %s133
    %p135 = scmp.eq.s32.totalorder %s25, 0
    %p136 = por %p134, %p135
    %s138 = sadd.s32 %s137, 1
    %p141 = scmp.eq.s32.totalorder %s19, 1
    %p142 = scmp.ne.s32.totalorder %s137, %s139
    %p143 = scmp.eq.s32.totalorder %s19, 0
    %p144 = por %p142, %p143
    %p145 = scmp.ne.s32.totalorder %s137, %s139
    %p146 = scmp.eq.s32.totalorder %s24, 1
    %p147 = por %p145, %p146
    %p148 = scmp.ne.s32.totalorder %s139, %s140
    %p149 = scmp.eq.s32.totalorder %s24, 0
    %p150 = por %p148, %p149
    %p151 = scmp.ne.s32.totalorder %s139, %s140
    %p152 = scmp.eq.s32.totalorder %s25, 1
    %p153 = por %p151, %p152
    %p155 = scmp.ne.s32.totalorder %s140, %s154
    %p156 = scmp.eq.s32.totalorder %s25, 0
    %p157 = por %p155, %p156
    %s159 = sadd.s32 %s158, 1
    %p162 = scmp.eq.s32.totalorder %s19, 1
    %p163 = scmp.ne.s32.totalorder %s158, %s160
    %p164 = scmp.eq.s32.totalorder %s19, 0
    %p165 = por %p163, %p164
    %p166 = scmp.ne.s32.totalorder %s158, %s160
    %p167 = scmp.eq.s32.totalorder %s24, 1
    %p168 = por %p166, %p167
    %p169 = scmp.ne.s32.totalorder %s160, %s161
    %p170 = scmp.eq.s32.totalorder %s24, 0
    %p171 = por %p169, %p170
    %p172 = scmp.ne.s32.totalorder %s160, %s161
    %p173 = scmp.eq.s32.totalorder %s25, 1
    %p174 = por %p172, %p173
    %p176 = scmp.ne.s32.totalorder %s161, %s175
    %p177 = scmp.eq.s32.totalorder %s25, 0
    %p178 = por %p176, %p177
    %s180 = sadd.s32 %s179, 1
    %p183 = scmp.eq.s32.totalorder %s19, 1
    %p184 = scmp.ne.s32.totalorder %s179, %s181
    %p185 = scmp.eq.s32.totalorder %s19, 0
    %p186 = por %p184, %p185
    %p187 = scmp.ne.s32.totalorder %s179, %s181
    %p188 = scmp.eq.s32.totalorder %s24, 1
    %p189 = por %p187, %p188
    %p190 = scmp.ne.s32.totalorder %s181, %s182
    %p191 = scmp.eq.s32.totalorder %s24, 0
    %p192 = por %p190, %p191
    %p193 = scmp.ne.s32.totalorder %s181, %s182
    %p194 = scmp.eq.s32.totalorder %s25, 1
    %p195 = por %p193, %p194
    %p197 = scmp.ne.s32.totalorder %s182, %s196
    %p198 = scmp.eq.s32.totalorder %s25, 0
    %p199 = por %p197, %p198
    %s201 = sadd.s32 %s200, 1
    %p204 = scmp.eq.s32.totalorder %s19, 1
    %p205 = scmp.ne.s32.totalorder %s200, %s202
    %p206 = scmp.eq.s32.totalorder %s19, 0
    %p207 = por %p205, %p206
    %p208 = scmp.ne.s32.totalorder %s200, %s202
    %p209 = scmp.eq.s32.totalorder %s24, 1
    %p210 = por %p208, %p209
    %p211 = scmp.ne.s32.totalorder %s202, %s203
    %p212 = scmp.eq.s32.totalorder %s24, 0
    %p213 = por %p211, %p212
    %p214 = scmp.ne.s32.totalorder %s202, %s203
    %p215 = scmp.eq.s32.totalorder %s25, 1
    %p216 = por %p214, %p215
    %p218 = scmp.ne.s32.totalorder %s203, %s217
    %p219 = scmp.eq.s32.totalorder %s25, 0
    %p220 = por %p218, %p219
    %s222 = sadd.s32 %s221, 1
    %p225 = scmp.eq.s32.totalorder %s19, 1
    %p226 = scmp.ne.s32.totalorder %s221, %s223
    %p227 = scmp.eq.s32.totalorder %s19, 0
    %p228 = por %p226, %p227
    %p229 = scmp.ne.s32.totalorder %s221, %s223
    %p230 = scmp.eq.s32.totalorder %s24, 1
    %p231 = por %p229, %p230
    %p232 = scmp.ne.s32.totalorder %s223, %s224
    %p233 = scmp.eq.s32.totalorder %s24, 0
    %p234 = por %p232, %p233
    %p235 = scmp.ne.s32.totalorder %s223, %s224
    %p236 = scmp.eq.s32.totalorder %s25, 1
    %p237 = por %p235, %p236
    %p239 = scmp.ne.s32.totalorder %s224, %s238
    %p240 = scmp.eq.s32.totalorder %s25, 0
    %p241 = por %p239, %p240
    %s243 = sadd.s32 %s242, 1
    %p246 = scmp.eq.s32.totalorder %s19, 1
    %p247 = scmp.ne.s32.totalorder %s242, %s244
    %p248 = scmp.eq.s32.totalorder %s19, 0
    %p249 = por %p247, %p248
    %p250 = scmp.ne.s32.totalorder %s242, %s244
    %p251 = scmp.eq.s32.totalorder %s24, 1
    %p252 = por %p250, %p251
    %p253 = scmp.ne.s32.totalorder %s244, %s245
    %p254 = scmp.eq.s32.totalorder %s24, 0
    %p255 = por %p253, %p254
    %p256 = scmp.ne.s32.totalorder %s244, %s245
    %p257 = scmp.eq.s32.totalorder %s25, 1
    %p258 = por %p256, %p257
    %p260 = scmp.ne.s32.totalorder %s245, %s259
    %p261 = scmp.eq.s32.totalorder %s25, 0
    %p262 = por %p260, %p261
    %s264 = sadd.s32 %s263, 1
    %p267 = scmp.eq.s32.totalorder %s19, 1
    %p268 = scmp.ne.s32.totalorder %s263, %s265
    %p269 = scmp.eq.s32.totalorder %s19, 0
    %p270 = por %p268, %p269
    %p271 = scmp.ne.s32.totalorder %s263, %s265
    %p272 = scmp.eq.s32.totalorder %s24, 1
    %p273 = por %p271, %p272
    %p274 = scmp.ne.s32.totalorder %s265, %s266
    %p275 = scmp.eq.s32.totalorder %s24, 0
    %p276 = por %p274, %p275
    %p277 = scmp.ne.s32.totalorder %s265, %s266
    %p278 = scmp.eq.s32.totalorder %s25, 1
    %p279 = por %p277, %p278
    %p281 = scmp.ne.s32.totalorder %s266, %s280
    %p282 = scmp.eq.s32.totalorder %s25, 0
    %p283 = por %p281, %p282
    %s285 = sadd.s32 %s284, 1
    %p288 = scmp.eq.s32.totalorder %s19, 1
    %p289 = scmp.ne.s32.totalorder %s284, %s286
    %p290 = scmp.eq.s32.totalorder %s19, 0
    %p291 = por %p289, %p290
    %p292 = scmp.ne.s32.totalorder %s284, %s286
    %p293 = scmp.eq.s32.totalorder %s24, 1
    %p294 = por %p292, %p293
    %p295 = scmp.ne.s32.totalorder %s286, %s287
    %p296 = scmp.eq.s32.totalorder %s24, 0
    %p297 = por %p295, %p296
    %p298 = scmp.ne.s32.totalorder %s286, %s287
    %p299 = scmp.eq.s32.totalorder %s25, 1
    %p300 = por %p298, %p299
    %p302 = scmp.ne.s32.totalorder %s287, %s301
    %p303 = scmp.eq.s32.totalorder %s25, 0
    %p304 = por %p302, %p303
    %s305 = ssub.s32 %s19, %s26
    %p306 = scmp.eq.s32.totalorder %s305, 0
    %s308 = sadd.s32 %s307, 1
    %s309 = scalar_select %p306, %s307, %s308
    %p312 = pneg %p306
    %p313 = scmp.eq.s32.totalorder %s19, 1
    %p314 = por %p312, %p313
    %p315 = scmp.ne.s32.totalorder %s307, %s310
    %p316 = scmp.eq.s32.totalorder %s19, 0
    %p317 = por %p315, %p316
    %p318 = scmp.ne.s32.totalorder %s307, %s310
    %p319 = scmp.eq.s32.totalorder %s24, 1
    %p320 = por %p318, %p319
    %p321 = scmp.ne.s32.totalorder %s310, %s311
    %p322 = scmp.eq.s32.totalorder %s24, 0
    %p323 = por %p321, %p322
    %p324 = scmp.ne.s32.totalorder %s310, %s311
    %p325 = scmp.eq.s32.totalorder %s25, 1
    %p326 = por %p324, %p325
    %p328 = scmp.ne.s32.totalorder %s311, %s327
    %p329 = scmp.eq.s32.totalorder %s25, 0
    %p330 = por %p328, %p329
    %p331 = scmp.le.s32.totalorder 1, %s19
    %p332 = scmp.lt.s32.totalorder %s19, 3
    %p333 = pnand %p331, %p332
    %p334 = pneg %p333
    // Predicated region
    $region9: #{autoencoder_forward.1} parent=5 // pred_check
      _
    $region10: #{autoencoder_forward.1} parent=5 // pred_check_branch
      %336 = sbr.rel (%p333) target = $region12
    $region11: #{autoencoder_forward.1} parent=5 // pred_region
      %s337 = ssub.s32 %s19, 1
      // Predicated region
      $region13: #{autoencoder_forward.1} parent=11 // pred_check
        %p338 = pneg %p66
      $region14: #{autoencoder_forward.1} parent=11 // pred_check_branch
        %340 = sbr.rel (%p338) target = $region16
      $region15: #{autoencoder_forward.1} parent=11 // pred_region
        _
      $region16: #{autoencoder_forward.1} parent=11 // pred_fallthru
        _
      // Predicated region
      $region17: #{autoencoder_forward.1} parent=11 // pred_check
        %p341 = pneg %p87
      $region18: #{autoencoder_forward.1} parent=11 // pred_check_branch
        %343 = sbr.rel (%p341) target = $region20
      $region19: #{autoencoder_forward.1} parent=11 // pred_region
        _
      $region20: #{autoencoder_forward.1} parent=11 // pred_fallthru
        _
      // Predicated region
      $region21: #{autoencoder_forward.1} parent=11 // pred_check
        %p344 = pneg %p108
      $region22: #{autoencoder_forward.1} parent=11 // pred_check_branch
        %346 = sbr.rel (%p344) target = $region24
      $region23: #{autoencoder_forward.1} parent=11 // pred_region
        _
      $region24: #{autoencoder_forward.1} parent=11 // pred_fallthru
        _
      // Predicated region
      $region25: #{autoencoder_forward.1} parent=11 // pred_check
        %p347 = pneg %p129
      $region26: #{autoencoder_forward.1} parent=11 // pred_check_branch
        %349 = sbr.rel (%p347) target = $region28
      $region27: #{autoencoder_forward.1} parent=11 // pred_region
        _
      $region28: #{autoencoder_forward.1} parent=11 // pred_fallthru
        _
      // Predicated region
      $region29: #{autoencoder_forward.1} parent=11 // pred_check
        %p350 = pneg %p150
      $region30: #{autoencoder_forward.1} parent=11 // pred_check_branch
        %352 = sbr.rel (%p350) target = $region32
      $region31: #{autoencoder_forward.1} parent=11 // pred_region
        _
      $region32: #{autoencoder_forward.1} parent=11 // pred_fallthru
        _
      // Predicated region
      $region33: #{autoencoder_forward.1} parent=11 // pred_check
        %p353 = pneg %p171
      $region34: #{autoencoder_forward.1} parent=11 // pred_check_branch
        %355 = sbr.rel (%p353) target = $region36
      $region35: #{autoencoder_forward.1} parent=11 // pred_region
        _
      $region36: #{autoencoder_forward.1} parent=11 // pred_fallthru
        _
      // Predicated region
      $region37: #{autoencoder_forward.1} parent=11 // pred_check
        %p356 = pneg %p192
      $region38: #{autoencoder_forward.1} parent=11 // pred_check_branch
        %358 = sbr.rel (%p356) target = $region40
      $region39: #{autoencoder_forward.1} parent=11 // pred_region
        _
      $region40: #{autoencoder_forward.1} parent=11 // pred_fallthru
        _
      // Predicated region
      $region41: #{autoencoder_forward.1} parent=11 // pred_check
        %p359 = pneg %p213
      $region42: #{autoencoder_forward.1} parent=11 // pred_check_branch
        %361 = sbr.rel (%p359) target = $region44
      $region43: #{autoencoder_forward.1} parent=11 // pred_region
        _
      $region44: #{autoencoder_forward.1} parent=11 // pred_fallthru
        _
      // Predicated region
      $region45: #{autoencoder_forward.1} parent=11 // pred_check
        %p362 = pneg %p234
      $region46: #{autoencoder_forward.1} parent=11 // pred_check_branch
        %364 = sbr.rel (%p362) target = $region48
      $region47: #{autoencoder_forward.1} parent=11 // pred_region
        _
      $region48: #{autoencoder_forward.1} parent=11 // pred_fallthru
        _
      // Predicated region
      $region49: #{autoencoder_forward.1} parent=11 // pred_check
        %p365 = pneg %p255
      $region50: #{autoencoder_forward.1} parent=11 // pred_check_branch
        %367 = sbr.rel (%p365) target = $region52
      $region51: #{autoencoder_forward.1} parent=11 // pred_region
        _
      $region52: #{autoencoder_forward.1} parent=11 // pred_fallthru
        _
      // Predicated region
      $region53: #{autoencoder_forward.1} parent=11 // pred_check
        %p368 = pneg %p276
      $region54: #{autoencoder_forward.1} parent=11 // pred_check_branch
        %370 = sbr.rel (%p368) target = $region56
      $region55: #{autoencoder_forward.1} parent=11 // pred_region
        _
      $region56: #{autoencoder_forward.1} parent=11 // pred_fallthru
        _
      // Predicated region
      $region57: #{autoencoder_forward.1} parent=11 // pred_check
        %p371 = pneg %p297
      $region58: #{autoencoder_forward.1} parent=11 // pred_check_branch
        %373 = sbr.rel (%p371) target = $region60
      $region59: #{autoencoder_forward.1} parent=11 // pred_region
        _
      $region60: #{autoencoder_forward.1} parent=11 // pred_fallthru
        _
    $region12: #{autoencoder_forward.1} parent=5 // pred_fallthru
      _
    %p374 = scmp.lt.s32.totalorder %s19, 2
    // Predicated region
    $region61: #{autoencoder_forward.1} parent=5 // pred_check
      %p375 = pneg %p374
    $region62: #{autoencoder_forward.1} parent=5 // pred_check_branch
      %377 = sbr.rel (%p375) target = $region64
    $region63: #{autoencoder_forward.1} parent=5 // pred_region
      // Predicated region
      $region65: #{autoencoder_forward.1} parent=63 // pred_check
        %p378 = pneg %p39
      $region66: #{autoencoder_forward.1} parent=63 // pred_check_branch
        %380 = sbr.rel (%p378) target = $region68
      $region67: #{autoencoder_forward.1} parent=63 // pred_region
        %p381 = scmp.lt.s32.totalorder %s19, 1
        %s382 = scalar_select %p381, %s19, 1
        %s383 = smul.addr %s382, 32
        %s384 = smul.addr %s383, 4
        %s385 = scalar_lea.vmem %s0, %s384
      $region68: #{autoencoder_forward.1} parent=63 // pred_fallthru
        _
    $region64: #{autoencoder_forward.1} parent=5 // pred_fallthru
      _
    %p386 = scmp.le.s32.totalorder 1, %s19
    %p387 = scmp.lt.s32.totalorder %s19, 3
    %p388 = pnand %p386, %p387
    %p389 = pneg %p388
    // Predicated region
    $region69: #{autoencoder_forward.1} parent=5 // pred_check
      _
    $region70: #{autoencoder_forward.1} parent=5 // pred_check_branch
      %391 = sbr.rel (%p388) target = $region72
    $region71: #{autoencoder_forward.1} parent=5 // pred_region
      %s392 = ssub.s32 %s19, 1
      %p393 = scmp.lt.s32.totalorder %s24, 1
      %s394 = scalar_select %p393, %s24, 1
      %s395 = smul.addr %s394, 32
      %s396 = smul.addr %s395, 4
      %s397 = scalar_lea.vmem %s0, %s396
      %p398 = pneg %p45
      %p399 = pneg %p42
      %p400 = pneg %p66
      %p401 = pneg %p63
      %p402 = pneg %p87
      %p403 = pneg %p84
      %p404 = pneg %p108
      %p405 = pneg %p105
      %p406 = pneg %p129
      %p407 = pneg %p126
      %p408 = pneg %p150
      %p409 = pneg %p147
      %p410 = pneg %p171
      %p411 = pneg %p168
      %p412 = pneg %p192
      %p413 = pneg %p189
      %p414 = pneg %p213
      %p415 = pneg %p210
      %p416 = pneg %p234
      %p417 = pneg %p231
      %p418 = pneg %p255
      %p419 = pneg %p252
      %p420 = pneg %p276
      %p421 = pneg %p273
      %p422 = pneg %p297
      %p423 = pneg %p294
      %p424 = pneg %p323
      %p425 = pneg %p320
      %p426 = scmp.lt.s32.totalorder %s24, 1
      %s427 = scalar_select %p426, %s24, 1
      %s428 = smul.addr %s427, 32
      %s429 = smul.addr %s428, 8
      %s430 = scalar_lea.vmem %s13, %s429
      %p431 = scmp.lt.s32.totalorder %s24, 1
      %s432 = scalar_select %p431, %s24, 1
      %s433 = smul.addr %s432, 32
      %s434 = smul.addr %s433, 4
      %s435 = scalar_lea.vmem %s0, %s434
      %p436 = scmp.lt.s32.totalorder %s24, 1
      %s437 = scalar_select %p436, %s24, 1
      %s438 = smul.addr %s437, 32
      %s439 = smul.addr %s438, 8
      %s440 = scalar_lea.vmem %s13, %s439
      %vm442 = vcmask 912384
      %443 = vst.msk [vmem:[#allocation4] sm:$0xf] %vm442, 0
      %444 = vst.msk [vmem:[#allocation4 + $0x4] sm:$0xf] %vm442, 0
      %445 = vst.msk [vmem:[#allocation4 + $0x8] sm:$0xf] %vm442, 0
      %446 = vst.msk [vmem:[#allocation4 + $0xc] sm:$0xf] %vm442, 0
      %447 = vst.msk [vmem:[#allocation4 + $0x10] sm:$0xf] %vm442, 0
      %448 = vst.msk [vmem:[#allocation4 + $0x14] sm:$0xf] %vm442, 0
      %449 = vst.msk [vmem:[#allocation4 + $0x50] sm:$0xf] %vm442, 0
      %450 = vst.msk [vmem:[#allocation4 + $0x54] sm:$0xf] %vm442, 0
      %451 = vst.msk [vmem:[#allocation4 + $0x58] sm:$0xf] %vm442, 0
      %452 = vst.msk [vmem:[#allocation4 + $0x5c] sm:$0xf] %vm442, 0
      %453 = vst.msk [vmem:[#allocation4 + $0x60] sm:$0xf] %vm442, 0
      %454 = vst.msk [vmem:[#allocation4 + $0x64] sm:$0xf] %vm442, 0
      %vm455 = vcmask 650240
      %456 = vst.msk [vmem:[#allocation5] sm:$0xf] %vm455, 0
      %457 = vst.msk [vmem:[#allocation5 + $0x4] sm:$0xf] %vm455, 0
      %458 = vst.msk [vmem:[#allocation5 + $0x8] sm:$0xf] %vm455, 0
      %459 = vst.msk [vmem:[#allocation5 + $0xc] sm:$0xf] %vm455, 0
      %460 = vst.msk [vmem:[#allocation5 + $0x10] sm:$0xf] %vm455, 0
      %461 = vst.msk [vmem:[#allocation5 + $0x14] sm:$0xf] %vm455, 0
      %462 = vst.msk [vmem:[#allocation5 + $0x68] sm:$0xf] %vm455, 0
      %463 = vst.msk [vmem:[#allocation5 + $0x6c] sm:$0xf] %vm455, 0
      %464 = vst.msk [vmem:[#allocation5 + $0x70] sm:$0xf] %vm455, 0
      %465 = vst.msk [vmem:[#allocation5 + $0x74] sm:$0xf] %vm455, 0
      %466 = vst.msk [vmem:[#allocation5 + $0x78] sm:$0xf] %vm455, 0
      %467 = vst.msk [vmem:[#allocation5 + $0x7c] sm:$0xf] %vm455, 0
      %vm468 = vcmask 420864
      %469 = vst.msk [vmem:[#allocation6] sm:$0xf] %vm468, 0
      %470 = vst.msk [vmem:[#allocation6 + $0x4] sm:$0xf] %vm468, 0
      %471 = vst.msk [vmem:[#allocation6 + $0x8] sm:$0xf] %vm468, 0
      %472 = vst.msk [vmem:[#allocation6 + $0xc] sm:$0xf] %vm468, 0
      %473 = vst.msk [vmem:[#allocation6 + $0x10] sm:$0xf] %vm468, 0
      %474 = vst.msk [vmem:[#allocation6 + $0x14] sm:$0xf] %vm468, 0
      %475 = vst.msk [vmem:[#allocation6 + $0x80] sm:$0xf] %vm468, 0
      %476 = vst.msk [vmem:[#allocation6 + $0x84] sm:$0xf] %vm468, 0
      %477 = vst.msk [vmem:[#allocation6 + $0x88] sm:$0xf] %vm468, 0
      %478 = vst.msk [vmem:[#allocation6 + $0x8c] sm:$0xf] %vm468, 0
      %479 = vst.msk [vmem:[#allocation6 + $0x90] sm:$0xf] %vm468, 0
      %480 = vst.msk [vmem:[#allocation6 + $0x94] sm:$0xf] %vm468, 0
      %v481 = vld [vmem:[%s435] sm:$0xf]
      %v482 = vld [vmem:[%s435 + $0x4] sm:$0xf]
      %v483 = vld [vmem:[%s435 + $0x8] sm:$0xf]
      %v484 = vld [vmem:[%s435 + $0xc] sm:$0xf]
      %v485 = vld [vmem:[%s435 + $0x10] sm:$0xf]
      %v486 = vld [vmem:[%s435 + $0x14] sm:$0xf]
      %v487 = vld [vmem:[%s435 + $0x18] sm:$0xf]
      %v488 = vld [vmem:[%s435 + $0x1c] sm:$0xf]
      %v489 = vld [vmem:[%s435 + $0x20] sm:$0xf]
      %v490 = vld [vmem:[%s435 + $0x24] sm:$0xf]
      %v491 = vld [vmem:[%s435 + $0x28] sm:$0xf]
      %v492 = vld [vmem:[%s435 + $0x2c] sm:$0xf]
      %v493 = vld [vmem:[%s435 + $0x30] sm:$0xf]
      %v494 = vld [vmem:[%s435 + $0x34] sm:$0xf]
      %v495 = vld [vmem:[%s435 + $0x38] sm:$0xf]
      %v496 = vld [vmem:[%s435 + $0x3c] sm:$0xf]
      %v497 = vld [vmem:[%s435 + $0x40] sm:$0xf]
      %v498 = vld [vmem:[%s435 + $0x44] sm:$0xf]
      %v499 = vld [vmem:[%s435 + $0x48] sm:$0xf]
      %v500 = vld [vmem:[%s435 + $0x4c] sm:$0xf]
      %v501 = vld [vmem:[%s435 + $0x50] sm:$0xf]
      %v502 = vld [vmem:[%s435 + $0x54] sm:$0xf]
      %v503 = vld [vmem:[%s435 + $0x58] sm:$0xf]
      %v504 = vld [vmem:[%s435 + $0x5c] sm:$0xf]
      %v505 = vld [vmem:[%s435 + $0x60] sm:$0xf]
      %v506 = vld [vmem:[%s435 + $0x64] sm:$0xf]
      %v507 = vld [vmem:[%s1] sm:$0xf]
      %v508 = vld [vmem:[%s1 + $0x4] sm:$0xf]
      %v509 = vld [vmem:[%s435 + $0x68] sm:$0xf]
      %v510 = vld [vmem:[%s435 + $0x6c] sm:$0xf]
      %s511 = scalar_lea.vmem %s1, 8
      %v512 = vld [vmem:[%s511] sm:$0xf]
      %v513 = vld [vmem:[%s511 + $0x4] sm:$0xf]
      %v540 = vunpack.c.l.b16 %v483
      %v541 = vunpack.c.l.b16 %v484
      %v542 = vunpack.c.l.b16 %v485
      %v543 = vunpack.c.l.b16 %v486
      %v544 = vunpack.c.l.b16 %v487
      %v545 = vunpack.c.l.b16 %v488
      %v546 = vunpack.c.l.b16 %v489
      %v547 = vunpack.c.l.b16 %v490
      %v548 = vunpack.c.l.b16 %v491
      %v549 = vunpack.c.l.b16 %v492
      %v550 = vunpack.c.l.b16 %v493
      %v551 = vunpack.c.l.b16 %v494
      %v552 = vunpack.c.l.b16 %v495
      %v553 = vunpack.c.l.b16 %v496
      %v554 = vunpack.c.l.b16 %v497
      %v555 = vunpack.c.l.b16 %v498
      %v556 = vunpack.c.l.b16 %v499
      %v557 = vunpack.c.l.b16 %v500
      %v558 = vunpack.c.l.b16 %v501
      %v559 = vunpack.c.l.b16 %v502
      %v560 = vunpack.c.l.b16 %v503
      %v561 = vunpack.c.l.b16 %v504
      %v562 = vunpack.c.l.b16 %v505
      %v563 = vunpack.c.l.b16 %v506
      %v564 = vunpack.c.l.b16 %v509
      %v565 = vunpack.c.l.b16 %v510
      %v566 = vpack.c.b16 %v541, %v540
      %v567 = vpack.c.b16 %v543, %v542
      %v568 = vpack.c.b16 %v545, %v544
      %v569 = vpack.c.b16 %v547, %v546
      %v570 = vpack.c.b16 %v549, %v548
      %v571 = vpack.c.b16 %v551, %v550
      %v572 = vpack.c.b16 %v553, %v552
      %v573 = vpack.c.b16 %v555, %v554
      %v574 = vpack.c.b16 %v557, %v556
      %v575 = vpack.c.b16 %v559, %v558
      %v576 = vpack.c.b16 %v561, %v560
      %v577 = vpack.c.b16 %v563, %v562
      %v578 = vpack.c.b16 %v565, %v564
      %v581 = vunpack.c.l.b16 %v512
      %v582 = vunpack.c.l.b16 %v513
      %v583 = vpack.c.b16 %v582, %v581
      %vm585 = vcmask 130048
      %v587 = vsel %vm585, %v566, 0
      %v590 = vsel %vm585, %v567, 0
      %v593 = vsel %vm585, %v568, 0
      %v596 = vsel %vm585, %v569, 0
      %v599 = vsel %vm585, %v570, 0
      %v602 = vsel %vm585, %v571, 0
      %v605 = vsel %vm585, %v572, 0
      %v608 = vsel %vm585, %v573, 0
      %v611 = vsel %vm585, %v574, 0
      %v614 = vsel %vm585, %v575, 0
      %v617 = vsel %vm585, %v576, 0
      %v620 = vsel %vm585, %v577, 0
      %v623 = vsel %vm585, %v578, 0
      %625 = vmatpush.bf16.msra.mxu0 0
      %626 = vmatpush.bf16.msra.mxu0 0
      %627 = vmatpush.bf16.msra.mxu0 0
      %628 = vmatpush.bf16.msra.mxu0 0
      %629 = vmatpush.bf16.msra.mxu0 0
      %630 = vmatpush.bf16.msra.mxu0 0
      %631 = vmatpush.bf16.msra.mxu0 0
      %632 = vmatpush.bf16.msra.mxu0 %v583
      %633 = vmatmul.bf16.gmra.mxu0 %v587
      %v634 = vpop.f32.mrf.mxu0
      %v635 = vadd.f32 0.0, %v634
      %v636 = vpop.f32.mrf.mxu0
      %v637 = vadd.f32 0.0, %v636
      %638 = vmatmul.bf16.gmra.mxu0 %v590
      %v639 = vpop.f32.mrf.mxu0
      %v640 = vadd.f32 0.0, %v639
      %v641 = vpop.f32.mrf.mxu0
      %v642 = vadd.f32 0.0, %v641
      %643 = vmatmul.bf16.gmra.mxu0 %v593
      %v644 = vpop.f32.mrf.mxu0
      %v645 = vadd.f32 0.0, %v644
      %v646 = vpop.f32.mrf.mxu0
      %v647 = vadd.f32 0.0, %v646
      %648 = vmatmul.bf16.gmra.mxu0 %v596
      %v649 = vpop.f32.mrf.mxu0
      %v650 = vadd.f32 0.0, %v649
      %v651 = vpop.f32.mrf.mxu0
      %v652 = vadd.f32 0.0, %v651
      %653 = vmatmul.bf16.gmra.mxu0 %v599
      %v654 = vpop.f32.mrf.mxu0
      %v655 = vadd.f32 0.0, %v654
      %v656 = vpop.f32.mrf.mxu0
      %v657 = vadd.f32 0.0, %v656
      %658 = vmatmul.bf16.gmra.mxu0 %v602
      %v659 = vpop.f32.mrf.mxu0
      %v660 = vadd.f32 0.0, %v659
      %v661 = vpop.f32.mrf.mxu0
      %v662 = vadd.f32 0.0, %v661
      %663 = vmatmul.bf16.gmra.mxu0 %v605
      %v664 = vpop.f32.mrf.mxu0
      %v665 = vadd.f32 0.0, %v664
      %v666 = vpop.f32.mrf.mxu0
      %v667 = vadd.f32 0.0, %v666
      %668 = vmatmul.bf16.gmra.mxu0 %v608
      %v669 = vpop.f32.mrf.mxu0
      %v670 = vadd.f32 0.0, %v669
      %v671 = vpop.f32.mrf.mxu0
      %v672 = vadd.f32 0.0, %v671
      %673 = vmatmul.bf16.gmra.mxu0 %v611
      %v674 = vpop.f32.mrf.mxu0
      %v675 = vadd.f32 0.0, %v674
      %v676 = vpop.f32.mrf.mxu0
      %v677 = vadd.f32 0.0, %v676
      %678 = vmatmul.bf16.gmra.mxu0 %v614
      %v679 = vpop.f32.mrf.mxu0
      %v680 = vadd.f32 0.0, %v679
      %v681 = vpop.f32.mrf.mxu0
      %v682 = vadd.f32 0.0, %v681
      %683 = vmatmul.bf16.gmra.mxu0 %v617
      %v684 = vpop.f32.mrf.mxu0
      %v685 = vadd.f32 0.0, %v684
      %v686 = vpop.f32.mrf.mxu0
      %v687 = vadd.f32 0.0, %v686
      %688 = vmatmul.bf16.gmra.mxu0 %v620
      %v689 = vpop.f32.mrf.mxu0
      %v690 = vadd.f32 0.0, %v689
      %v691 = vpop.f32.mrf.mxu0
      %v692 = vadd.f32 0.0, %v691
      %693 = vmatmul.bf16.gmra.mxu0 %v623
      %v694 = vpop.f32.mrf.mxu0
      %v695 = vadd.f32 0.0, %v694
      %v696 = vpop.f32.mrf.mxu0
      %v697 = vadd.f32 0.0, %v696
      %698 = vdwg.mxu0
      %v701 = vunpack.c.l.b16 %v481
      %v702 = vunpack.c.l.b16 %v482
      %v703 = vpack.c.b16 %v702, %v701
      %v706 = vunpack.c.l.b16 %v507
      %v707 = vunpack.c.l.b16 %v508
      %v708 = vpack.c.b16 %v707, %v706
      %v711 = vsel %vm585, %v703, 0
      %713 = vmatpush.bf16.msra.mxu0 0
      %714 = vmatpush.bf16.msra.mxu0 0
      %715 = vmatpush.bf16.msra.mxu0 0
      %716 = vmatpush.bf16.msra.mxu0 0
      %717 = vmatpush.bf16.msra.mxu0 0
      %718 = vmatpush.bf16.msra.mxu0 0
      %719 = vmatpush.bf16.msra.mxu0 0
      %720 = vmatpush.bf16.msra.mxu0 %v708
      %721 = vmatmul.bf16.gmra.mxu0 %v711
      %v722 = vpop.f32.mrf.mxu0
      %v723 = vadd.f32 %v635, %v722
      %v724 = vpop.f32.mrf.mxu0
      %v725 = vadd.f32 %v637, %v724
      %726 = vmatmul.bf16.gmra.mxu0 %v587
      %v727 = vpop.f32.mrf.mxu0
      %v728 = vadd.f32 %v640, %v727
      %v729 = vpop.f32.mrf.mxu0
      %v730 = vadd.f32 %v642, %v729
      %731 = vmatmul.bf16.gmra.mxu0 %v590
      %v732 = vpop.f32.mrf.mxu0
      %v733 = vadd.f32 %v645, %v732
      %v734 = vpop.f32.mrf.mxu0
      %v735 = vadd.f32 %v647, %v734
      %736 = vmatmul.bf16.gmra.mxu0 %v593
      %v737 = vpop.f32.mrf.mxu0
      %v738 = vadd.f32 %v650, %v737
      %v739 = vpop.f32.mrf.mxu0
      %v740 = vadd.f32 %v652, %v739
      %741 = vmatmul.bf16.gmra.mxu0 %v596
      %v742 = vpop.f32.mrf.mxu0
      %v743 = vadd.f32 %v655, %v742
      %v744 = vpop.f32.mrf.mxu0
      %v745 = vadd.f32 %v657, %v744
      %746 = vmatmul.bf16.gmra.mxu0 %v599
      %v747 = vpop.f32.mrf.mxu0
      %v748 = vadd.f32 %v660, %v747
      %v749 = vpop.f32.mrf.mxu0
      %v750 = vadd.f32 %v662, %v749
      %751 = vmatmul.bf16.gmra.mxu0 %v602
      %v752 = vpop.f32.mrf.mxu0
      %v753 = vadd.f32 %v665, %v752
      %v754 = vpop.f32.mrf.mxu0
      %v755 = vadd.f32 %v667, %v754
      %756 = vmatmul.bf16.gmra.mxu0 %v605
      %v757 = vpop.f32.mrf.mxu0
      %v758 = vadd.f32 %v670, %v757
      %v759 = vpop.f32.mrf.mxu0
      %v760 = vadd.f32 %v672, %v759
      %761 = vmatmul.bf16.gmra.mxu0 %v608
      %v762 = vpop.f32.mrf.mxu0
      %v763 = vadd.f32 %v675, %v762
      %v764 = vpop.f32.mrf.mxu0
      %v765 = vadd.f32 %v677, %v764
      %766 = vmatmul.bf16.gmra.mxu0 %v611
      %v767 = vpop.f32.mrf.mxu0
      %v768 = vadd.f32 %v680, %v767
      %v769 = vpop.f32.mrf.mxu0
      %v770 = vadd.f32 %v682, %v769
      %771 = vmatmul.bf16.gmra.mxu0 %v614
      %v772 = vpop.f32.mrf.mxu0
      %v773 = vadd.f32 %v685, %v772
      %v774 = vpop.f32.mrf.mxu0
      %v775 = vadd.f32 %v687, %v774
      %776 = vmatmul.bf16.gmra.mxu0 %v617
      %v777 = vpop.f32.mrf.mxu0
      %v778 = vadd.f32 %v690, %v777
      %v779 = vpop.f32.mrf.mxu0
      %v780 = vadd.f32 %v692, %v779
      %781 = vmatmul.bf16.gmra.mxu0 %v620
      %v782 = vpop.f32.mrf.mxu0
      %v783 = vadd.f32 %v695, %v782
      %v784 = vpop.f32.mrf.mxu0
      %v785 = vadd.f32 %v697, %v784
      %786 = vdwg.mxu0
      %v787 = vld [vmem:[%s435 + $0x10] sm:$0xf]
      %v788 = vld [vmem:[%s435 + $0x14] sm:$0xf]
      %v789 = vld [vmem:[%s435 + $0x18] sm:$0xf]
      %v790 = vld [vmem:[%s435 + $0x1c] sm:$0xf]
      %v791 = vld [vmem:[%s435 + $0x20] sm:$0xf]
      %v792 = vld [vmem:[%s435 + $0x24] sm:$0xf]
      %v793 = vld [vmem:[%s435 + $0x28] sm:$0xf]
      %v794 = vld [vmem:[%s435 + $0x2c] sm:$0xf]
      %v795 = vld [vmem:[%s435 + $0x30] sm:$0xf]
      %v796 = vld [vmem:[%s435 + $0x34] sm:$0xf]
      %v797 = vld [vmem:[%s435 + $0x38] sm:$0xf]
      %v798 = vld [vmem:[%s435 + $0x3c] sm:$0xf]
      %v799 = vld [vmem:[%s435 + $0x40] sm:$0xf]
      %v800 = vld [vmem:[%s435 + $0x44] sm:$0xf]
      %v801 = vld [vmem:[%s435 + $0x48] sm:$0xf]
      %v802 = vld [vmem:[%s435 + $0x4c] sm:$0xf]
      %v803 = vld [vmem:[%s435 + $0x50] sm:$0xf]
      %v804 = vld [vmem:[%s435 + $0x54] sm:$0xf]
      %v805 = vld [vmem:[%s435 + $0x58] sm:$0xf]
      %v806 = vld [vmem:[%s435 + $0x5c] sm:$0xf]
      %v807 = vld [vmem:[%s435 + $0x60] sm:$0xf]
      %v808 = vld [vmem:[%s435 + $0x64] sm:$0xf]
      %v809 = vld [vmem:[%s435 + $0x68] sm:$0xf]
      %v810 = vld [vmem:[%s435 + $0x6c] sm:$0xf]
      %v811 = vld [vmem:[%s435 + $0x70] sm:$0xf]
      %v812 = vld [vmem:[%s435 + $0x74] sm:$0xf]
      %s813 = scalar_lea.vmem %s1, 16
      %v814 = vld [vmem:[%s813] sm:$0xf]
      %v815 = vld [vmem:[%s813 + $0x4] sm:$0xf]
      %v842 = vunpack.c.l.b16 %v787
      %v843 = vunpack.c.l.b16 %v788
      %v844 = vunpack.c.l.b16 %v789
      %v845 = vunpack.c.l.b16 %v790
      %v846 = vunpack.c.l.b16 %v791
      %v847 = vunpack.c.l.b16 %v792
      %v848 = vunpack.c.l.b16 %v793
      %v849 = vunpack.c.l.b16 %v794
      %v850 = vunpack.c.l.b16 %v795
      %v851 = vunpack.c.l.b16 %v796
      %v852 = vunpack.c.l.b16 %v797
      %v853 = vunpack.c.l.b16 %v798
      %v854 = vunpack.c.l.b16 %v799
      %v855 = vunpack.c.l.b16 %v800
      %v856 = vunpack.c.l.b16 %v801
      %v857 = vunpack.c.l.b16 %v802
      %v858 = vunpack.c.l.b16 %v803
      %v859 = vunpack.c.l.b16 %v804
      %v860 = vunpack.c.l.b16 %v805
      %v861 = vunpack.c.l.b16 %v806
      %v862 = vunpack.c.l.b16 %v807
      %v863 = vunpack.c.l.b16 %v808
      %v864 = vunpack.c.l.b16 %v809
      %v865 = vunpack.c.l.b16 %v810
      %v866 = vunpack.c.l.b16 %v811
      %v867 = vunpack.c.l.b16 %v812
      %v868 = vpack.c.b16 %v843, %v842
      %v869 = vpack.c.b16 %v845, %v844
      %v870 = vpack.c.b16 %v847, %v846
      %v871 = vpack.c.b16 %v849, %v848
      %v872 = vpack.c.b16 %v851, %v850
      %v873 = vpack.c.b16 %v853, %v852
      %v874 = vpack.c.b16 %v855, %v854
      %v875 = vpack.c.b16 %v857, %v856
      %v876 = vpack.c.b16 %v859, %v858
      %v877 = vpack.c.b16 %v861, %v860
      %v878 = vpack.c.b16 %v863, %v862
      %v879 = vpack.c.b16 %v865, %v864
      %v880 = vpack.c.b16 %v867, %v866
      %v883 = vunpack.c.l.b16 %v814
      %v884 = vunpack.c.l.b16 %v815
      %v885 = vpack.c.b16 %v884, %v883
      %v888 = vsel %vm585, %v868, 0
      %v891 = vsel %vm585, %v869, 0
      %v894 = vsel %vm585, %v870, 0
      %v897 = vsel %vm585, %v871, 0
      %v900 = vsel %vm585, %v872, 0
      %v903 = vsel %vm585, %v873, 0
      %v906 = vsel %vm585, %v874, 0
      %v909 = vsel %vm585, %v875, 0
      %v912 = vsel %vm585, %v876, 0
      %v915 = vsel %vm585, %v877, 0
      %v918 = vsel %vm585, %v878, 0
      %v921 = vsel %vm585, %v879, 0
      %v924 = vsel %vm585, %v880, 0
      %926 = vmatpush.bf16.msra.mxu0 0
      %927 = vmatpush.bf16.msra.mxu0 0
      %928 = vmatpush.bf16.msra.mxu0 0
      %929 = vmatpush.bf16.msra.mxu0 0
      %930 = vmatpush.bf16.msra.mxu0 0
      %931 = vmatpush.bf16.msra.mxu0 0
      %932 = vmatpush.bf16.msra.mxu0 0
      %933 = vmatpush.bf16.msra.mxu0 %v885
      %934 = vmatmul.bf16.gmra.mxu0 %v888
      %v935 = vpop.f32.mrf.mxu0
      %v936 = vadd.f32 0.0, %v935
      %v937 = vpop.f32.mrf.mxu0
      %v938 = vadd.f32 0.0, %v937
      %939 = vmatmul.bf16.gmra.mxu0 %v891
      %v940 = vpop.f32.mrf.mxu0
      %v941 = vadd.f32 0.0, %v940
      %v942 = vpop.f32.mrf.mxu0
      %v943 = vadd.f32 0.0, %v942
      %944 = vmatmul.bf16.gmra.mxu0 %v894
      %v945 = vpop.f32.mrf.mxu0
      %v946 = vadd.f32 0.0, %v945
      %v947 = vpop.f32.mrf.mxu0
      %v948 = vadd.f32 0.0, %v947
      %949 = vmatmul.bf16.gmra.mxu0 %v897
      %v950 = vpop.f32.mrf.mxu0
      %v951 = vadd.f32 0.0, %v950
      %v952 = vpop.f32.mrf.mxu0
      %v953 = vadd.f32 0.0, %v952
      %954 = vmatmul.bf16.gmra.mxu0 %v900
      %v955 = vpop.f32.mrf.mxu0
      %v956 = vadd.f32 0.0, %v955
      %v957 = vpop.f32.mrf.mxu0
      %v958 = vadd.f32 0.0, %v957
      %959 = vmatmul.bf16.gmra.mxu0 %v903
      %v960 = vpop.f32.mrf.mxu0
      %v961 = vadd.f32 0.0, %v960
      %v962 = vpop.f32.mrf.mxu0
      %v963 = vadd.f32 0.0, %v962
      %964 = vmatmul.bf16.gmra.mxu0 %v906
      %v965 = vpop.f32.mrf.mxu0
      %v966 = vadd.f32 0.0, %v965
      %v967 = vpop.f32.mrf.mxu0
      %v968 = vadd.f32 0.0, %v967
      %969 = vmatmul.bf16.gmra.mxu0 %v909
      %v970 = vpop.f32.mrf.mxu0
      %v971 = vadd.f32 0.0, %v970
      %v972 = vpop.f32.mrf.mxu0
      %v973 = vadd.f32 0.0, %v972
      %974 = vmatmul.bf16.gmra.mxu0 %v912
      %v975 = vpop.f32.mrf.mxu0
      %v976 = vadd.f32 0.0, %v975
      %v977 = vpop.f32.mrf.mxu0
      %v978 = vadd.f32 0.0, %v977
      %979 = vmatmul.bf16.gmra.mxu0 %v915
      %v980 = vpop.f32.mrf.mxu0
      %v981 = vadd.f32 0.0, %v980
      %v982 = vpop.f32.mrf.mxu0
      %v983 = vadd.f32 0.0, %v982
      %984 = vmatmul.bf16.gmra.mxu0 %v918
      %v985 = vpop.f32.mrf.mxu0
      %v986 = vadd.f32 0.0, %v985
      %v987 = vpop.f32.mrf.mxu0
      %v988 = vadd.f32 0.0, %v987
      %989 = vmatmul.bf16.gmra.mxu0 %v921
      %v990 = vpop.f32.mrf.mxu0
      %v991 = vadd.f32 0.0, %v990
      %v992 = vpop.f32.mrf.mxu0
      %v993 = vadd.f32 0.0, %v992
      %994 = vmatmul.bf16.gmra.mxu0 %v924
      %v995 = vpop.f32.mrf.mxu0
      %v996 = vadd.f32 0.0, %v995
      %v997 = vpop.f32.mrf.mxu0
      %v998 = vadd.f32 0.0, %v997
      %999 = vdwg.mxu0
      %v1000 = vadd.f32 %v723, %v936
      %v1001 = vadd.f32 %v725, %v938
      %v1002 = vadd.f32 %v728, %v941
      %v1003 = vadd.f32 %v730, %v943
      %v1004 = vadd.f32 %v733, %v946
      %v1005 = vadd.f32 %v735, %v948
      %v1006 = vadd.f32 %v738, %v951
      %v1007 = vadd.f32 %v740, %v953
      %v1008 = vadd.f32 %v743, %v956
      %v1009 = vadd.f32 %v745, %v958
      %v1010 = vadd.f32 %v748, %v961
      %v1011 = vadd.f32 %v750, %v963
      %v1012 = vadd.f32 %v753, %v966
      %v1013 = vadd.f32 %v755, %v968
      %v1014 = vadd.f32 %v758, %v971
      %v1015 = vadd.f32 %v760, %v973
      %v1016 = vadd.f32 %v763, %v976
      %v1017 = vadd.f32 %v765, %v978
      %v1018 = vadd.f32 %v768, %v981
      %v1019 = vadd.f32 %v770, %v983
      %v1020 = vadd.f32 %v773, %v986
      %v1021 = vadd.f32 %v775, %v988
      %v1022 = vadd.f32 %v778, %v991
      %v1023 = vadd.f32 %v780, %v993
      %v1024 = vadd.f32 %v783, %v996
      %v1025 = vadd.f32 %v785, %v998
      %v1026 = vld [vmem:[%s435 + $0x18] sm:$0xf]
      %v1027 = vld [vmem:[%s435 + $0x1c] sm:$0xf]
      %v1028 = vld [vmem:[%s435 + $0x20] sm:$0xf]
      %v1029 = vld [vmem:[%s435 + $0x24] sm:$0xf]
      %v1030 = vld [vmem:[%s435 + $0x28] sm:$0xf]
      %v1031 = vld [vmem:[%s435 + $0x2c] sm:$0xf]
      %v1032 = vld [vmem:[%s435 + $0x30] sm:$0xf]
      %v1033 = vld [vmem:[%s435 + $0x34] sm:$0xf]
      %v1034 = vld [vmem:[%s435 + $0x38] sm:$0xf]
      %v1035 = vld [vmem:[%s435 + $0x3c] sm:$0xf]
      %v1036 = vld [vmem:[%s435 + $0x40] sm:$0xf]
      %v1037 = vld [vmem:[%s435 + $0x44] sm:$0xf]
      %v1038 = vld [vmem:[%s435 + $0x48] sm:$0xf]
      %v1039 = vld [vmem:[%s435 + $0x4c] sm:$0xf]
      %v1040 = vld [vmem:[%s435 + $0x50] sm:$0xf]
      %v1041 = vld [vmem:[%s435 + $0x54] sm:$0xf]
      %v1042 = vld [vmem:[%s435 + $0x58] sm:$0xf]
      %v1043 = vld [vmem:[%s435 + $0x5c] sm:$0xf]
      %v1044 = vld [vmem:[%s435 + $0x60] sm:$0xf]
      %v1045 = vld [vmem:[%s435 + $0x64] sm:$0xf]
      %v1046 = vld [vmem:[%s435 + $0x68] sm:$0xf]
      %v1047 = vld [vmem:[%s435 + $0x6c] sm:$0xf]
      %v1048 = vld [vmem:[%s435 + $0x70] sm:$0xf]
      %v1049 = vld [vmem:[%s435 + $0x74] sm:$0xf]
      %v1050 = vld [vmem:[%s435 + $0x78] sm:$0xf]
      %v1051 = vld [vmem:[%s435 + $0x7c] sm:$0xf]
      %s1052 = scalar_lea.vmem %s1, 24
      %v1053 = vld [vmem:[%s1052] sm:$0xf]
      %v1054 = vld [vmem:[%s1052 + $0x4] sm:$0xf]
      %v1081 = vunpack.c.l.b16 %v1026
      %v1082 = vunpack.c.l.b16 %v1027
      %v1083 = vunpack.c.l.b16 %v1028
      %v1084 = vunpack.c.l.b16 %v1029
      %v1085 = vunpack.c.l.b16 %v1030
      %v1086 = vunpack.c.l.b16 %v1031
      %v1087 = vunpack.c.l.b16 %v1032
      %v1088 = vunpack.c.l.b16 %v1033
      %v1089 = vunpack.c.l.b16 %v1034
      %v1090 = vunpack.c.l.b16 %v1035
      %v1091 = vunpack.c.l.b16 %v1036
      %v1092 = vunpack.c.l.b16 %v1037
      %v1093 = vunpack.c.l.b16 %v1038
      %v1094 = vunpack.c.l.b16 %v1039
      %v1095 = vunpack.c.l.b16 %v1040
      %v1096 = vunpack.c.l.b16 %v1041
      %v1097 = vunpack.c.l.b16 %v1042
      %v1098 = vunpack.c.l.b16 %v1043
      %v1099 = vunpack.c.l.b16 %v1044
      %v1100 = vunpack.c.l.b16 %v1045
      %v1101 = vunpack.c.l.b16 %v1046
      %v1102 = vunpack.c.l.b16 %v1047
      %v1103 = vunpack.c.l.b16 %v1048
      %v1104 = vunpack.c.l.b16 %v1049
      %v1105 = vunpack.c.l.b16 %v1050
      %v1106 = vunpack.c.l.b16 %v1051
      %v1107 = vpack.c.b16 %v1082, %v1081
      %v1108 = vpack.c.b16 %v1084, %v1083
      %v1109 = vpack.c.b16 %v1086, %v1085
      %v1110 = vpack.c.b16 %v1088, %v1087
      %v1111 = vpack.c.b16 %v1090, %v1089
      %v1112 = vpack.c.b16 %v1092, %v1091
      %v1113 = vpack.c.b16 %v1094, %v1093
      %v1114 = vpack.c.b16 %v1096, %v1095
      %v1115 = vpack.c.b16 %v1098, %v1097
      %v1116 = vpack.c.b16 %v1100, %v1099
      %v1117 = vpack.c.b16 %v1102, %v1101
      %v1118 = vpack.c.b16 %v1104, %v1103
      %v1119 = vpack.c.b16 %v1106, %v1105
      %v1122 = vunpack.c.l.b16 %v1053
      %v1123 = vunpack.c.l.b16 %v1054
      %v1124 = vpack.c.b16 %v1123, %v1122
      %v1127 = vsel %vm585, %v1107, 0
      %v1130 = vsel %vm585, %v1108, 0
      %v1133 = vsel %vm585, %v1109, 0
      %v1136 = vsel %vm585, %v1110, 0
      %v1139 = vsel %vm585, %v1111, 0
      %v1142 = vsel %vm585, %v1112, 0
      %v1145 = vsel %vm585, %v1113, 0
      %v1148 = vsel %vm585, %v1114, 0
      %v1151 = vsel %vm585, %v1115, 0
      %v1154 = vsel %vm585, %v1116, 0
      %v1157 = vsel %vm585, %v1117, 0
      %v1160 = vsel %vm585, %v1118, 0
      %v1163 = vsel %vm585, %v1119, 0
      %1165 = vmatpush.bf16.msra.mxu0 0
      %1166 = vmatpush.bf16.msra.mxu0 0
      %1167 = vmatpush.bf16.msra.mxu0 0
      %1168 = vmatpush.bf16.msra.mxu0 0
      %1169 = vmatpush.bf16.msra.mxu0 0
      %1170 = vmatpush.bf16.msra.mxu0 0
      %1171 = vmatpush.bf16.msra.mxu0 0
      %1172 = vmatpush.bf16.msra.mxu0 %v1124
      %1173 = vmatmul.bf16.gmra.mxu0 %v1127
      %v1174 = vpop.f32.mrf.mxu0
      %v1175 = vadd.f32 0.0, %v1174
      %v1176 = vpop.f32.mrf.mxu0
      %v1177 = vadd.f32 0.0, %v1176
      %1178 = vmatmul.bf16.gmra.mxu0 %v1130
      %v1179 = vpop.f32.mrf.mxu0
      %v1180 = vadd.f32 0.0, %v1179
      %v1181 = vpop.f32.mrf.mxu0
      %v1182 = vadd.f32 0.0, %v1181
      %1183 = vmatmul.bf16.gmra.mxu0 %v1133
      %v1184 = vpop.f32.mrf.mxu0
      %v1185 = vadd.f32 0.0, %v1184
      %v1186 = vpop.f32.mrf.mxu0
      %v1187 = vadd.f32 0.0, %v1186
      %1188 = vmatmul.bf16.gmra.mxu0 %v1136
      %v1189 = vpop.f32.mrf.mxu0
      %v1190 = vadd.f32 0.0, %v1189
      %v1191 = vpop.f32.mrf.mxu0
      %v1192 = vadd.f32 0.0, %v1191
      %1193 = vmatmul.bf16.gmra.mxu0 %v1139
      %v1194 = vpop.f32.mrf.mxu0
      %v1195 = vadd.f32 0.0, %v1194
      %v1196 = vpop.f32.mrf.mxu0
      %v1197 = vadd.f32 0.0, %v1196
      %1198 = vmatmul.bf16.gmra.mxu0 %v1142
      %v1199 = vpop.f32.mrf.mxu0
      %v1200 = vadd.f32 0.0, %v1199
      %v1201 = vpop.f32.mrf.mxu0
      %v1202 = vadd.f32 0.0, %v1201
      %1203 = vmatmul.bf16.gmra.mxu0 %v1145
      %v1204 = vpop.f32.mrf.mxu0
      %v1205 = vadd.f32 0.0, %v1204
      %v1206 = vpop.f32.mrf.mxu0
      %v1207 = vadd.f32 0.0, %v1206
      %1208 = vmatmul.bf16.gmra.mxu0 %v1148
      %v1209 = vpop.f32.mrf.mxu0
      %v1210 = vadd.f32 0.0, %v1209
      %v1211 = vpop.f32.mrf.mxu0
      %v1212 = vadd.f32 0.0, %v1211
      %1213 = vmatmul.bf16.gmra.mxu0 %v1151
      %v1214 = vpop.f32.mrf.mxu0
      %v1215 = vadd.f32 0.0, %v1214
      %v1216 = vpop.f32.mrf.mxu0
      %v1217 = vadd.f32 0.0, %v1216
      %1218 = vmatmul.bf16.gmra.mxu0 %v1154
      %v1219 = vpop.f32.mrf.mxu0
      %v1220 = vadd.f32 0.0, %v1219
      %v1221 = vpop.f32.mrf.mxu0
      %v1222 = vadd.f32 0.0, %v1221
      %1223 = vmatmul.bf16.gmra.mxu0 %v1157
      %v1224 = vpop.f32.mrf.mxu0
      %v1225 = vadd.f32 0.0, %v1224
      %v1226 = vpop.f32.mrf.mxu0
      %v1227 = vadd.f32 0.0, %v1226
      %1228 = vmatmul.bf16.gmra.mxu0 %v1160
      %v1229 = vpop.f32.mrf.mxu0
      %v1230 = vadd.f32 0.0, %v1229
      %v1231 = vpop.f32.mrf.mxu0
      %v1232 = vadd.f32 0.0, %v1231
      %1233 = vmatmul.bf16.gmra.mxu0 %v1163
      %v1234 = vpop.f32.mrf.mxu0
      %v1235 = vadd.f32 0.0, %v1234
      %v1236 = vpop.f32.mrf.mxu0
      %v1237 = vadd.f32 0.0, %v1236
      %1238 = vdwg.mxu0
      %v1239 = vadd.f32 %v1000, %v1175
      %v1240 = vadd.f32 %v1001, %v1177
      %v1241 = vadd.f32 %v1002, %v1180
      %v1242 = vadd.f32 %v1003, %v1182
      %v1243 = vadd.f32 %v1004, %v1185
      %v1244 = vadd.f32 %v1005, %v1187
      %v1245 = vadd.f32 %v1006, %v1190
      %v1246 = vadd.f32 %v1007, %v1192
      %v1247 = vadd.f32 %v1008, %v1195
      %v1248 = vadd.f32 %v1009, %v1197
      %v1249 = vadd.f32 %v1010, %v1200
      %v1250 = vadd.f32 %v1011, %v1202
      %v1251 = vadd.f32 %v1012, %v1205
      %v1252 = vadd.f32 %v1013, %v1207
      %v1253 = vadd.f32 %v1014, %v1210
      %v1254 = vadd.f32 %v1015, %v1212
      %v1255 = vadd.f32 %v1016, %v1215
      %v1256 = vadd.f32 %v1017, %v1217
      %v1257 = vadd.f32 %v1018, %v1220
      %v1258 = vadd.f32 %v1019, %v1222
      %v1259 = vadd.f32 %v1020, %v1225
      %v1260 = vadd.f32 %v1021, %v1227
      %v1261 = vadd.f32 %v1022, %v1230
      %v1262 = vadd.f32 %v1023, %v1232
      %v1263 = vadd.f32 %v1024, %v1235
      %v1264 = vadd.f32 %v1025, %v1237
      %v1265 = vld [vmem:[%s7] sm:$0x1]
      %v1267 = vperm.slane %v1265, 0
      %v1269 = vadd.f32 %v1239, %v1267
      %v1270 = vadd.f32 %v1240, %v1267
      %v1271 = vadd.f32 %v1241, %v1267
      %v1272 = vadd.f32 %v1242, %v1267
      %v1273 = vadd.f32 %v1243, %v1267
      %v1274 = vadd.f32 %v1244, %v1267
      %v1275 = vadd.f32 %v1245, %v1267
      %v1276 = vadd.f32 %v1246, %v1267
      %v1277 = vadd.f32 %v1247, %v1267
      %v1278 = vadd.f32 %v1248, %v1267
      %v1279 = vadd.f32 %v1249, %v1267
      %v1280 = vadd.f32 %v1250, %v1267
      %v1281 = vadd.f32 %v1251, %v1267
      %v1282 = vadd.f32 %v1252, %v1267
      %v1283 = vadd.f32 %v1253, %v1267
      %v1284 = vadd.f32 %v1254, %v1267
      %v1285 = vadd.f32 %v1255, %v1267
      %v1286 = vadd.f32 %v1256, %v1267
      %v1287 = vadd.f32 %v1257, %v1267
      %v1288 = vadd.f32 %v1258, %v1267
      %v1289 = vadd.f32 %v1259, %v1267
      %v1290 = vadd.f32 %v1260, %v1267
      %v1291 = vadd.f32 %v1261, %v1267
      %v1292 = vadd.f32 %v1262, %v1267
      %v1293 = vadd.f32 %v1263, %v1267
      %v1294 = vadd.f32 %v1264, %v1267
      %v1295 = vmul.f32 %v1269, 0.01
      %v1296 = vmul.f32 %v1270, 0.01
      %v1297 = vmul.f32 %v1271, 0.01
      %v1298 = vmul.f32 %v1272, 0.01
      %v1299 = vmul.f32 %v1273, 0.01
      %v1300 = vmul.f32 %v1274, 0.01
      %v1301 = vmul.f32 %v1275, 0.01
      %v1302 = vmul.f32 %v1276, 0.01
      %v1303 = vmul.f32 %v1277, 0.01
      %v1304 = vmul.f32 %v1278, 0.01
      %v1305 = vmul.f32 %v1279, 0.01
      %v1306 = vmul.f32 %v1280, 0.01
      %v1307 = vmul.f32 %v1281, 0.01
      %v1308 = vmul.f32 %v1282, 0.01
      %v1309 = vmul.f32 %v1283, 0.01
      %v1310 = vmul.f32 %v1284, 0.01
      %v1311 = vmul.f32 %v1285, 0.01
      %v1312 = vmul.f32 %v1286, 0.01
      %v1313 = vmul.f32 %v1287, 0.01
      %v1314 = vmul.f32 %v1288, 0.01
      %v1315 = vmul.f32 %v1289, 0.01
      %v1316 = vmul.f32 %v1290, 0.01
      %v1317 = vmul.f32 %v1291, 0.01
      %v1318 = vmul.f32 %v1292, 0.01
      %v1319 = vmul.f32 %v1293, 0.01
      %v1320 = vmul.f32 %v1294, 0.01
      %v1321 = vmax.f32 %v1269, %v1295
      %v1322 = vmax.f32 %v1270, %v1296
      %v1323 = vmax.f32 %v1271, %v1297
      %v1324 = vmax.f32 %v1272, %v1298
      %v1325 = vmax.f32 %v1273, %v1299
      %v1326 = vmax.f32 %v1274, %v1300
      %v1327 = vmax.f32 %v1275, %v1301
      %v1328 = vmax.f32 %v1276, %v1302
      %v1329 = vmax.f32 %v1277, %v1303
      %v1330 = vmax.f32 %v1278, %v1304
      %v1331 = vmax.f32 %v1279, %v1305
      %v1332 = vmax.f32 %v1280, %v1306
      %v1333 = vmax.f32 %v1281, %v1307
      %v1334 = vmax.f32 %v1282, %v1308
      %v1335 = vmax.f32 %v1283, %v1309
      %v1336 = vmax.f32 %v1284, %v1310
      %v1337 = vmax.f32 %v1285, %v1311
      %v1338 = vmax.f32 %v1286, %v1312
      %v1339 = vmax.f32 %v1287, %v1313
      %v1340 = vmax.f32 %v1288, %v1314
      %v1341 = vmax.f32 %v1289, %v1315
      %v1342 = vmax.f32 %v1290, %v1316
      %v1343 = vmax.f32 %v1291, %v1317
      %v1344 = vmax.f32 %v1292, %v1318
      %v1345 = vmax.f32 %v1293, %v1319
      %v1346 = vmax.f32 %v1294, %v1320
      %v1347 = vpack.c.bf16 %v1321, %v1321
      %v1348 = vpack.c.bf16 %v1322, %v1322
      %v1349 = vpack.c.bf16 %v1323, %v1323
      %v1350 = vpack.c.bf16 %v1324, %v1324
      %v1351 = vpack.c.bf16 %v1325, %v1325
      %v1352 = vpack.c.bf16 %v1326, %v1326
      %v1353 = vpack.c.bf16 %v1327, %v1327
      %v1354 = vpack.c.bf16 %v1328, %v1328
      %v1355 = vpack.c.bf16 %v1329, %v1329
      %v1356 = vpack.c.bf16 %v1330, %v1330
      %v1357 = vpack.c.bf16 %v1331, %v1331
      %v1358 = vpack.c.bf16 %v1332, %v1332
      %v1359 = vpack.c.bf16 %v1333, %v1333
      %v1360 = vpack.c.bf16 %v1334, %v1334
      %v1361 = vpack.c.bf16 %v1335, %v1335
      %v1362 = vpack.c.bf16 %v1336, %v1336
      %v1363 = vpack.c.bf16 %v1337, %v1337
      %v1364 = vpack.c.bf16 %v1338, %v1338
      %v1365 = vpack.c.bf16 %v1339, %v1339
      %v1366 = vpack.c.bf16 %v1340, %v1340
      %v1367 = vpack.c.bf16 %v1341, %v1341
      %v1368 = vpack.c.bf16 %v1342, %v1342
      %v1369 = vpack.c.bf16 %v1343, %v1343
      %v1370 = vpack.c.bf16 %v1344, %v1344
      %v1371 = vpack.c.bf16 %v1345, %v1345
      %v1372 = vpack.c.bf16 %v1346, %v1346
      %1373 = vst.msk [vmem:[#allocation2] sm:$0xf] %vm468, %v1347
      %1374 = vst.msk [vmem:[#allocation2 + $0x4] sm:$0xf] %vm468, %v1348
      %1375 = vst.msk [vmem:[#allocation2 + $0x8] sm:$0xf] %vm468, %v1349
      %1376 = vst.msk [vmem:[#allocation2 + $0xc] sm:$0xf] %vm468, %v1350
      %1377 = vst.msk [vmem:[#allocation2 + $0x10] sm:$0xf] %vm468, %v1351
      %1378 = vst.msk [vmem:[#allocation2 + $0x14] sm:$0xf] %vm468, %v1352
      %1379 = vst.msk [vmem:[#allocation2 + $0x18] sm:$0xf] %vm468, %v1353
      %1380 = vst.msk [vmem:[#allocation2 + $0x1c] sm:$0xf] %vm468, %v1354
      %1381 = vst.msk [vmem:[#allocation2 + $0x20] sm:$0xf] %vm468, %v1355
      %1382 = vst.msk [vmem:[#allocation2 + $0x24] sm:$0xf] %vm468, %v1356
      %1383 = vst.msk [vmem:[#allocation2 + $0x28] sm:$0xf] %vm468, %v1357
      %1384 = vst.msk [vmem:[#allocation2 + $0x2c] sm:$0xf] %vm468, %v1358
      %1385 = vst.msk [vmem:[#allocation2 + $0x30] sm:$0xf] %vm468, %v1359
      %1386 = vst.msk [vmem:[#allocation2 + $0x34] sm:$0xf] %vm468, %v1360
      %1387 = vst.msk [vmem:[#allocation2 + $0x38] sm:$0xf] %vm468, %v1361
      %1388 = vst.msk [vmem:[#allocation2 + $0x3c] sm:$0xf] %vm468, %v1362
      %1389 = vst.msk [vmem:[#allocation2 + $0x40] sm:$0xf] %vm468, %v1363
      %1390 = vst.msk [vmem:[#allocation2 + $0x44] sm:$0xf] %vm468, %v1364
      %1391 = vst.msk [vmem:[#allocation2 + $0x48] sm:$0xf] %vm468, %v1365
      %1392 = vst.msk [vmem:[#allocation2 + $0x4c] sm:$0xf] %vm468, %v1366
      %1393 = vst.msk [vmem:[#allocation2 + $0x50] sm:$0xf] %vm468, %v1367
      %1394 = vst.msk [vmem:[#allocation2 + $0x54] sm:$0xf] %vm468, %v1368
      %1395 = vst.msk [vmem:[#allocation2 + $0x58] sm:$0xf] %vm468, %v1369
      %1396 = vst.msk [vmem:[#allocation2 + $0x5c] sm:$0xf] %vm468, %v1370
      %1397 = vst.msk [vmem:[#allocation2 + $0x60] sm:$0xf] %vm468, %v1371
      %1398 = vst.msk [vmem:[#allocation2 + $0x64] sm:$0xf] %vm468, %v1372
      %v1399 = vld [vmem:[#allocation2] sm:$0xf]
      %v1400 = vld [vmem:[#allocation2 + $0x4] sm:$0xf]
      %v1401 = vld [vmem:[#allocation2 + $0x8] sm:$0xf]
      %v1402 = vld [vmem:[#allocation2 + $0xc] sm:$0xf]
      %v1403 = vld [vmem:[#allocation2 + $0x10] sm:$0xf]
      %v1404 = vld [vmem:[#allocation2 + $0x14] sm:$0xf]
      %v1405 = vld [vmem:[#allocation2 + $0x18] sm:$0xf]
      %v1406 = vld [vmem:[#allocation2 + $0x1c] sm:$0xf]
      %v1407 = vld [vmem:[#allocation2 + $0x20] sm:$0xf]
      %v1408 = vld [vmem:[#allocation2 + $0x24] sm:$0xf]
      %v1409 = vld [vmem:[#allocation2 + $0x28] sm:$0xf]
      %v1410 = vld [vmem:[#allocation2 + $0x2c] sm:$0xf]
      %v1411 = vld [vmem:[#allocation2 + $0x30] sm:$0xf]
      %v1412 = vld [vmem:[#allocation2 + $0x34] sm:$0xf]
      %v1413 = vld [vmem:[#allocation2 + $0x38] sm:$0xf]
      %v1414 = vld [vmem:[#allocation2 + $0x3c] sm:$0xf]
      %v1415 = vld [vmem:[#allocation2 + $0x40] sm:$0xf]
      %v1416 = vld [vmem:[#allocation2 + $0x44] sm:$0xf]
      %v1417 = vld [vmem:[#allocation2 + $0x48] sm:$0xf]
      %v1418 = vld [vmem:[#allocation2 + $0x4c] sm:$0xf]
      %v1419 = vld [vmem:[%s2] sm:$0xf]
      %v1420 = vld [vmem:[%s2 + $0x4] sm:$0xf]
      %v1421 = vld [vmem:[%s2 + $0x8] sm:$0xf]
      %v1422 = vld [vmem:[%s2 + $0xc] sm:$0xf]
      %v1423 = vld [vmem:[%s2 + $0x10] sm:$0xf]
      %v1424 = vld [vmem:[%s2 + $0x14] sm:$0xf]
      %v1425 = vld [vmem:[%s2 + $0x18] sm:$0x3]
      %v1426 = vld [vmem:[#allocation2 + $0x50] sm:$0xf]
      %v1427 = vld [vmem:[#allocation2 + $0x54] sm:$0xf]
      %s1428 = scalar_lea.vmem %s2, 28
      %v1429 = vld [vmem:[%s1428] sm:$0xf]
      %v1430 = vld [vmem:[%s1428 + $0x4] sm:$0xf]
      %v1431 = vld [vmem:[%s1428 + $0x8] sm:$0xf]
      %v1432 = vld [vmem:[%s1428 + $0xc] sm:$0xf]
      %v1433 = vld [vmem:[%s1428 + $0x10] sm:$0xf]
      %v1434 = vld [vmem:[%s1428 + $0x14] sm:$0xf]
      %v1435 = vld [vmem:[%s1428 + $0x18] sm:$0x3]
      %v1456 = vunpack.c.l.b16 %v1401
      %v1457 = vunpack.c.l.b16 %v1402
      %v1458 = vunpack.c.l.b16 %v1403
      %v1459 = vunpack.c.l.b16 %v1404
      %v1460 = vunpack.c.l.b16 %v1405
      %v1461 = vunpack.c.l.b16 %v1406
      %v1462 = vunpack.c.l.b16 %v1407
      %v1463 = vunpack.c.l.b16 %v1408
      %v1464 = vunpack.c.l.b16 %v1409
      %v1465 = vunpack.c.l.b16 %v1410
      %v1466 = vunpack.c.l.b16 %v1411
      %v1467 = vunpack.c.l.b16 %v1412
      %v1468 = vunpack.c.l.b16 %v1413
      %v1469 = vunpack.c.l.b16 %v1414
      %v1470 = vunpack.c.l.b16 %v1415
      %v1471 = vunpack.c.l.b16 %v1416
      %v1472 = vunpack.c.l.b16 %v1417
      %v1473 = vunpack.c.l.b16 %v1418
      %v1474 = vunpack.c.l.b16 %v1426
      %v1475 = vunpack.c.l.b16 %v1427
      %v1476 = vpack.c.b16 %v1457, %v1456
      %v1477 = vpack.c.b16 %v1459, %v1458
      %v1478 = vpack.c.b16 %v1461, %v1460
      %v1479 = vpack.c.b16 %v1463, %v1462
      %v1480 = vpack.c.b16 %v1465, %v1464
      %v1481 = vpack.c.b16 %v1467, %v1466
      %v1482 = vpack.c.b16 %v1469, %v1468
      %v1483 = vpack.c.b16 %v1471, %v1470
      %v1484 = vpack.c.b16 %v1473, %v1472
      %v1485 = vpack.c.b16 %v1475, %v1474
      %v1493 = vunpack.c.l.b16 %v1429
      %v1494 = vunpack.c.l.b16 %v1430
      %v1495 = vunpack.c.l.b16 %v1431
      %v1496 = vunpack.c.l.b16 %v1432
      %v1497 = vunpack.c.l.b16 %v1433
      %v1498 = vunpack.c.l.b16 %v1434
      %v1499 = vunpack.c.l.b16 %v1435
      %v1500 = vpack.c.b16 %v1494, %v1493
      %v1501 = vpack.c.b16 %v1496, %v1495
      %v1502 = vpack.c.b16 %v1498, %v1497
      %v1503 = vpack.c.b16 %v1499, %v1499
      %vm1507 = vcmask 424960
      %v1509 = vsel %vm1507, %v1476, 0
      %v1512 = vsel %vm1507, %v1477, 0
      %v1515 = vsel %vm1507, %v1478, 0
      %v1518 = vsel %vm1507, %v1479, 0
      %v1521 = vsel %vm1507, %v1480, 0
      %v1524 = vsel %vm1507, %v1481, 0
      %v1527 = vsel %vm1507, %v1482, 0
      %v1530 = vsel %vm1507, %v1483, 0
      %v1533 = vsel %vm1507, %v1484, 0
      %v1536 = vsel %vm1507, %v1485, 0
      %vm1538 = vcmask 1041408
      %v1540 = vsel %vm1538, %v1503, 0
      %1542 = vmatpush.bf16.msra.mxu0 0
      %1543 = vmatpush.bf16.msra.mxu0 0
      %1544 = vmatpush.bf16.msra.mxu0 0
      %1545 = vmatpush.bf16.msra.mxu0 0
      %1546 = vmatpush.bf16.msra.mxu0 %v1540
      %1547 = vmatpush.bf16.msra.mxu0 %v1502
      %1548 = vmatpush.bf16.msra.mxu0 %v1501
      %1549 = vmatpush.bf16.msra.mxu0 %v1500
      %1550 = vmatmul.bf16.gmra.mxu0 %v1509
      %v1551 = vpop.f32.mrf.mxu0
      %v1552 = vadd.f32 0.0, %v1551
      %v1553 = vpop.f32.mrf.mxu0
      %v1554 = vadd.f32 0.0, %v1553
      %1555 = vmatmul.bf16.gmra.mxu0 %v1512
      %v1556 = vpop.f32.mrf.mxu0
      %v1557 = vadd.f32 0.0, %v1556
      %v1558 = vpop.f32.mrf.mxu0
      %v1559 = vadd.f32 0.0, %v1558
      %1560 = vmatmul.bf16.gmra.mxu0 %v1515
      %v1561 = vpop.f32.mrf.mxu0
      %v1562 = vadd.f32 0.0, %v1561
      %v1563 = vpop.f32.mrf.mxu0
      %v1564 = vadd.f32 0.0, %v1563
      %1565 = vmatmul.bf16.gmra.mxu0 %v1518
      %v1566 = vpop.f32.mrf.mxu0
      %v1567 = vadd.f32 0.0, %v1566
      %v1568 = vpop.f32.mrf.mxu0
      %v1569 = vadd.f32 0.0, %v1568
      %1570 = vmatmul.bf16.gmra.mxu0 %v1521
      %v1571 = vpop.f32.mrf.mxu0
      %v1572 = vadd.f32 0.0, %v1571
      %v1573 = vpop.f32.mrf.mxu0
      %v1574 = vadd.f32 0.0, %v1573
      %1575 = vmatmul.bf16.gmra.mxu0 %v1524
      %v1576 = vpop.f32.mrf.mxu0
      %v1577 = vadd.f32 0.0, %v1576
      %v1578 = vpop.f32.mrf.mxu0
      %v1579 = vadd.f32 0.0, %v1578
      %1580 = vmatmul.bf16.gmra.mxu0 %v1527
      %v1581 = vpop.f32.mrf.mxu0
      %v1582 = vadd.f32 0.0, %v1581
      %v1583 = vpop.f32.mrf.mxu0
      %v1584 = vadd.f32 0.0, %v1583
      %1585 = vmatmul.bf16.gmra.mxu0 %v1530
      %v1586 = vpop.f32.mrf.mxu0
      %v1587 = vadd.f32 0.0, %v1586
      %v1588 = vpop.f32.mrf.mxu0
      %v1589 = vadd.f32 0.0, %v1588
      %1590 = vmatmul.bf16.gmra.mxu0 %v1533
      %v1591 = vpop.f32.mrf.mxu0
      %v1592 = vadd.f32 0.0, %v1591
      %v1593 = vpop.f32.mrf.mxu0
      %v1594 = vadd.f32 0.0, %v1593
      %1595 = vmatmul.bf16.gmra.mxu0 %v1536
      %v1596 = vpop.f32.mrf.mxu0
      %v1597 = vadd.f32 0.0, %v1596
      %v1598 = vpop.f32.mrf.mxu0
      %v1599 = vadd.f32 0.0, %v1598
      %1600 = vdwg.mxu0
      %v1603 = vunpack.c.l.b16 %v1399
      %v1604 = vunpack.c.l.b16 %v1400
      %v1605 = vpack.c.b16 %v1604, %v1603
      %v1613 = vunpack.c.l.b16 %v1419
      %v1614 = vunpack.c.l.b16 %v1420
      %v1615 = vunpack.c.l.b16 %v1421
      %v1616 = vunpack.c.l.b16 %v1422
      %v1617 = vunpack.c.l.b16 %v1423
      %v1618 = vunpack.c.l.b16 %v1424
      %v1619 = vunpack.c.l.b16 %v1425
      %v1620 = vpack.c.b16 %v1614, %v1613
      %v1621 = vpack.c.b16 %v1616, %v1615
      %v1622 = vpack.c.b16 %v1618, %v1617
      %v1623 = vpack.c.b16 %v1619, %v1619
      %v1628 = vsel %vm1507, %v1605, 0
      %v1631 = vsel %vm1538, %v1623, 0
      %1633 = vmatpush.bf16.msra.mxu0 0
      %1634 = vmatpush.bf16.msra.mxu0 0
      %1635 = vmatpush.bf16.msra.mxu0 0
      %1636 = vmatpush.bf16.msra.mxu0 0
      %1637 = vmatpush.bf16.msra.mxu0 %v1631
      %1638 = vmatpush.bf16.msra.mxu0 %v1622
      %1639 = vmatpush.bf16.msra.mxu0 %v1621
      %1640 = vmatpush.bf16.msra.mxu0 %v1620
      %1641 = vmatmul.bf16.gmra.mxu0 %v1628
      %v1642 = vpop.f32.mrf.mxu0
      %v1643 = vadd.f32 %v1552, %v1642
      %v1644 = vpop.f32.mrf.mxu0
      %v1645 = vadd.f32 %v1554, %v1644
      %1646 = vmatmul.bf16.gmra.mxu0 %v1509
      %v1647 = vpop.f32.mrf.mxu0
      %v1648 = vadd.f32 %v1557, %v1647
      %v1649 = vpop.f32.mrf.mxu0
      %v1650 = vadd.f32 %v1559, %v1649
      %1651 = vmatmul.bf16.gmra.mxu0 %v1512
      %v1652 = vpop.f32.mrf.mxu0
      %v1653 = vadd.f32 %v1562, %v1652
      %v1654 = vpop.f32.mrf.mxu0
      %v1655 = vadd.f32 %v1564, %v1654
      %1656 = vmatmul.bf16.gmra.mxu0 %v1515
      %v1657 = vpop.f32.mrf.mxu0
      %v1658 = vadd.f32 %v1567, %v1657
      %v1659 = vpop.f32.mrf.mxu0
      %v1660 = vadd.f32 %v1569, %v1659
      %1661 = vmatmul.bf16.gmra.mxu0 %v1518
      %v1662 = vpop.f32.mrf.mxu0
      %v1663 = vadd.f32 %v1572, %v1662
      %v1664 = vpop.f32.mrf.mxu0
      %v1665 = vadd.f32 %v1574, %v1664
      %1666 = vmatmul.bf16.gmra.mxu0 %v1521
      %v1667 = vpop.f32.mrf.mxu0
      %v1668 = vadd.f32 %v1577, %v1667
      %v1669 = vpop.f32.mrf.mxu0
      %v1670 = vadd.f32 %v1579, %v1669
      %1671 = vmatmul.bf16.gmra.mxu0 %v1524
      %v1672 = vpop.f32.mrf.mxu0
      %v1673 = vadd.f32 %v1582, %v1672
      %v1674 = vpop.f32.mrf.mxu0
      %v1675 = vadd.f32 %v1584, %v1674
      %1676 = vmatmul.bf16.gmra.mxu0 %v1527
      %v1677 = vpop.f32.mrf.mxu0
      %v1678 = vadd.f32 %v1587, %v1677
      %v1679 = vpop.f32.mrf.mxu0
      %v1680 = vadd.f32 %v1589, %v1679
      %1681 = vmatmul.bf16.gmra.mxu0 %v1530
      %v1682 = vpop.f32.mrf.mxu0
      %v1683 = vadd.f32 %v1592, %v1682
      %v1684 = vpop.f32.mrf.mxu0
      %v1685 = vadd.f32 %v1594, %v1684
      %1686 = vmatmul.bf16.gmra.mxu0 %v1533
      %v1687 = vpop.f32.mrf.mxu0
      %v1688 = vadd.f32 %v1597, %v1687
      %v1689 = vpop.f32.mrf.mxu0
      %v1690 = vadd.f32 %v1599, %v1689
      %1691 = vdwg.mxu0
      %v1692 = vld [vmem:[#allocation2 + $0x10] sm:$0xf]
      %v1693 = vld [vmem:[#allocation2 + $0x14] sm:$0xf]
      %v1694 = vld [vmem:[#allocation2 + $0x18] sm:$0xf]
      %v1695 = vld [vmem:[#allocation2 + $0x1c] sm:$0xf]
      %v1696 = vld [vmem:[#allocation2 + $0x20] sm:$0xf]
      %v1697 = vld [vmem:[#allocation2 + $0x24] sm:$0xf]
      %v1698 = vld [vmem:[#allocation2 + $0x28] sm:$0xf]
      %v1699 = vld [vmem:[#allocation2 + $0x2c] sm:$0xf]
      %v1700 = vld [vmem:[#allocation2 + $0x30] sm:$0xf]
      %v1701 = vld [vmem:[#allocation2 + $0x34] sm:$0xf]
      %v1702 = vld [vmem:[#allocation2 + $0x38] sm:$0xf]
      %v1703 = vld [vmem:[#allocation2 + $0x3c] sm:$0xf]
      %v1704 = vld [vmem:[#allocation2 + $0x40] sm:$0xf]
      %v1705 = vld [vmem:[#allocation2 + $0x44] sm:$0xf]
      %v1706 = vld [vmem:[#allocation2 + $0x48] sm:$0xf]
      %v1707 = vld [vmem:[#allocation2 + $0x4c] sm:$0xf]
      %v1708 = vld [vmem:[#allocation2 + $0x50] sm:$0xf]
      %v1709 = vld [vmem:[#allocation2 + $0x54] sm:$0xf]
      %v1710 = vld [vmem:[#allocation2 + $0x58] sm:$0xf]
      %v1711 = vld [vmem:[#allocation2 + $0x5c] sm:$0xf]
      %s1712 = scalar_lea.vmem %s2, 56
      %v1713 = vld [vmem:[%s1712] sm:$0xf]
      %v1714 = vld [vmem:[%s1712 + $0x4] sm:$0xf]
      %v1715 = vld [vmem:[%s1712 + $0x8] sm:$0xf]
      %v1716 = vld [vmem:[%s1712 + $0xc] sm:$0xf]
      %v1717 = vld [vmem:[%s1712 + $0x10] sm:$0xf]
      %v1718 = vld [vmem:[%s1712 + $0x14] sm:$0xf]
      %v1719 = vld [vmem:[%s1712 + $0x18] sm:$0x3]
      %v1740 = vunpack.c.l.b16 %v1692
      %v1741 = vunpack.c.l.b16 %v1693
      %v1742 = vunpack.c.l.b16 %v1694
      %v1743 = vunpack.c.l.b16 %v1695
      %v1744 = vunpack.c.l.b16 %v1696
      %v1745 = vunpack.c.l.b16 %v1697
      %v1746 = vunpack.c.l.b16 %v1698
      %v1747 = vunpack.c.l.b16 %v1699
      %v1748 = vunpack.c.l.b16 %v1700
      %v1749 = vunpack.c.l.b16 %v1701
      %v1750 = vunpack.c.l.b16 %v1702
      %v1751 = vunpack.c.l.b16 %v1703
      %v1752 = vunpack.c.l.b16 %v1704
      %v1753 = vunpack.c.l.b16 %v1705
      %v1754 = vunpack.c.l.b16 %v1706
      %v1755 = vunpack.c.l.b16 %v1707
      %v1756 = vunpack.c.l.b16 %v1708
      %v1757 = vunpack.c.l.b16 %v1709
      %v1758 = vunpack.c.l.b16 %v1710
      %v1759 = vunpack.c.l.b16 %v1711
      %v1760 = vpack.c.b16 %v1741, %v1740
      %v1761 = vpack.c.b16 %v1743, %v1742
      %v1762 = vpack.c.b16 %v1745, %v1744
      %v1763 = vpack.c.b16 %v1747, %v1746
      %v1764 = vpack.c.b16 %v1749, %v1748
      %v1765 = vpack.c.b16 %v1751, %v1750
      %v1766 = vpack.c.b16 %v1753, %v1752
      %v1767 = vpack.c.b16 %v1755, %v1754
      %v1768 = vpack.c.b16 %v1757, %v1756
      %v1769 = vpack.c.b16 %v1759, %v1758
      %v1777 = vunpack.c.l.b16 %v1713
      %v1778 = vunpack.c.l.b16 %v1714
      %v1779 = vunpack.c.l.b16 %v1715
      %v1780 = vunpack.c.l.b16 %v1716
      %v1781 = vunpack.c.l.b16 %v1717
      %v1782 = vunpack.c.l.b16 %v1718
      %v1783 = vunpack.c.l.b16 %v1719
      %v1784 = vpack.c.b16 %v1778, %v1777
      %v1785 = vpack.c.b16 %v1780, %v1779
      %v1786 = vpack.c.b16 %v1782, %v1781
      %v1787 = vpack.c.b16 %v1783, %v1783
      %v1792 = vsel %vm1507, %v1760, 0
      %v1795 = vsel %vm1507, %v1761, 0
      %v1798 = vsel %vm1507, %v1762, 0
      %v1801 = vsel %vm1507, %v1763, 0
      %v1804 = vsel %vm1507, %v1764, 0
      %v1807 = vsel %vm1507, %v1765, 0
      %v1810 = vsel %vm1507, %v1766, 0
      %v1813 = vsel %vm1507, %v1767, 0
      %v1816 = vsel %vm1507, %v1768, 0
      %v1819 = vsel %vm1507, %v1769, 0
      %v1822 = vsel %vm1538, %v1787, 0
      %1824 = vmatpush.bf16.msra.mxu0 0
      %1825 = vmatpush.bf16.msra.mxu0 0
      %1826 = vmatpush.bf16.msra.mxu0 0
      %1827 = vmatpush.bf16.msra.mxu0 0
      %1828 = vmatpush.bf16.msra.mxu0 %v1822
      %1829 = vmatpush.bf16.msra.mxu0 %v1786
      %1830 = vmatpush.bf16.msra.mxu0 %v1785
      %1831 = vmatpush.bf16.msra.mxu0 %v1784
      %1832 = vmatmul.bf16.gmra.mxu0 %v1792
      %v1833 = vpop.f32.mrf.mxu0
      %v1834 = vadd.f32 0.0, %v1833
      %v1835 = vpop.f32.mrf.mxu0
      %v1836 = vadd.f32 0.0, %v1835
      %1837 = vmatmul.bf16.gmra.mxu0 %v1795
      %v1838 = vpop.f32.mrf.mxu0
      %v1839 = vadd.f32 0.0, %v1838
      %v1840 = vpop.f32.mrf.mxu0
      %v1841 = vadd.f32 0.0, %v1840
      %1842 = vmatmul.bf16.gmra.mxu0 %v1798
      %v1843 = vpop.f32.mrf.mxu0
      %v1844 = vadd.f32 0.0, %v1843
      %v1845 = vpop.f32.mrf.mxu0
      %v1846 = vadd.f32 0.0, %v1845
      %1847 = vmatmul.bf16.gmra.mxu0 %v1801
      %v1848 = vpop.f32.mrf.mxu0
      %v1849 = vadd.f32 0.0, %v1848
      %v1850 = vpop.f32.mrf.mxu0
      %v1851 = vadd.f32 0.0, %v1850
      %1852 = vmatmul.bf16.gmra.mxu0 %v1804
      %v1853 = vpop.f32.mrf.mxu0
      %v1854 = vadd.f32 0.0, %v1853
      %v1855 = vpop.f32.mrf.mxu0
      %v1856 = vadd.f32 0.0, %v1855
      %1857 = vmatmul.bf16.gmra.mxu0 %v1807
      %v1858 = vpop.f32.mrf.mxu0
      %v1859 = vadd.f32 0.0, %v1858
      %v1860 = vpop.f32.mrf.mxu0
      %v1861 = vadd.f32 0.0, %v1860
      %1862 = vmatmul.bf16.gmra.mxu0 %v1810
      %v1863 = vpop.f32.mrf.mxu0
      %v1864 = vadd.f32 0.0, %v1863
      %v1865 = vpop.f32.mrf.mxu0
      %v1866 = vadd.f32 0.0, %v1865
      %1867 = vmatmul.bf16.gmra.mxu0 %v1813
      %v1868 = vpop.f32.mrf.mxu0
      %v1869 = vadd.f32 0.0, %v1868
      %v1870 = vpop.f32.mrf.mxu0
      %v1871 = vadd.f32 0.0, %v1870
      %1872 = vmatmul.bf16.gmra.mxu0 %v1816
      %v1873 = vpop.f32.mrf.mxu0
      %v1874 = vadd.f32 0.0, %v1873
      %v1875 = vpop.f32.mrf.mxu0
      %v1876 = vadd.f32 0.0, %v1875
      %1877 = vmatmul.bf16.gmra.mxu0 %v1819
      %v1878 = vpop.f32.mrf.mxu0
      %v1879 = vadd.f32 0.0, %v1878
      %v1880 = vpop.f32.mrf.mxu0
      %v1881 = vadd.f32 0.0, %v1880
      %1882 = vdwg.mxu0
      %v1883 = vadd.f32 %v1643, %v1834
      %v1884 = vadd.f32 %v1645, %v1836
      %v1885 = vadd.f32 %v1648, %v1839
      %v1886 = vadd.f32 %v1650, %v1841
      %v1887 = vadd.f32 %v1653, %v1844
      %v1888 = vadd.f32 %v1655, %v1846
      %v1889 = vadd.f32 %v1658, %v1849
      %v1890 = vadd.f32 %v1660, %v1851
      %v1891 = vadd.f32 %v1663, %v1854
      %v1892 = vadd.f32 %v1665, %v1856
      %v1893 = vadd.f32 %v1668, %v1859
      %v1894 = vadd.f32 %v1670, %v1861
      %v1895 = vadd.f32 %v1673, %v1864
      %v1896 = vadd.f32 %v1675, %v1866
      %v1897 = vadd.f32 %v1678, %v1869
      %v1898 = vadd.f32 %v1680, %v1871
      %v1899 = vadd.f32 %v1683, %v1874
      %v1900 = vadd.f32 %v1685, %v1876
      %v1901 = vadd.f32 %v1688, %v1879
      %v1902 = vadd.f32 %v1690, %v1881
      %v1903 = vld [vmem:[#allocation2 + $0x18] sm:$0xf]
      %v1904 = vld [vmem:[#allocation2 + $0x1c] sm:$0xf]
      %v1905 = vld [vmem:[#allocation2 + $0x20] sm:$0xf]
      %v1906 = vld [vmem:[#allocation2 + $0x24] sm:$0xf]
      %v1907 = vld [vmem:[#allocation2 + $0x28] sm:$0xf]
      %v1908 = vld [vmem:[#allocation2 + $0x2c] sm:$0xf]
      %v1909 = vld [vmem:[#allocation2 + $0x30] sm:$0xf]
      %v1910 = vld [vmem:[#allocation2 + $0x34] sm:$0xf]
      %v1911 = vld [vmem:[#allocation2 + $0x38] sm:$0xf]
      %v1912 = vld [vmem:[#allocation2 + $0x3c] sm:$0xf]
      %v1913 = vld [vmem:[#allocation2 + $0x40] sm:$0xf]
      %v1914 = vld [vmem:[#allocation2 + $0x44] sm:$0xf]
      %v1915 = vld [vmem:[#allocation2 + $0x48] sm:$0xf]
      %v1916 = vld [vmem:[#allocation2 + $0x4c] sm:$0xf]
      %v1917 = vld [vmem:[#allocation2 + $0x50] sm:$0xf]
      %v1918 = vld [vmem:[#allocation2 + $0x54] sm:$0xf]
      %v1919 = vld [vmem:[#allocation2 + $0x58] sm:$0xf]
      %v1920 = vld [vmem:[#allocation2 + $0x5c] sm:$0xf]
      %v1921 = vld [vmem:[#allocation2 + $0x60] sm:$0xf]
      %v1922 = vld [vmem:[#allocation2 + $0x64] sm:$0xf]
      %s1923 = scalar_lea.vmem %s2, 84
      %v1924 = vld [vmem:[%s1923] sm:$0xf]
      %v1925 = vld [vmem:[%s1923 + $0x4] sm:$0xf]
      %v1926 = vld [vmem:[%s1923 + $0x8] sm:$0xf]
      %v1927 = vld [vmem:[%s1923 + $0xc] sm:$0xf]
      %v1928 = vld [vmem:[%s1923 + $0x10] sm:$0xf]
      %v1929 = vld [vmem:[%s1923 + $0x14] sm:$0xf]
      %v1930 = vld [vmem:[%s1923 + $0x18] sm:$0x3]
      %v1951 = vunpack.c.l.b16 %v1903
      %v1952 = vunpack.c.l.b16 %v1904
      %v1953 = vunpack.c.l.b16 %v1905
      %v1954 = vunpack.c.l.b16 %v1906
      %v1955 = vunpack.c.l.b16 %v1907
      %v1956 = vunpack.c.l.b16 %v1908
      %v1957 = vunpack.c.l.b16 %v1909
      %v1958 = vunpack.c.l.b16 %v1910
      %v1959 = vunpack.c.l.b16 %v1911
      %v1960 = vunpack.c.l.b16 %v1912
      %v1961 = vunpack.c.l.b16 %v1913
      %v1962 = vunpack.c.l.b16 %v1914
      %v1963 = vunpack.c.l.b16 %v1915
      %v1964 = vunpack.c.l.b16 %v1916
      %v1965 = vunpack.c.l.b16 %v1917
      %v1966 = vunpack.c.l.b16 %v1918
      %v1967 = vunpack.c.l.b16 %v1919
      %v1968 = vunpack.c.l.b16 %v1920
      %v1969 = vunpack.c.l.b16 %v1921
      %v1970 = vunpack.c.l.b16 %v1922
      %v1971 = vpack.c.b16 %v1952, %v1951
      %v1972 = vpack.c.b16 %v1954, %v1953
      %v1973 = vpack.c.b16 %v1956, %v1955
      %v1974 = vpack.c.b16 %v1958, %v1957
      %v1975 = vpack.c.b16 %v1960, %v1959
      %v1976 = vpack.c.b16 %v1962, %v1961
      %v1977 = vpack.c.b16 %v1964, %v1963
      %v1978 = vpack.c.b16 %v1966, %v1965
      %v1979 = vpack.c.b16 %v1968, %v1967
      %v1980 = vpack.c.b16 %v1970, %v1969
      %v1988 = vunpack.c.l.b16 %v1924
      %v1989 = vunpack.c.l.b16 %v1925
      %v1990 = vunpack.c.l.b16 %v1926
      %v1991 = vunpack.c.l.b16 %v1927
      %v1992 = vunpack.c.l.b16 %v1928
      %v1993 = vunpack.c.l.b16 %v1929
      %v1994 = vunpack.c.l.b16 %v1930
      %v1995 = vpack.c.b16 %v1989, %v1988
      %v1996 = vpack.c.b16 %v1991, %v1990
      %v1997 = vpack.c.b16 %v1993, %v1992
      %v1998 = vpack.c.b16 %v1994, %v1994
      %v2003 = vsel %vm1507, %v1971, 0
      %v2006 = vsel %vm1507, %v1972, 0
      %v2009 = vsel %vm1507, %v1973, 0
      %v2012 = vsel %vm1507, %v1974, 0
      %v2015 = vsel %vm1507, %v1975, 0
      %v2018 = vsel %vm1507, %v1976, 0
      %v2021 = vsel %vm1507, %v1977, 0
      %v2024 = vsel %vm1507, %v1978, 0
      %v2027 = vsel %vm1507, %v1979, 0
      %v2030 = vsel %vm1507, %v1980, 0
      %v2033 = vsel %vm1538, %v1998, 0
      %2035 = vmatpush.bf16.msra.mxu0 0
      %2036 = vmatpush.bf16.msra.mxu0 0
      %2037 = vmatpush.bf16.msra.mxu0 0
      %2038 = vmatpush.bf16.msra.mxu0 0
      %2039 = vmatpush.bf16.msra.mxu0 %v2033
      %2040 = vmatpush.bf16.msra.mxu0 %v1997
      %2041 = vmatpush.bf16.msra.mxu0 %v1996
      %2042 = vmatpush.bf16.msra.mxu0 %v1995
      %2043 = vmatmul.bf16.gmra.mxu0 %v2003
      %v2044 = vpop.f32.mrf.mxu0
      %v2045 = vadd.f32 0.0, %v2044
      %v2046 = vpop.f32.mrf.mxu0
      %v2047 = vadd.f32 0.0, %v2046
      %2048 = vmatmul.bf16.gmra.mxu0 %v2006
      %v2049 = vpop.f32.mrf.mxu0
      %v2050 = vadd.f32 0.0, %v2049
      %v2051 = vpop.f32.mrf.mxu0
      %v2052 = vadd.f32 0.0, %v2051
      %2053 = vmatmul.bf16.gmra.mxu0 %v2009
      %v2054 = vpop.f32.mrf.mxu0
      %v2055 = vadd.f32 0.0, %v2054
      %v2056 = vpop.f32.mrf.mxu0
      %v2057 = vadd.f32 0.0, %v2056
      %2058 = vmatmul.bf16.gmra.mxu0 %v2012
      %v2059 = vpop.f32.mrf.mxu0
      %v2060 = vadd.f32 0.0, %v2059
      %v2061 = vpop.f32.mrf.mxu0
      %v2062 = vadd.f32 0.0, %v2061
      %2063 = vmatmul.bf16.gmra.mxu0 %v2015
      %v2064 = vpop.f32.mrf.mxu0
      %v2065 = vadd.f32 0.0, %v2064
      %v2066 = vpop.f32.mrf.mxu0
      %v2067 = vadd.f32 0.0, %v2066
      %2068 = vmatmul.bf16.gmra.mxu0 %v2018
      %v2069 = vpop.f32.mrf.mxu0
      %v2070 = vadd.f32 0.0, %v2069
      %v2071 = vpop.f32.mrf.mxu0
      %v2072 = vadd.f32 0.0, %v2071
      %2073 = vmatmul.bf16.gmra.mxu0 %v2021
      %v2074 = vpop.f32.mrf.mxu0
      %v2075 = vadd.f32 0.0, %v2074
      %v2076 = vpop.f32.mrf.mxu0
      %v2077 = vadd.f32 0.0, %v2076
      %2078 = vmatmul.bf16.gmra.mxu0 %v2024
      %v2079 = vpop.f32.mrf.mxu0
      %v2080 = vadd.f32 0.0, %v2079
      %v2081 = vpop.f32.mrf.mxu0
      %v2082 = vadd.f32 0.0, %v2081
      %2083 = vmatmul.bf16.gmra.mxu0 %v2027
      %v2084 = vpop.f32.mrf.mxu0
      %v2085 = vadd.f32 0.0, %v2084
      %v2086 = vpop.f32.mrf.mxu0
      %v2087 = vadd.f32 0.0, %v2086
      %2088 = vmatmul.bf16.gmra.mxu0 %v2030
      %v2089 = vpop.f32.mrf.mxu0
      %v2090 = vadd.f32 0.0, %v2089
      %v2091 = vpop.f32.mrf.mxu0
      %v2092 = vadd.f32 0.0, %v2091
      %2093 = vdwg.mxu0
      %v2094 = vadd.f32 %v1883, %v2045
      %v2095 = vadd.f32 %v1884, %v2047
      %v2096 = vadd.f32 %v1885, %v2050
      %v2097 = vadd.f32 %v1886, %v2052
      %v2098 = vadd.f32 %v1887, %v2055
      %v2099 = vadd.f32 %v1888, %v2057
      %v2100 = vadd.f32 %v1889, %v2060
      %v2101 = vadd.f32 %v1890, %v2062
      %v2102 = vadd.f32 %v1891, %v2065
      %v2103 = vadd.f32 %v1892, %v2067
      %v2104 = vadd.f32 %v1893, %v2070
      %v2105 = vadd.f32 %v1894, %v2072
      %v2106 = vadd.f32 %v1895, %v2075
      %v2107 = vadd.f32 %v1896, %v2077
      %v2108 = vadd.f32 %v1897, %v2080
      %v2109 = vadd.f32 %v1898, %v2082
      %v2110 = vadd.f32 %v1899, %v2085
      %v2111 = vadd.f32 %v1900, %v2087
      %v2112 = vadd.f32 %v1901, %v2090
      %v2113 = vadd.f32 %v1902, %v2092
      %v2114 = vld [vmem:[%s8] sm:$0x1]
      %v2116 = vperm.slane %v2114, 0
      %v2118 = vadd.f32 %v2094, %v2116
      %v2119 = vadd.f32 %v2095, %v2116
      %v2120 = vadd.f32 %v2096, %v2116
      %v2121 = vadd.f32 %v2097, %v2116
      %v2122 = vadd.f32 %v2098, %v2116
      %v2123 = vadd.f32 %v2099, %v2116
      %v2124 = vadd.f32 %v2100, %v2116
      %v2125 = vadd.f32 %v2101, %v2116
      %v2126 = vadd.f32 %v2102, %v2116
      %v2127 = vadd.f32 %v2103, %v2116
      %v2128 = vadd.f32 %v2104, %v2116
      %v2129 = vadd.f32 %v2105, %v2116
      %v2130 = vadd.f32 %v2106, %v2116
      %v2131 = vadd.f32 %v2107, %v2116
      %v2132 = vadd.f32 %v2108, %v2116
      %v2133 = vadd.f32 %v2109, %v2116
      %v2134 = vadd.f32 %v2110, %v2116
      %v2135 = vadd.f32 %v2111, %v2116
      %v2136 = vadd.f32 %v2112, %v2116
      %v2137 = vadd.f32 %v2113, %v2116
      %v2138 = vmul.f32 %v2118, 0.01
      %v2139 = vmul.f32 %v2119, 0.01
      %v2140 = vmul.f32 %v2120, 0.01
      %v2141 = vmul.f32 %v2121, 0.01
      %v2142 = vmul.f32 %v2122, 0.01
      %v2143 = vmul.f32 %v2123, 0.01
      %v2144 = vmul.f32 %v2124, 0.01
      %v2145 = vmul.f32 %v2125, 0.01
      %v2146 = vmul.f32 %v2126, 0.01
      %v2147 = vmul.f32 %v2127, 0.01
      %v2148 = vmul.f32 %v2128, 0.01
      %v2149 = vmul.f32 %v2129, 0.01
      %v2150 = vmul.f32 %v2130, 0.01
      %v2151 = vmul.f32 %v2131, 0.01
      %v2152 = vmul.f32 %v2132, 0.01
      %v2153 = vmul.f32 %v2133, 0.01
      %v2154 = vmul.f32 %v2134, 0.01
      %v2155 = vmul.f32 %v2135, 0.01
      %v2156 = vmul.f32 %v2136, 0.01
      %v2157 = vmul.f32 %v2137, 0.01
      %v2158 = vmax.f32 %v2118, %v2138
      %v2159 = vmax.f32 %v2119, %v2139
      %v2160 = vmax.f32 %v2120, %v2140
      %v2161 = vmax.f32 %v2121, %v2141
      %v2162 = vmax.f32 %v2122, %v2142
      %v2163 = vmax.f32 %v2123, %v2143
      %v2164 = vmax.f32 %v2124, %v2144
      %v2165 = vmax.f32 %v2125, %v2145
      %v2166 = vmax.f32 %v2126, %v2146
      %v2167 = vmax.f32 %v2127, %v2147
      %v2168 = vmax.f32 %v2128, %v2148
      %v2169 = vmax.f32 %v2129, %v2149
      %v2170 = vmax.f32 %v2130, %v2150
      %v2171 = vmax.f32 %v2131, %v2151
      %v2172 = vmax.f32 %v2132, %v2152
      %v2173 = vmax.f32 %v2133, %v2153
      %v2174 = vmax.f32 %v2134, %v2154
      %v2175 = vmax.f32 %v2135, %v2155
      %v2176 = vmax.f32 %v2136, %v2156
      %v2177 = vmax.f32 %v2137, %v2157
      %v2178 = vpack.c.bf16 %v2158, %v2158
      %v2179 = vpack.c.bf16 %v2159, %v2159
      %v2180 = vpack.c.bf16 %v2160, %v2160
      %v2181 = vpack.c.bf16 %v2161, %v2161
      %v2182 = vpack.c.bf16 %v2162, %v2162
      %v2183 = vpack.c.bf16 %v2163, %v2163
      %v2184 = vpack.c.bf16 %v2164, %v2164
      %v2185 = vpack.c.bf16 %v2165, %v2165
      %v2186 = vpack.c.bf16 %v2166, %v2166
      %v2187 = vpack.c.bf16 %v2167, %v2167
      %v2188 = vpack.c.bf16 %v2168, %v2168
      %v2189 = vpack.c.bf16 %v2169, %v2169
      %v2190 = vpack.c.bf16 %v2170, %v2170
      %v2191 = vpack.c.bf16 %v2171, %v2171
      %v2192 = vpack.c.bf16 %v2172, %v2172
      %v2193 = vpack.c.bf16 %v2173, %v2173
      %v2194 = vpack.c.bf16 %v2174, %v2174
      %v2195 = vpack.c.bf16 %v2175, %v2175
      %v2196 = vpack.c.bf16 %v2176, %v2176
      %v2197 = vpack.c.bf16 %v2177, %v2177
      %2198 = vst.msk [vmem:[#allocation3] sm:$0xf] %vm455, %v2178
      %2199 = vst.msk [vmem:[#allocation3 + $0x4] sm:$0xf] %vm455, %v2179
      %2200 = vst.msk [vmem:[#allocation3 + $0x8] sm:$0xf] %vm455, %v2180
      %2201 = vst.msk [vmem:[#allocation3 + $0xc] sm:$0xf] %vm455, %v2181
      %2202 = vst.msk [vmem:[#allocation3 + $0x10] sm:$0xf] %vm455, %v2182
      %2203 = vst.msk [vmem:[#allocation3 + $0x14] sm:$0xf] %vm455, %v2183
      %2204 = vst.msk [vmem:[#allocation3 + $0x18] sm:$0xf] %vm455, %v2184
      %2205 = vst.msk [vmem:[#allocation3 + $0x1c] sm:$0xf] %vm455, %v2185
      %2206 = vst.msk [vmem:[#allocation3 + $0x20] sm:$0xf] %vm455, %v2186
      %2207 = vst.msk [vmem:[#allocation3 + $0x24] sm:$0xf] %vm455, %v2187
      %2208 = vst.msk [vmem:[#allocation3 + $0x28] sm:$0xf] %vm455, %v2188
      %2209 = vst.msk [vmem:[#allocation3 + $0x2c] sm:$0xf] %vm455, %v2189
      %2210 = vst.msk [vmem:[#allocation3 + $0x30] sm:$0xf] %vm455, %v2190
      %2211 = vst.msk [vmem:[#allocation3 + $0x34] sm:$0xf] %vm455, %v2191
      %2212 = vst.msk [vmem:[#allocation3 + $0x38] sm:$0xf] %vm455, %v2192
      %2213 = vst.msk [vmem:[#allocation3 + $0x3c] sm:$0xf] %vm455, %v2193
      %2214 = vst.msk [vmem:[#allocation3 + $0x40] sm:$0xf] %vm455, %v2194
      %2215 = vst.msk [vmem:[#allocation3 + $0x44] sm:$0xf] %vm455, %v2195
      %2216 = vst.msk [vmem:[#allocation3 + $0x48] sm:$0xf] %vm455, %v2196
      %2217 = vst.msk [vmem:[#allocation3 + $0x4c] sm:$0xf] %vm455, %v2197
      %v2218 = vld [vmem:[#allocation3] sm:$0xf]
      %v2219 = vld [vmem:[#allocation3 + $0x4] sm:$0xf]
      %v2220 = vld [vmem:[#allocation3 + $0x8] sm:$0xf]
      %v2221 = vld [vmem:[#allocation3 + $0xc] sm:$0xf]
      %v2222 = vld [vmem:[#allocation3 + $0x10] sm:$0xf]
      %v2223 = vld [vmem:[#allocation3 + $0x14] sm:$0xf]
      %v2224 = vld [vmem:[#allocation3 + $0x18] sm:$0xf]
      %v2225 = vld [vmem:[#allocation3 + $0x1c] sm:$0xf]
      %v2226 = vld [vmem:[#allocation3 + $0x20] sm:$0xf]
      %v2227 = vld [vmem:[#allocation3 + $0x24] sm:$0xf]
      %v2228 = vld [vmem:[#allocation3 + $0x28] sm:$0xf]
      %v2229 = vld [vmem:[#allocation3 + $0x2c] sm:$0xf]
      %v2230 = vld [vmem:[#allocation3 + $0x30] sm:$0xf]
      %v2231 = vld [vmem:[#allocation3 + $0x34] sm:$0xf]
      %v2232 = vld [vmem:[%s3] sm:$0xf]
      %v2233 = vld [vmem:[%s3 + $0x4] sm:$0xf]
      %v2234 = vld [vmem:[%s3 + $0x8] sm:$0xf]
      %v2235 = vld [vmem:[%s3 + $0xc] sm:$0xf]
      %v2236 = vld [vmem:[%s3 + $0x10] sm:$0xf]
      %v2237 = vld [vmem:[%s3 + $0x14] sm:$0xf]
      %v2238 = vld [vmem:[%s3 + $0x18] sm:$0xf]
      %v2239 = vld [vmem:[%s3 + $0x1c] sm:$0xf]
      %v2240 = vld [vmem:[%s3 + $0x20] sm:$0xf]
      %v2241 = vld [vmem:[%s3 + $0x24] sm:$0xf]
      %v2242 = vld [vmem:[#allocation3 + $0x38] sm:$0xf]
      %v2243 = vld [vmem:[#allocation3 + $0x3c] sm:$0xf]
      %s2244 = scalar_lea.vmem %s3, 40
      %v2245 = vld [vmem:[%s2244] sm:$0xf]
      %v2246 = vld [vmem:[%s2244 + $0x4] sm:$0xf]
      %v2247 = vld [vmem:[%s2244 + $0x8] sm:$0xf]
      %v2248 = vld [vmem:[%s2244 + $0xc] sm:$0xf]
      %v2249 = vld [vmem:[%s2244 + $0x10] sm:$0xf]
      %v2250 = vld [vmem:[%s2244 + $0x14] sm:$0xf]
      %v2251 = vld [vmem:[%s2244 + $0x18] sm:$0xf]
      %v2252 = vld [vmem:[%s2244 + $0x1c] sm:$0xf]
      %v2253 = vld [vmem:[%s2244 + $0x20] sm:$0xf]
      %v2254 = vld [vmem:[%s2244 + $0x24] sm:$0xf]
      %v2269 = vunpack.c.l.b16 %v2220
      %v2270 = vunpack.c.l.b16 %v2221
      %v2271 = vunpack.c.l.b16 %v2222
      %v2272 = vunpack.c.l.b16 %v2223
      %v2273 = vunpack.c.l.b16 %v2224
      %v2274 = vunpack.c.l.b16 %v2225
      %v2275 = vunpack.c.l.b16 %v2226
      %v2276 = vunpack.c.l.b16 %v2227
      %v2277 = vunpack.c.l.b16 %v2228
      %v2278 = vunpack.c.l.b16 %v2229
      %v2279 = vunpack.c.l.b16 %v2230
      %v2280 = vunpack.c.l.b16 %v2231
      %v2281 = vunpack.c.l.b16 %v2242
      %v2282 = vunpack.c.l.b16 %v2243
      %v2283 = vpack.c.b16 %v2270, %v2269
      %v2284 = vpack.c.b16 %v2272, %v2271
      %v2285 = vpack.c.b16 %v2274, %v2273
      %v2286 = vpack.c.b16 %v2276, %v2275
      %v2287 = vpack.c.b16 %v2278, %v2277
      %v2288 = vpack.c.b16 %v2280, %v2279
      %v2289 = vpack.c.b16 %v2282, %v2281
      %v2300 = vunpack.c.l.b16 %v2245
      %v2301 = vunpack.c.l.b16 %v2246
      %v2302 = vunpack.c.l.b16 %v2247
      %v2303 = vunpack.c.l.b16 %v2248
      %v2304 = vunpack.c.l.b16 %v2249
      %v2305 = vunpack.c.l.b16 %v2250
      %v2306 = vunpack.c.l.b16 %v2251
      %v2307 = vunpack.c.l.b16 %v2252
      %v2308 = vunpack.c.l.b16 %v2253
      %v2309 = vunpack.c.l.b16 %v2254
      %v2310 = vpack.c.b16 %v2301, %v2300
      %v2311 = vpack.c.b16 %v2303, %v2302
      %v2312 = vpack.c.b16 %v2305, %v2304
      %v2313 = vpack.c.b16 %v2307, %v2306
      %v2314 = vpack.c.b16 %v2309, %v2308
      %vm2320 = vcmask 654336
      %v2322 = vsel %vm2320, %v2283, 0
      %v2325 = vsel %vm2320, %v2284, 0
      %v2328 = vsel %vm2320, %v2285, 0
      %v2331 = vsel %vm2320, %v2286, 0
      %v2334 = vsel %vm2320, %v2287, 0
      %v2337 = vsel %vm2320, %v2288, 0
      %v2340 = vsel %vm2320, %v2289, 0
      %2342 = vmatpush.bf16.msra.mxu0 0
      %2343 = vmatpush.bf16.msra.mxu0 0
      %2344 = vmatpush.bf16.msra.mxu0 0
      %2345 = vmatpush.bf16.msra.mxu0 %v2314
      %2346 = vmatpush.bf16.msra.mxu0 %v2313
      %2347 = vmatpush.bf16.msra.mxu0 %v2312
      %2348 = vmatpush.bf16.msra.mxu0 %v2311
      %2349 = vmatpush.bf16.msra.mxu0 %v2310
      %2350 = vmatmul.bf16.gmra.mxu0 %v2322
      %v2351 = vpop.f32.mrf.mxu0
      %v2352 = vadd.f32 0.0, %v2351
      %v2353 = vpop.f32.mrf.mxu0
      %v2354 = vadd.f32 0.0, %v2353
      %2355 = vmatmul.bf16.gmra.mxu0 %v2325
      %v2356 = vpop.f32.mrf.mxu0
      %v2357 = vadd.f32 0.0, %v2356
      %v2358 = vpop.f32.mrf.mxu0
      %v2359 = vadd.f32 0.0, %v2358
      %2360 = vmatmul.bf16.gmra.mxu0 %v2328
      %v2361 = vpop.f32.mrf.mxu0
      %v2362 = vadd.f32 0.0, %v2361
      %v2363 = vpop.f32.mrf.mxu0
      %v2364 = vadd.f32 0.0, %v2363
      %2365 = vmatmul.bf16.gmra.mxu0 %v2331
      %v2366 = vpop.f32.mrf.mxu0
      %v2367 = vadd.f32 0.0, %v2366
      %v2368 = vpop.f32.mrf.mxu0
      %v2369 = vadd.f32 0.0, %v2368
      %2370 = vmatmul.bf16.gmra.mxu0 %v2334
      %v2371 = vpop.f32.mrf.mxu0
      %v2372 = vadd.f32 0.0, %v2371
      %v2373 = vpop.f32.mrf.mxu0
      %v2374 = vadd.f32 0.0, %v2373
      %2375 = vmatmul.bf16.gmra.mxu0 %v2337
      %v2376 = vpop.f32.mrf.mxu0
      %v2377 = vadd.f32 0.0, %v2376
      %v2378 = vpop.f32.mrf.mxu0
      %v2379 = vadd.f32 0.0, %v2378
      %2380 = vmatmul.bf16.gmra.mxu0 %v2340
      %v2381 = vpop.f32.mrf.mxu0
      %v2382 = vadd.f32 0.0, %v2381
      %v2383 = vpop.f32.mrf.mxu0
      %v2384 = vadd.f32 0.0, %v2383
      %2385 = vdwg.mxu0
      %v2388 = vunpack.c.l.b16 %v2218
      %v2389 = vunpack.c.l.b16 %v2219
      %v2390 = vpack.c.b16 %v2389, %v2388
      %v2401 = vunpack.c.l.b16 %v2232
      %v2402 = vunpack.c.l.b16 %v2233
      %v2403 = vunpack.c.l.b16 %v2234
      %v2404 = vunpack.c.l.b16 %v2235
      %v2405 = vunpack.c.l.b16 %v2236
      %v2406 = vunpack.c.l.b16 %v2237
      %v2407 = vunpack.c.l.b16 %v2238
      %v2408 = vunpack.c.l.b16 %v2239
      %v2409 = vunpack.c.l.b16 %v2240
      %v2410 = vunpack.c.l.b16 %v2241
      %v2411 = vpack.c.b16 %v2402, %v2401
      %v2412 = vpack.c.b16 %v2404, %v2403
      %v2413 = vpack.c.b16 %v2406, %v2405
      %v2414 = vpack.c.b16 %v2408, %v2407
      %v2415 = vpack.c.b16 %v2410, %v2409
      %v2422 = vsel %vm2320, %v2390, 0
      %2424 = vmatpush.bf16.msra.mxu0 0
      %2425 = vmatpush.bf16.msra.mxu0 0
      %2426 = vmatpush.bf16.msra.mxu0 0
      %2427 = vmatpush.bf16.msra.mxu0 %v2415
      %2428 = vmatpush.bf16.msra.mxu0 %v2414
      %2429 = vmatpush.bf16.msra.mxu0 %v2413
      %2430 = vmatpush.bf16.msra.mxu0 %v2412
      %2431 = vmatpush.bf16.msra.mxu0 %v2411
      %2432 = vmatmul.bf16.gmra.mxu0 %v2422
      %v2433 = vpop.f32.mrf.mxu0
      %v2434 = vadd.f32 %v2352, %v2433
      %v2435 = vpop.f32.mrf.mxu0
      %v2436 = vadd.f32 %v2354, %v2435
      %2437 = vmatmul.bf16.gmra.mxu0 %v2322
      %v2438 = vpop.f32.mrf.mxu0
      %v2439 = vadd.f32 %v2357, %v2438
      %v2440 = vpop.f32.mrf.mxu0
      %v2441 = vadd.f32 %v2359, %v2440
      %2442 = vmatmul.bf16.gmra.mxu0 %v2325
      %v2443 = vpop.f32.mrf.mxu0
      %v2444 = vadd.f32 %v2362, %v2443
      %v2445 = vpop.f32.mrf.mxu0
      %v2446 = vadd.f32 %v2364, %v2445
      %2447 = vmatmul.bf16.gmra.mxu0 %v2328
      %v2448 = vpop.f32.mrf.mxu0
      %v2449 = vadd.f32 %v2367, %v2448
      %v2450 = vpop.f32.mrf.mxu0
      %v2451 = vadd.f32 %v2369, %v2450
      %2452 = vmatmul.bf16.gmra.mxu0 %v2331
      %v2453 = vpop.f32.mrf.mxu0
      %v2454 = vadd.f32 %v2372, %v2453
      %v2455 = vpop.f32.mrf.mxu0
      %v2456 = vadd.f32 %v2374, %v2455
      %2457 = vmatmul.bf16.gmra.mxu0 %v2334
      %v2458 = vpop.f32.mrf.mxu0
      %v2459 = vadd.f32 %v2377, %v2458
      %v2460 = vpop.f32.mrf.mxu0
      %v2461 = vadd.f32 %v2379, %v2460
      %2462 = vmatmul.bf16.gmra.mxu0 %v2337
      %v2463 = vpop.f32.mrf.mxu0
      %v2464 = vadd.f32 %v2382, %v2463
      %v2465 = vpop.f32.mrf.mxu0
      %v2466 = vadd.f32 %v2384, %v2465
      %2467 = vdwg.mxu0
      %v2468 = vld [vmem:[#allocation3 + $0x10] sm:$0xf]
      %v2469 = vld [vmem:[#allocation3 + $0x14] sm:$0xf]
      %v2470 = vld [vmem:[#allocation3 + $0x18] sm:$0xf]
      %v2471 = vld [vmem:[#allocation3 + $0x1c] sm:$0xf]
      %v2472 = vld [vmem:[#allocation3 + $0x20] sm:$0xf]
      %v2473 = vld [vmem:[#allocation3 + $0x24] sm:$0xf]
      %v2474 = vld [vmem:[#allocation3 + $0x28] sm:$0xf]
      %v2475 = vld [vmem:[#allocation3 + $0x2c] sm:$0xf]
      %v2476 = vld [vmem:[#allocation3 + $0x30] sm:$0xf]
      %v2477 = vld [vmem:[#allocation3 + $0x34] sm:$0xf]
      %v2478 = vld [vmem:[#allocation3 + $0x38] sm:$0xf]
      %v2479 = vld [vmem:[#allocation3 + $0x3c] sm:$0xf]
      %v2480 = vld [vmem:[#allocation3 + $0x40] sm:$0xf]
      %v2481 = vld [vmem:[#allocation3 + $0x44] sm:$0xf]
      %s2482 = scalar_lea.vmem %s3, 80
      %v2483 = vld [vmem:[%s2482] sm:$0xf]
      %v2484 = vld [vmem:[%s2482 + $0x4] sm:$0xf]
      %v2485 = vld [vmem:[%s2482 + $0x8] sm:$0xf]
      %v2486 = vld [vmem:[%s2482 + $0xc] sm:$0xf]
      %v2487 = vld [vmem:[%s2482 + $0x10] sm:$0xf]
      %v2488 = vld [vmem:[%s2482 + $0x14] sm:$0xf]
      %v2489 = vld [vmem:[%s2482 + $0x18] sm:$0xf]
      %v2490 = vld [vmem:[%s2482 + $0x1c] sm:$0xf]
      %v2491 = vld [vmem:[%s2482 + $0x20] sm:$0xf]
      %v2492 = vld [vmem:[%s2482 + $0x24] sm:$0xf]
      %v2507 = vunpack.c.l.b16 %v2468
      %v2508 = vunpack.c.l.b16 %v2469
      %v2509 = vunpack.c.l.b16 %v2470
      %v2510 = vunpack.c.l.b16 %v2471
      %v2511 = vunpack.c.l.b16 %v2472
      %v2512 = vunpack.c.l.b16 %v2473
      %v2513 = vunpack.c.l.b16 %v2474
      %v2514 = vunpack.c.l.b16 %v2475
      %v2515 = vunpack.c.l.b16 %v2476
      %v2516 = vunpack.c.l.b16 %v2477
      %v2517 = vunpack.c.l.b16 %v2478
      %v2518 = vunpack.c.l.b16 %v2479
      %v2519 = vunpack.c.l.b16 %v2480
      %v2520 = vunpack.c.l.b16 %v2481
      %v2521 = vpack.c.b16 %v2508, %v2507
      %v2522 = vpack.c.b16 %v2510, %v2509
      %v2523 = vpack.c.b16 %v2512, %v2511
      %v2524 = vpack.c.b16 %v2514, %v2513
      %v2525 = vpack.c.b16 %v2516, %v2515
      %v2526 = vpack.c.b16 %v2518, %v2517
      %v2527 = vpack.c.b16 %v2520, %v2519
      %v2538 = vunpack.c.l.b16 %v2483
      %v2539 = vunpack.c.l.b16 %v2484
      %v2540 = vunpack.c.l.b16 %v2485
      %v2541 = vunpack.c.l.b16 %v2486
      %v2542 = vunpack.c.l.b16 %v2487
      %v2543 = vunpack.c.l.b16 %v2488
      %v2544 = vunpack.c.l.b16 %v2489
      %v2545 = vunpack.c.l.b16 %v2490
      %v2546 = vunpack.c.l.b16 %v2491
      %v2547 = vunpack.c.l.b16 %v2492
      %v2548 = vpack.c.b16 %v2539, %v2538
      %v2549 = vpack.c.b16 %v2541, %v2540
      %v2550 = vpack.c.b16 %v2543, %v2542
      %v2551 = vpack.c.b16 %v2545, %v2544
      %v2552 = vpack.c.b16 %v2547, %v2546
      %v2559 = vsel %vm2320, %v2521, 0
      %v2562 = vsel %vm2320, %v2522, 0
      %v2565 = vsel %vm2320, %v2523, 0
      %v2568 = vsel %vm2320, %v2524, 0
      %v2571 = vsel %vm2320, %v2525, 0
      %v2574 = vsel %vm2320, %v2526, 0
      %v2577 = vsel %vm2320, %v2527, 0
      %2579 = vmatpush.bf16.msra.mxu0 0
      %2580 = vmatpush.bf16.msra.mxu0 0
      %2581 = vmatpush.bf16.msra.mxu0 0
      %2582 = vmatpush.bf16.msra.mxu0 %v2552
      %2583 = vmatpush.bf16.msra.mxu0 %v2551
      %2584 = vmatpush.bf16.msra.mxu0 %v2550
      %2585 = vmatpush.bf16.msra.mxu0 %v2549
      %2586 = vmatpush.bf16.msra.mxu0 %v2548
      %2587 = vmatmul.bf16.gmra.mxu0 %v2559
      %v2588 = vpop.f32.mrf.mxu0
      %v2589 = vadd.f32 0.0, %v2588
      %v2590 = vpop.f32.mrf.mxu0
      %v2591 = vadd.f32 0.0, %v2590
      %2592 = vmatmul.bf16.gmra.mxu0 %v2562
      %v2593 = vpop.f32.mrf.mxu0
      %v2594 = vadd.f32 0.0, %v2593
      %v2595 = vpop.f32.mrf.mxu0
      %v2596 = vadd.f32 0.0, %v2595
      %2597 = vmatmul.bf16.gmra.mxu0 %v2565
      %v2598 = vpop.f32.mrf.mxu0
      %v2599 = vadd.f32 0.0, %v2598
      %v2600 = vpop.f32.mrf.mxu0
      %v2601 = vadd.f32 0.0, %v2600
      %2602 = vmatmul.bf16.gmra.mxu0 %v2568
      %v2603 = vpop.f32.mrf.mxu0
      %v2604 = vadd.f32 0.0, %v2603
      %v2605 = vpop.f32.mrf.mxu0
      %v2606 = vadd.f32 0.0, %v2605
      %2607 = vmatmul.bf16.gmra.mxu0 %v2571
      %v2608 = vpop.f32.mrf.mxu0
      %v2609 = vadd.f32 0.0, %v2608
      %v2610 = vpop.f32.mrf.mxu0
      %v2611 = vadd.f32 0.0, %v2610
      %2612 = vmatmul.bf16.gmra.mxu0 %v2574
      %v2613 = vpop.f32.mrf.mxu0
      %v2614 = vadd.f32 0.0, %v2613
      %v2615 = vpop.f32.mrf.mxu0
      %v2616 = vadd.f32 0.0, %v2615
      %2617 = vmatmul.bf16.gmra.mxu0 %v2577
      %v2618 = vpop.f32.mrf.mxu0
      %v2619 = vadd.f32 0.0, %v2618
      %v2620 = vpop.f32.mrf.mxu0
      %v2621 = vadd.f32 0.0, %v2620
      %2622 = vdwg.mxu0
      %v2623 = vadd.f32 %v2434, %v2589
      %v2624 = vadd.f32 %v2436, %v2591
      %v2625 = vadd.f32 %v2439, %v2594
      %v2626 = vadd.f32 %v2441, %v2596
      %v2627 = vadd.f32 %v2444, %v2599
      %v2628 = vadd.f32 %v2446, %v2601
      %v2629 = vadd.f32 %v2449, %v2604
      %v2630 = vadd.f32 %v2451, %v2606
      %v2631 = vadd.f32 %v2454, %v2609
      %v2632 = vadd.f32 %v2456, %v2611
      %v2633 = vadd.f32 %v2459, %v2614
      %v2634 = vadd.f32 %v2461, %v2616
      %v2635 = vadd.f32 %v2464, %v2619
      %v2636 = vadd.f32 %v2466, %v2621
      %v2637 = vld [vmem:[#allocation3 + $0x18] sm:$0xf]
      %v2638 = vld [vmem:[#allocation3 + $0x1c] sm:$0xf]
      %v2639 = vld [vmem:[#allocation3 + $0x20] sm:$0xf]
      %v2640 = vld [vmem:[#allocation3 + $0x24] sm:$0xf]
      %v2641 = vld [vmem:[#allocation3 + $0x28] sm:$0xf]
      %v2642 = vld [vmem:[#allocation3 + $0x2c] sm:$0xf]
      %v2643 = vld [vmem:[#allocation3 + $0x30] sm:$0xf]
      %v2644 = vld [vmem:[#allocation3 + $0x34] sm:$0xf]
      %v2645 = vld [vmem:[#allocation3 + $0x38] sm:$0xf]
      %v2646 = vld [vmem:[#allocation3 + $0x3c] sm:$0xf]
      %v2647 = vld [vmem:[#allocation3 + $0x40] sm:$0xf]
      %v2648 = vld [vmem:[#allocation3 + $0x44] sm:$0xf]
      %v2649 = vld [vmem:[#allocation3 + $0x48] sm:$0xf]
      %v2650 = vld [vmem:[#allocation3 + $0x4c] sm:$0xf]
      %s2651 = scalar_lea.vmem %s3, 120
      %v2652 = vld [vmem:[%s2651] sm:$0xf]
      %v2653 = vld [vmem:[%s2651 + $0x4] sm:$0xf]
      %v2654 = vld [vmem:[%s2651 + $0x8] sm:$0xf]
      %v2655 = vld [vmem:[%s2651 + $0xc] sm:$0xf]
      %v2656 = vld [vmem:[%s2651 + $0x10] sm:$0xf]
      %v2657 = vld [vmem:[%s2651 + $0x14] sm:$0xf]
      %v2658 = vld [vmem:[%s2651 + $0x18] sm:$0xf]
      %v2659 = vld [vmem:[%s2651 + $0x1c] sm:$0xf]
      %v2660 = vld [vmem:[%s2651 + $0x20] sm:$0xf]
      %v2661 = vld [vmem:[%s2651 + $0x24] sm:$0xf]
      %v2676 = vunpack.c.l.b16 %v2637
      %v2677 = vunpack.c.l.b16 %v2638
      %v2678 = vunpack.c.l.b16 %v2639
      %v2679 = vunpack.c.l.b16 %v2640
      %v2680 = vunpack.c.l.b16 %v2641
      %v2681 = vunpack.c.l.b16 %v2642
      %v2682 = vunpack.c.l.b16 %v2643
      %v2683 = vunpack.c.l.b16 %v2644
      %v2684 = vunpack.c.l.b16 %v2645
      %v2685 = vunpack.c.l.b16 %v2646
      %v2686 = vunpack.c.l.b16 %v2647
      %v2687 = vunpack.c.l.b16 %v2648
      %v2688 = vunpack.c.l.b16 %v2649
      %v2689 = vunpack.c.l.b16 %v2650
      %v2690 = vpack.c.b16 %v2677, %v2676
      %v2691 = vpack.c.b16 %v2679, %v2678
      %v2692 = vpack.c.b16 %v2681, %v2680
      %v2693 = vpack.c.b16 %v2683, %v2682
      %v2694 = vpack.c.b16 %v2685, %v2684
      %v2695 = vpack.c.b16 %v2687, %v2686
      %v2696 = vpack.c.b16 %v2689, %v2688
      %v2707 = vunpack.c.l.b16 %v2652
      %v2708 = vunpack.c.l.b16 %v2653
      %v2709 = vunpack.c.l.b16 %v2654
      %v2710 = vunpack.c.l.b16 %v2655
      %v2711 = vunpack.c.l.b16 %v2656
      %v2712 = vunpack.c.l.b16 %v2657
      %v2713 = vunpack.c.l.b16 %v2658
      %v2714 = vunpack.c.l.b16 %v2659
      %v2715 = vunpack.c.l.b16 %v2660
      %v2716 = vunpack.c.l.b16 %v2661
      %v2717 = vpack.c.b16 %v2708, %v2707
      %v2718 = vpack.c.b16 %v2710, %v2709
      %v2719 = vpack.c.b16 %v2712, %v2711
      %v2720 = vpack.c.b16 %v2714, %v2713
      %v2721 = vpack.c.b16 %v2716, %v2715
      %v2728 = vsel %vm2320, %v2690, 0
      %v2731 = vsel %vm2320, %v2691, 0
      %v2734 = vsel %vm2320, %v2692, 0
      %v2737 = vsel %vm2320, %v2693, 0
      %v2740 = vsel %vm2320, %v2694, 0
      %v2743 = vsel %vm2320, %v2695, 0
      %v2746 = vsel %vm2320, %v2696, 0
      %2748 = vmatpush.bf16.msra.mxu0 0
      %2749 = vmatpush.bf16.msra.mxu0 0
      %2750 = vmatpush.bf16.msra.mxu0 0
      %2751 = vmatpush.bf16.msra.mxu0 %v2721
      %2752 = vmatpush.bf16.msra.mxu0 %v2720
      %2753 = vmatpush.bf16.msra.mxu0 %v2719
      %2754 = vmatpush.bf16.msra.mxu0 %v2718
      %2755 = vmatpush.bf16.msra.mxu0 %v2717
      %2756 = vmatmul.bf16.gmra.mxu0 %v2728
      %v2757 = vpop.f32.mrf.mxu0
      %v2758 = vadd.f32 0.0, %v2757
      %v2759 = vpop.f32.mrf.mxu0
      %v2760 = vadd.f32 0.0, %v2759
      %2761 = vmatmul.bf16.gmra.mxu0 %v2731
      %v2762 = vpop.f32.mrf.mxu0
      %v2763 = vadd.f32 0.0, %v2762
      %v2764 = vpop.f32.mrf.mxu0
      %v2765 = vadd.f32 0.0, %v2764
      %2766 = vmatmul.bf16.gmra.mxu0 %v2734
      %v2767 = vpop.f32.mrf.mxu0
      %v2768 = vadd.f32 0.0, %v2767
      %v2769 = vpop.f32.mrf.mxu0
      %v2770 = vadd.f32 0.0, %v2769
      %2771 = vmatmul.bf16.gmra.mxu0 %v2737
      %v2772 = vpop.f32.mrf.mxu0
      %v2773 = vadd.f32 0.0, %v2772
      %v2774 = vpop.f32.mrf.mxu0
      %v2775 = vadd.f32 0.0, %v2774
      %2776 = vmatmul.bf16.gmra.mxu0 %v2740
      %v2777 = vpop.f32.mrf.mxu0
      %v2778 = vadd.f32 0.0, %v2777
      %v2779 = vpop.f32.mrf.mxu0
      %v2780 = vadd.f32 0.0, %v2779
      %2781 = vmatmul.bf16.gmra.mxu0 %v2743
      %v2782 = vpop.f32.mrf.mxu0
      %v2783 = vadd.f32 0.0, %v2782
      %v2784 = vpop.f32.mrf.mxu0
      %v2785 = vadd.f32 0.0, %v2784
      %2786 = vmatmul.bf16.gmra.mxu0 %v2746
      %v2787 = vpop.f32.mrf.mxu0
      %v2788 = vadd.f32 0.0, %v2787
      %v2789 = vpop.f32.mrf.mxu0
      %v2790 = vadd.f32 0.0, %v2789
      %2791 = vdwg.mxu0
      %v2792 = vadd.f32 %v2623, %v2758
      %v2793 = vadd.f32 %v2624, %v2760
      %v2794 = vadd.f32 %v2625, %v2763
      %v2795 = vadd.f32 %v2626, %v2765
      %v2796 = vadd.f32 %v2627, %v2768
      %v2797 = vadd.f32 %v2628, %v2770
      %v2798 = vadd.f32 %v2629, %v2773
      %v2799 = vadd.f32 %v2630, %v2775
      %v2800 = vadd.f32 %v2631, %v2778
      %v2801 = vadd.f32 %v2632, %v2780
      %v2802 = vadd.f32 %v2633, %v2783
      %v2803 = vadd.f32 %v2634, %v2785
      %v2804 = vadd.f32 %v2635, %v2788
      %v2805 = vadd.f32 %v2636, %v2790
      %v2806 = vld [vmem:[%s9] sm:$0x1]
      %v2808 = vperm.slane %v2806, 0
      %v2810 = vadd.f32 %v2792, %v2808
      %v2811 = vadd.f32 %v2793, %v2808
      %v2812 = vadd.f32 %v2794, %v2808
      %v2813 = vadd.f32 %v2795, %v2808
      %v2814 = vadd.f32 %v2796, %v2808
      %v2815 = vadd.f32 %v2797, %v2808
      %v2816 = vadd.f32 %v2798, %v2808
      %v2817 = vadd.f32 %v2799, %v2808
      %v2818 = vadd.f32 %v2800, %v2808
      %v2819 = vadd.f32 %v2801, %v2808
      %v2820 = vadd.f32 %v2802, %v2808
      %v2821 = vadd.f32 %v2803, %v2808
      %v2822 = vadd.f32 %v2804, %v2808
      %v2823 = vadd.f32 %v2805, %v2808
      %v2824 = vmul.f32 %v2810, 0.01
      %v2825 = vmul.f32 %v2811, 0.01
      %v2826 = vmul.f32 %v2812, 0.01
      %v2827 = vmul.f32 %v2813, 0.01
      %v2828 = vmul.f32 %v2814, 0.01
      %v2829 = vmul.f32 %v2815, 0.01
      %v2830 = vmul.f32 %v2816, 0.01
      %v2831 = vmul.f32 %v2817, 0.01
      %v2832 = vmul.f32 %v2818, 0.01
      %v2833 = vmul.f32 %v2819, 0.01
      %v2834 = vmul.f32 %v2820, 0.01
      %v2835 = vmul.f32 %v2821, 0.01
      %v2836 = vmul.f32 %v2822, 0.01
      %v2837 = vmul.f32 %v2823, 0.01
      %v2838 = vmax.f32 %v2810, %v2824
      %v2839 = vmax.f32 %v2811, %v2825
      %v2840 = vmax.f32 %v2812, %v2826
      %v2841 = vmax.f32 %v2813, %v2827
      %v2842 = vmax.f32 %v2814, %v2828
      %v2843 = vmax.f32 %v2815, %v2829
      %v2844 = vmax.f32 %v2816, %v2830
      %v2845 = vmax.f32 %v2817, %v2831
      %v2846 = vmax.f32 %v2818, %v2832
      %v2847 = vmax.f32 %v2819, %v2833
      %v2848 = vmax.f32 %v2820, %v2834
      %v2849 = vmax.f32 %v2821, %v2835
      %v2850 = vmax.f32 %v2822, %v2836
      %v2851 = vmax.f32 %v2823, %v2837
      %v2852 = vpack.c.bf16 %v2838, %v2838
      %v2853 = vpack.c.bf16 %v2839, %v2839
      %v2854 = vpack.c.bf16 %v2840, %v2840
      %v2855 = vpack.c.bf16 %v2841, %v2841
      %v2856 = vpack.c.bf16 %v2842, %v2842
      %v2857 = vpack.c.bf16 %v2843, %v2843
      %v2858 = vpack.c.bf16 %v2844, %v2844
      %v2859 = vpack.c.bf16 %v2845, %v2845
      %v2860 = vpack.c.bf16 %v2846, %v2846
      %v2861 = vpack.c.bf16 %v2847, %v2847
      %v2862 = vpack.c.bf16 %v2848, %v2848
      %v2863 = vpack.c.bf16 %v2849, %v2849
      %v2864 = vpack.c.bf16 %v2850, %v2850
      %v2865 = vpack.c.bf16 %v2851, %v2851
      %2866 = vst.msk [vmem:[#allocation4 + $0x18] sm:$0xf] %vm442, %v2852
      %2867 = vst.msk [vmem:[#allocation4 + $0x1c] sm:$0xf] %vm442, %v2853
      %2868 = vst.msk [vmem:[#allocation4 + $0x20] sm:$0xf] %vm442, %v2854
      %2869 = vst.msk [vmem:[#allocation4 + $0x24] sm:$0xf] %vm442, %v2855
      %2870 = vst.msk [vmem:[#allocation4 + $0x28] sm:$0xf] %vm442, %v2856
      %2871 = vst.msk [vmem:[#allocation4 + $0x2c] sm:$0xf] %vm442, %v2857
      %2872 = vst.msk [vmem:[#allocation4 + $0x30] sm:$0xf] %vm442, %v2858
      %2873 = vst.msk [vmem:[#allocation4 + $0x34] sm:$0xf] %vm442, %v2859
      %2874 = vst.msk [vmem:[#allocation4 + $0x38] sm:$0xf] %vm442, %v2860
      %2875 = vst.msk [vmem:[#allocation4 + $0x3c] sm:$0xf] %vm442, %v2861
      %2876 = vst.msk [vmem:[#allocation4 + $0x40] sm:$0xf] %vm442, %v2862
      %2877 = vst.msk [vmem:[#allocation4 + $0x44] sm:$0xf] %vm442, %v2863
      %2878 = vst.msk [vmem:[#allocation4 + $0x48] sm:$0xf] %vm442, %v2864
      %2879 = vst.msk [vmem:[#allocation4 + $0x4c] sm:$0xf] %vm442, %v2865
      %v2880 = vld [vmem:[#allocation4] sm:$0xf]
      %v2881 = vld [vmem:[#allocation4 + $0x4] sm:$0xf]
      %v2882 = vld [vmem:[#allocation4 + $0x8] sm:$0xf]
      %v2883 = vld [vmem:[#allocation4 + $0xc] sm:$0xf]
      %v2884 = vld [vmem:[#allocation4 + $0x10] sm:$0xf]
      %v2885 = vld [vmem:[#allocation4 + $0x14] sm:$0xf]
      %v2886 = vld [vmem:[#allocation4 + $0x18] sm:$0xf]
      %v2887 = vld [vmem:[#allocation4 + $0x1c] sm:$0xf]
      %v2888 = vld [vmem:[#allocation4 + $0x20] sm:$0xf]
      %v2889 = vld [vmem:[#allocation4 + $0x24] sm:$0xf]
      %v2890 = vld [vmem:[#allocation4 + $0x28] sm:$0xf]
      %v2891 = vld [vmem:[#allocation4 + $0x2c] sm:$0xf]
      %v2892 = vld [vmem:[#allocation4 + $0x30] sm:$0xf]
      %v2893 = vld [vmem:[#allocation4 + $0x34] sm:$0xf]
      %v2894 = vld [vmem:[#allocation4 + $0x38] sm:$0xf]
      %v2895 = vld [vmem:[#allocation4 + $0x3c] sm:$0xf]
      %v2896 = vld [vmem:[#allocation4 + $0x40] sm:$0xf]
      %v2897 = vld [vmem:[#allocation4 + $0x44] sm:$0xf]
      %v2898 = vld [vmem:[#allocation4 + $0x48] sm:$0xf]
      %v2899 = vld [vmem:[#allocation4 + $0x4c] sm:$0xf]
      %v2900 = vld [vmem:[%s4] sm:$0xf]
      %v2901 = vld [vmem:[%s4 + $0x4] sm:$0xf]
      %v2902 = vld [vmem:[%s4 + $0x8] sm:$0xf]
      %v2903 = vld [vmem:[%s4 + $0xc] sm:$0xf]
      %v2904 = vld [vmem:[%s4 + $0x10] sm:$0xf]
      %v2905 = vld [vmem:[%s4 + $0x14] sm:$0xf]
      %v2906 = vld [vmem:[%s4 + $0x18] sm:$0xf]
      %v2907 = vld [vmem:[%s4 + $0x1c] sm:$0xf]
      %v2908 = vld [vmem:[%s4 + $0x20] sm:$0xf]
      %v2909 = vld [vmem:[%s4 + $0x24] sm:$0xf]
      %v2910 = vld [vmem:[%s4 + $0x28] sm:$0xf]
      %v2911 = vld [vmem:[%s4 + $0x2c] sm:$0xf]
      %v2912 = vld [vmem:[%s4 + $0x30] sm:$0xf]
      %v2913 = vld [vmem:[%s4 + $0x34] sm:$0xf]
      %v2914 = vld [vmem:[#allocation4 + $0x50] sm:$0xf]
      %v2915 = vld [vmem:[#allocation4 + $0x54] sm:$0xf]
      %s2916 = scalar_lea.vmem %s4, 56
      %v2917 = vld [vmem:[%s2916] sm:$0xf]
      %v2918 = vld [vmem:[%s2916 + $0x4] sm:$0xf]
      %v2919 = vld [vmem:[%s2916 + $0x8] sm:$0xf]
      %v2920 = vld [vmem:[%s2916 + $0xc] sm:$0xf]
      %v2921 = vld [vmem:[%s2916 + $0x10] sm:$0xf]
      %v2922 = vld [vmem:[%s2916 + $0x14] sm:$0xf]
      %v2923 = vld [vmem:[%s2916 + $0x18] sm:$0xf]
      %v2924 = vld [vmem:[%s2916 + $0x1c] sm:$0xf]
      %v2925 = vld [vmem:[%s2916 + $0x20] sm:$0xf]
      %v2926 = vld [vmem:[%s2916 + $0x24] sm:$0xf]
      %v2927 = vld [vmem:[%s2916 + $0x28] sm:$0xf]
      %v2928 = vld [vmem:[%s2916 + $0x2c] sm:$0xf]
      %v2929 = vld [vmem:[%s2916 + $0x30] sm:$0xf]
      %v2930 = vld [vmem:[%s2916 + $0x34] sm:$0xf]
      %v2951 = vunpack.c.l.b16 %v2882
      %v2952 = vunpack.c.l.b16 %v2883
      %v2953 = vunpack.c.l.b16 %v2884
      %v2954 = vunpack.c.l.b16 %v2885
      %v2955 = vunpack.c.l.b16 %v2886
      %v2956 = vunpack.c.l.b16 %v2887
      %v2957 = vunpack.c.l.b16 %v2888
      %v2958 = vunpack.c.l.b16 %v2889
      %v2959 = vunpack.c.l.b16 %v2890
      %v2960 = vunpack.c.l.b16 %v2891
      %v2961 = vunpack.c.l.b16 %v2892
      %v2962 = vunpack.c.l.b16 %v2893
      %v2963 = vunpack.c.l.b16 %v2894
      %v2964 = vunpack.c.l.b16 %v2895
      %v2965 = vunpack.c.l.b16 %v2896
      %v2966 = vunpack.c.l.b16 %v2897
      %v2967 = vunpack.c.l.b16 %v2898
      %v2968 = vunpack.c.l.b16 %v2899
      %v2969 = vunpack.c.l.b16 %v2914
      %v2970 = vunpack.c.l.b16 %v2915
      %v2971 = vpack.c.b16 %v2952, %v2951
      %v2972 = vpack.c.b16 %v2954, %v2953
      %v2973 = vpack.c.b16 %v2956, %v2955
      %v2974 = vpack.c.b16 %v2958, %v2957
      %v2975 = vpack.c.b16 %v2960, %v2959
      %v2976 = vpack.c.b16 %v2962, %v2961
      %v2977 = vpack.c.b16 %v2964, %v2963
      %v2978 = vpack.c.b16 %v2966, %v2965
      %v2979 = vpack.c.b16 %v2968, %v2967
      %v2980 = vpack.c.b16 %v2970, %v2969
      %v2995 = vunpack.c.l.b16 %v2917
      %v2996 = vunpack.c.l.b16 %v2918
      %v2997 = vunpack.c.l.b16 %v2919
      %v2998 = vunpack.c.l.b16 %v2920
      %v2999 = vunpack.c.l.b16 %v2921
      %v3000 = vunpack.c.l.b16 %v2922
      %v3001 = vunpack.c.l.b16 %v2923
      %v3002 = vunpack.c.l.b16 %v2924
      %v3003 = vunpack.c.l.b16 %v2925
      %v3004 = vunpack.c.l.b16 %v2926
      %v3005 = vunpack.c.l.b16 %v2927
      %v3006 = vunpack.c.l.b16 %v2928
      %v3007 = vunpack.c.l.b16 %v2929
      %v3008 = vunpack.c.l.b16 %v2930
      %v3009 = vpack.c.b16 %v2996, %v2995
      %v3010 = vpack.c.b16 %v2998, %v2997
      %v3011 = vpack.c.b16 %v3000, %v2999
      %v3012 = vpack.c.b16 %v3002, %v3001
      %v3013 = vpack.c.b16 %v3004, %v3003
      %v3014 = vpack.c.b16 %v3006, %v3005
      %v3015 = vpack.c.b16 %v3008, %v3007
      %vm3023 = vcmask 916480
      %v3025 = vsel %vm3023, %v2971, 0
      %v3028 = vsel %vm3023, %v2972, 0
      %v3031 = vsel %vm3023, %v2973, 0
      %v3034 = vsel %vm3023, %v2974, 0
      %v3037 = vsel %vm3023, %v2975, 0
      %v3040 = vsel %vm3023, %v2976, 0
      %v3043 = vsel %vm3023, %v2977, 0
      %v3046 = vsel %vm3023, %v2978, 0
      %v3049 = vsel %vm3023, %v2979, 0
      %v3052 = vsel %vm3023, %v2980, 0
      %3054 = vmatpush.bf16.msra.mxu0 0
      %3055 = vmatpush.bf16.msra.mxu0 %v3015
      %3056 = vmatpush.bf16.msra.mxu0 %v3014
      %3057 = vmatpush.bf16.msra.mxu0 %v3013
      %3058 = vmatpush.bf16.msra.mxu0 %v3012
      %3059 = vmatpush.bf16.msra.mxu0 %v3011
      %3060 = vmatpush.bf16.msra.mxu0 %v3010
      %3061 = vmatpush.bf16.msra.mxu0 %v3009
      %3062 = vmatmul.bf16.gmra.mxu0 %v3025
      %v3063 = vpop.f32.mrf.mxu0
      %v3064 = vadd.f32 0.0, %v3063
      %v3065 = vpop.f32.mrf.mxu0
      %v3066 = vadd.f32 0.0, %v3065
      %3067 = vmatmul.bf16.gmra.mxu0 %v3028
      %v3068 = vpop.f32.mrf.mxu0
      %v3069 = vadd.f32 0.0, %v3068
      %v3070 = vpop.f32.mrf.mxu0
      %v3071 = vadd.f32 0.0, %v3070
      %3072 = vmatmul.bf16.gmra.mxu0 %v3031
      %v3073 = vpop.f32.mrf.mxu0
      %v3074 = vadd.f32 0.0, %v3073
      %v3075 = vpop.f32.mrf.mxu0
      %v3076 = vadd.f32 0.0, %v3075
      %3077 = vmatmul.bf16.gmra.mxu0 %v3034
      %v3078 = vpop.f32.mrf.mxu0
      %v3079 = vadd.f32 0.0, %v3078
      %v3080 = vpop.f32.mrf.mxu0
      %v3081 = vadd.f32 0.0, %v3080
      %3082 = vmatmul.bf16.gmra.mxu0 %v3037
      %v3083 = vpop.f32.mrf.mxu0
      %v3084 = vadd.f32 0.0, %v3083
      %v3085 = vpop.f32.mrf.mxu0
      %v3086 = vadd.f32 0.0, %v3085
      %3087 = vmatmul.bf16.gmra.mxu0 %v3040
      %v3088 = vpop.f32.mrf.mxu0
      %v3089 = vadd.f32 0.0, %v3088
      %v3090 = vpop.f32.mrf.mxu0
      %v3091 = vadd.f32 0.0, %v3090
      %3092 = vmatmul.bf16.gmra.mxu0 %v3043
      %v3093 = vpop.f32.mrf.mxu0
      %v3094 = vadd.f32 0.0, %v3093
      %v3095 = vpop.f32.mrf.mxu0
      %v3096 = vadd.f32 0.0, %v3095
      %3097 = vmatmul.bf16.gmra.mxu0 %v3046
      %v3098 = vpop.f32.mrf.mxu0
      %v3099 = vadd.f32 0.0, %v3098
      %v3100 = vpop.f32.mrf.mxu0
      %v3101 = vadd.f32 0.0, %v3100
      %3102 = vmatmul.bf16.gmra.mxu0 %v3049
      %v3103 = vpop.f32.mrf.mxu0
      %v3104 = vadd.f32 0.0, %v3103
      %v3105 = vpop.f32.mrf.mxu0
      %v3106 = vadd.f32 0.0, %v3105
      %3107 = vmatmul.bf16.gmra.mxu0 %v3052
      %v3108 = vpop.f32.mrf.mxu0
      %v3109 = vadd.f32 0.0, %v3108
      %v3110 = vpop.f32.mrf.mxu0
      %v3111 = vadd.f32 0.0, %v3110
      %3112 = vdwg.mxu0
      %v3115 = vunpack.c.l.b16 %v2880
      %v3116 = vunpack.c.l.b16 %v2881
      %v3117 = vpack.c.b16 %v3116, %v3115
      %v3132 = vunpack.c.l.b16 %v2900
      %v3133 = vunpack.c.l.b16 %v2901
      %v3134 = vunpack.c.l.b16 %v2902
      %v3135 = vunpack.c.l.b16 %v2903
      %v3136 = vunpack.c.l.b16 %v2904
      %v3137 = vunpack.c.l.b16 %v2905
      %v3138 = vunpack.c.l.b16 %v2906
      %v3139 = vunpack.c.l.b16 %v2907
      %v3140 = vunpack.c.l.b16 %v2908
      %v3141 = vunpack.c.l.b16 %v2909
      %v3142 = vunpack.c.l.b16 %v2910
      %v3143 = vunpack.c.l.b16 %v2911
      %v3144 = vunpack.c.l.b16 %v2912
      %v3145 = vunpack.c.l.b16 %v2913
      %v3146 = vpack.c.b16 %v3133, %v3132
      %v3147 = vpack.c.b16 %v3135, %v3134
      %v3148 = vpack.c.b16 %v3137, %v3136
      %v3149 = vpack.c.b16 %v3139, %v3138
      %v3150 = vpack.c.b16 %v3141, %v3140
      %v3151 = vpack.c.b16 %v3143, %v3142
      %v3152 = vpack.c.b16 %v3145, %v3144
      %v3161 = vsel %vm3023, %v3117, 0
      %3163 = vmatpush.bf16.msra.mxu0 0
      %3164 = vmatpush.bf16.msra.mxu0 %v3152
      %3165 = vmatpush.bf16.msra.mxu0 %v3151
      %3166 = vmatpush.bf16.msra.mxu0 %v3150
      %3167 = vmatpush.bf16.msra.mxu0 %v3149
      %3168 = vmatpush.bf16.msra.mxu0 %v3148
      %3169 = vmatpush.bf16.msra.mxu0 %v3147
      %3170 = vmatpush.bf16.msra.mxu0 %v3146
      %3171 = vmatmul.bf16.gmra.mxu0 %v3161
      %v3172 = vpop.f32.mrf.mxu0
      %v3173 = vadd.f32 %v3064, %v3172
      %v3174 = vpop.f32.mrf.mxu0
      %v3175 = vadd.f32 %v3066, %v3174
      %3176 = vmatmul.bf16.gmra.mxu0 %v3025
      %v3177 = vpop.f32.mrf.mxu0
      %v3178 = vadd.f32 %v3069, %v3177
      %v3179 = vpop.f32.mrf.mxu0
      %v3180 = vadd.f32 %v3071, %v3179
      %3181 = vmatmul.bf16.gmra.mxu0 %v3028
      %v3182 = vpop.f32.mrf.mxu0
      %v3183 = vadd.f32 %v3074, %v3182
      %v3184 = vpop.f32.mrf.mxu0
      %v3185 = vadd.f32 %v3076, %v3184
      %3186 = vmatmul.bf16.gmra.mxu0 %v3031
      %v3187 = vpop.f32.mrf.mxu0
      %v3188 = vadd.f32 %v3079, %v3187
      %v3189 = vpop.f32.mrf.mxu0
      %v3190 = vadd.f32 %v3081, %v3189
      %3191 = vmatmul.bf16.gmra.mxu0 %v3034
      %v3192 = vpop.f32.mrf.mxu0
      %v3193 = vadd.f32 %v3084, %v3192
      %v3194 = vpop.f32.mrf.mxu0
      %v3195 = vadd.f32 %v3086, %v3194
      %3196 = vmatmul.bf16.gmra.mxu0 %v3037
      %v3197 = vpop.f32.mrf.mxu0
      %v3198 = vadd.f32 %v3089, %v3197
      %v3199 = vpop.f32.mrf.mxu0
      %v3200 = vadd.f32 %v3091, %v3199
      %3201 = vmatmul.bf16.gmra.mxu0 %v3040
      %v3202 = vpop.f32.mrf.mxu0
      %v3203 = vadd.f32 %v3094, %v3202
      %v3204 = vpop.f32.mrf.mxu0
      %v3205 = vadd.f32 %v3096, %v3204
      %3206 = vmatmul.bf16.gmra.mxu0 %v3043
      %v3207 = vpop.f32.mrf.mxu0
      %v3208 = vadd.f32 %v3099, %v3207
      %v3209 = vpop.f32.mrf.mxu0
      %v3210 = vadd.f32 %v3101, %v3209
      %3211 = vmatmul.bf16.gmra.mxu0 %v3046
      %v3212 = vpop.f32.mrf.mxu0
      %v3213 = vadd.f32 %v3104, %v3212
      %v3214 = vpop.f32.mrf.mxu0
      %v3215 = vadd.f32 %v3106, %v3214
      %3216 = vmatmul.bf16.gmra.mxu0 %v3049
      %v3217 = vpop.f32.mrf.mxu0
      %v3218 = vadd.f32 %v3109, %v3217
      %v3219 = vpop.f32.mrf.mxu0
      %v3220 = vadd.f32 %v3111, %v3219
      %3221 = vdwg.mxu0
      %v3222 = vld [vmem:[#allocation4 + $0x10] sm:$0xf]
      %v3223 = vld [vmem:[#allocation4 + $0x14] sm:$0xf]
      %v3224 = vld [vmem:[#allocation4 + $0x18] sm:$0xf]
      %v3225 = vld [vmem:[#allocation4 + $0x1c] sm:$0xf]
      %v3226 = vld [vmem:[#allocation4 + $0x20] sm:$0xf]
      %v3227 = vld [vmem:[#allocation4 + $0x24] sm:$0xf]
      %v3228 = vld [vmem:[#allocation4 + $0x28] sm:$0xf]
      %v3229 = vld [vmem:[#allocation4 + $0x2c] sm:$0xf]
      %v3230 = vld [vmem:[#allocation4 + $0x30] sm:$0xf]
      %v3231 = vld [vmem:[#allocation4 + $0x34] sm:$0xf]
      %v3232 = vld [vmem:[#allocation4 + $0x38] sm:$0xf]
      %v3233 = vld [vmem:[#allocation4 + $0x3c] sm:$0xf]
      %v3234 = vld [vmem:[#allocation4 + $0x40] sm:$0xf]
      %v3235 = vld [vmem:[#allocation4 + $0x44] sm:$0xf]
      %v3236 = vld [vmem:[#allocation4 + $0x48] sm:$0xf]
      %v3237 = vld [vmem:[#allocation4 + $0x4c] sm:$0xf]
      %v3238 = vld [vmem:[#allocation4 + $0x50] sm:$0xf]
      %v3239 = vld [vmem:[#allocation4 + $0x54] sm:$0xf]
      %v3240 = vld [vmem:[#allocation4 + $0x58] sm:$0xf]
      %v3241 = vld [vmem:[#allocation4 + $0x5c] sm:$0xf]
      %s3242 = scalar_lea.vmem %s4, 112
      %v3243 = vld [vmem:[%s3242] sm:$0xf]
      %v3244 = vld [vmem:[%s3242 + $0x4] sm:$0xf]
      %v3245 = vld [vmem:[%s3242 + $0x8] sm:$0xf]
      %v3246 = vld [vmem:[%s3242 + $0xc] sm:$0xf]
      %v3247 = vld [vmem:[%s3242 + $0x10] sm:$0xf]
      %v3248 = vld [vmem:[%s3242 + $0x14] sm:$0xf]
      %v3249 = vld [vmem:[%s3242 + $0x18] sm:$0xf]
      %v3250 = vld [vmem:[%s3242 + $0x1c] sm:$0xf]
      %v3251 = vld [vmem:[%s3242 + $0x20] sm:$0xf]
      %v3252 = vld [vmem:[%s3242 + $0x24] sm:$0xf]
      %v3253 = vld [vmem:[%s3242 + $0x28] sm:$0xf]
      %v3254 = vld [vmem:[%s3242 + $0x2c] sm:$0xf]
      %v3255 = vld [vmem:[%s3242 + $0x30] sm:$0xf]
      %v3256 = vld [vmem:[%s3242 + $0x34] sm:$0xf]
      %v3277 = vunpack.c.l.b16 %v3222
      %v3278 = vunpack.c.l.b16 %v3223
      %v3279 = vunpack.c.l.b16 %v3224
      %v3280 = vunpack.c.l.b16 %v3225
      %v3281 = vunpack.c.l.b16 %v3226
      %v3282 = vunpack.c.l.b16 %v3227
      %v3283 = vunpack.c.l.b16 %v3228
      %v3284 = vunpack.c.l.b16 %v3229
      %v3285 = vunpack.c.l.b16 %v3230
      %v3286 = vunpack.c.l.b16 %v3231
      %v3287 = vunpack.c.l.b16 %v3232
      %v3288 = vunpack.c.l.b16 %v3233
      %v3289 = vunpack.c.l.b16 %v3234
      %v3290 = vunpack.c.l.b16 %v3235
      %v3291 = vunpack.c.l.b16 %v3236
      %v3292 = vunpack.c.l.b16 %v3237
      %v3293 = vunpack.c.l.b16 %v3238
      %v3294 = vunpack.c.l.b16 %v3239
      %v3295 = vunpack.c.l.b16 %v3240
      %v3296 = vunpack.c.l.b16 %v3241
      %v3297 = vpack.c.b16 %v3278, %v3277
      %v3298 = vpack.c.b16 %v3280, %v3279
      %v3299 = vpack.c.b16 %v3282, %v3281
      %v3300 = vpack.c.b16 %v3284, %v3283
      %v3301 = vpack.c.b16 %v3286, %v3285
      %v3302 = vpack.c.b16 %v3288, %v3287
      %v3303 = vpack.c.b16 %v3290, %v3289
      %v3304 = vpack.c.b16 %v3292, %v3291
      %v3305 = vpack.c.b16 %v3294, %v3293
      %v3306 = vpack.c.b16 %v3296, %v3295
      %v3321 = vunpack.c.l.b16 %v3243
      %v3322 = vunpack.c.l.b16 %v3244
      %v3323 = vunpack.c.l.b16 %v3245
      %v3324 = vunpack.c.l.b16 %v3246
      %v3325 = vunpack.c.l.b16 %v3247
      %v3326 = vunpack.c.l.b16 %v3248
      %v3327 = vunpack.c.l.b16 %v3249
      %v3328 = vunpack.c.l.b16 %v3250
      %v3329 = vunpack.c.l.b16 %v3251
      %v3330 = vunpack.c.l.b16 %v3252
      %v3331 = vunpack.c.l.b16 %v3253
      %v3332 = vunpack.c.l.b16 %v3254
      %v3333 = vunpack.c.l.b16 %v3255
      %v3334 = vunpack.c.l.b16 %v3256
      %v3335 = vpack.c.b16 %v3322, %v3321
      %v3336 = vpack.c.b16 %v3324, %v3323
      %v3337 = vpack.c.b16 %v3326, %v3325
      %v3338 = vpack.c.b16 %v3328, %v3327
      %v3339 = vpack.c.b16 %v3330, %v3329
      %v3340 = vpack.c.b16 %v3332, %v3331
      %v3341 = vpack.c.b16 %v3334, %v3333
      %v3350 = vsel %vm3023, %v3297, 0
      %v3353 = vsel %vm3023, %v3298, 0
      %v3356 = vsel %vm3023, %v3299, 0
      %v3359 = vsel %vm3023, %v3300, 0
      %v3362 = vsel %vm3023, %v3301, 0
      %v3365 = vsel %vm3023, %v3302, 0
      %v3368 = vsel %vm3023, %v3303, 0
      %v3371 = vsel %vm3023, %v3304, 0
      %v3374 = vsel %vm3023, %v3305, 0
      %v3377 = vsel %vm3023, %v3306, 0
      %3379 = vmatpush.bf16.msra.mxu0 0
      %3380 = vmatpush.bf16.msra.mxu0 %v3341
      %3381 = vmatpush.bf16.msra.mxu0 %v3340
      %3382 = vmatpush.bf16.msra.mxu0 %v3339
      %3383 = vmatpush.bf16.msra.mxu0 %v3338
      %3384 = vmatpush.bf16.msra.mxu0 %v3337
      %3385 = vmatpush.bf16.msra.mxu0 %v3336
      %3386 = vmatpush.bf16.msra.mxu0 %v3335
      %3387 = vmatmul.bf16.gmra.mxu0 %v3350
      %v3388 = vpop.f32.mrf.mxu0
      %v3389 = vadd.f32 0.0, %v3388
      %v3390 = vpop.f32.mrf.mxu0
      %v3391 = vadd.f32 0.0, %v3390
      %3392 = vmatmul.bf16.gmra.mxu0 %v3353
      %v3393 = vpop.f32.mrf.mxu0
      %v3394 = vadd.f32 0.0, %v3393
      %v3395 = vpop.f32.mrf.mxu0
      %v3396 = vadd.f32 0.0, %v3395
      %3397 = vmatmul.bf16.gmra.mxu0 %v3356
      %v3398 = vpop.f32.mrf.mxu0
      %v3399 = vadd.f32 0.0, %v3398
      %v3400 = vpop.f32.mrf.mxu0
      %v3401 = vadd.f32 0.0, %v3400
      %3402 = vmatmul.bf16.gmra.mxu0 %v3359
      %v3403 = vpop.f32.mrf.mxu0
      %v3404 = vadd.f32 0.0, %v3403
      %v3405 = vpop.f32.mrf.mxu0
      %v3406 = vadd.f32 0.0, %v3405
      %3407 = vmatmul.bf16.gmra.mxu0 %v3362
      %v3408 = vpop.f32.mrf.mxu0
      %v3409 = vadd.f32 0.0, %v3408
      %v3410 = vpop.f32.mrf.mxu0
      %v3411 = vadd.f32 0.0, %v3410
      %3412 = vmatmul.bf16.gmra.mxu0 %v3365
      %v3413 = vpop.f32.mrf.mxu0
      %v3414 = vadd.f32 0.0, %v3413
      %v3415 = vpop.f32.mrf.mxu0
      %v3416 = vadd.f32 0.0, %v3415
      %3417 = vmatmul.bf16.gmra.mxu0 %v3368
      %v3418 = vpop.f32.mrf.mxu0
      %v3419 = vadd.f32 0.0, %v3418
      %v3420 = vpop.f32.mrf.mxu0
      %v3421 = vadd.f32 0.0, %v3420
      %3422 = vmatmul.bf16.gmra.mxu0 %v3371
      %v3423 = vpop.f32.mrf.mxu0
      %v3424 = vadd.f32 0.0, %v3423
      %v3425 = vpop.f32.mrf.mxu0
      %v3426 = vadd.f32 0.0, %v3425
      %3427 = vmatmul.bf16.gmra.mxu0 %v3374
      %v3428 = vpop.f32.mrf.mxu0
      %v3429 = vadd.f32 0.0, %v3428
      %v3430 = vpop.f32.mrf.mxu0
      %v3431 = vadd.f32 0.0, %v3430
      %3432 = vmatmul.bf16.gmra.mxu0 %v3377
      %v3433 = vpop.f32.mrf.mxu0
      %v3434 = vadd.f32 0.0, %v3433
      %v3435 = vpop.f32.mrf.mxu0
      %v3436 = vadd.f32 0.0, %v3435
      %3437 = vdwg.mxu0
      %v3438 = vadd.f32 %v3173, %v3389
      %v3439 = vadd.f32 %v3175, %v3391
      %v3440 = vadd.f32 %v3178, %v3394
      %v3441 = vadd.f32 %v3180, %v3396
      %v3442 = vadd.f32 %v3183, %v3399
      %v3443 = vadd.f32 %v3185, %v3401
      %v3444 = vadd.f32 %v3188, %v3404
      %v3445 = vadd.f32 %v3190, %v3406
      %v3446 = vadd.f32 %v3193, %v3409
      %v3447 = vadd.f32 %v3195, %v3411
      %v3448 = vadd.f32 %v3198, %v3414
      %v3449 = vadd.f32 %v3200, %v3416
      %v3450 = vadd.f32 %v3203, %v3419
      %v3451 = vadd.f32 %v3205, %v3421
      %v3452 = vadd.f32 %v3208, %v3424
      %v3453 = vadd.f32 %v3210, %v3426
      %v3454 = vadd.f32 %v3213, %v3429
      %v3455 = vadd.f32 %v3215, %v3431
      %v3456 = vadd.f32 %v3218, %v3434
      %v3457 = vadd.f32 %v3220, %v3436
      %v3458 = vld [vmem:[#allocation4 + $0x18] sm:$0xf]
      %v3459 = vld [vmem:[#allocation4 + $0x1c] sm:$0xf]
      %v3460 = vld [vmem:[#allocation4 + $0x20] sm:$0xf]
      %v3461 = vld [vmem:[#allocation4 + $0x24] sm:$0xf]
      %v3462 = vld [vmem:[#allocation4 + $0x28] sm:$0xf]
      %v3463 = vld [vmem:[#allocation4 + $0x2c] sm:$0xf]
      %v3464 = vld [vmem:[#allocation4 + $0x30] sm:$0xf]
      %v3465 = vld [vmem:[#allocation4 + $0x34] sm:$0xf]
      %v3466 = vld [vmem:[#allocation4 + $0x38] sm:$0xf]
      %v3467 = vld [vmem:[#allocation4 + $0x3c] sm:$0xf]
      %v3468 = vld [vmem:[#allocation4 + $0x40] sm:$0xf]
      %v3469 = vld [vmem:[#allocation4 + $0x44] sm:$0xf]
      %v3470 = vld [vmem:[#allocation4 + $0x48] sm:$0xf]
      %v3471 = vld [vmem:[#allocation4 + $0x4c] sm:$0xf]
      %v3472 = vld [vmem:[#allocation4 + $0x50] sm:$0xf]
      %v3473 = vld [vmem:[#allocation4 + $0x54] sm:$0xf]
      %v3474 = vld [vmem:[#allocation4 + $0x58] sm:$0xf]
      %v3475 = vld [vmem:[#allocation4 + $0x5c] sm:$0xf]
      %v3476 = vld [vmem:[#allocation4 + $0x60] sm:$0xf]
      %v3477 = vld [vmem:[#allocation4 + $0x64] sm:$0xf]
      %s3478 = scalar_lea.vmem %s4, 168
      %v3479 = vld [vmem:[%s3478] sm:$0xf]
      %v3480 = vld [vmem:[%s3478 + $0x4] sm:$0xf]
      %v3481 = vld [vmem:[%s3478 + $0x8] sm:$0xf]
      %v3482 = vld [vmem:[%s3478 + $0xc] sm:$0xf]
      %v3483 = vld [vmem:[%s3478 + $0x10] sm:$0xf]
      %v3484 = vld [vmem:[%s3478 + $0x14] sm:$0xf]
      %v3485 = vld [vmem:[%s3478 + $0x18] sm:$0xf]
      %v3486 = vld [vmem:[%s3478 + $0x1c] sm:$0xf]
      %v3487 = vld [vmem:[%s3478 + $0x20] sm:$0xf]
      %v3488 = vld [vmem:[%s3478 + $0x24] sm:$0xf]
      %v3489 = vld [vmem:[%s3478 + $0x28] sm:$0xf]
      %v3490 = vld [vmem:[%s3478 + $0x2c] sm:$0xf]
      %v3491 = vld [vmem:[%s3478 + $0x30] sm:$0xf]
      %v3492 = vld [vmem:[%s3478 + $0x34] sm:$0xf]
      %v3513 = vunpack.c.l.b16 %v3458
      %v3514 = vunpack.c.l.b16 %v3459
      %v3515 = vunpack.c.l.b16 %v3460
      %v3516 = vunpack.c.l.b16 %v3461
      %v3517 = vunpack.c.l.b16 %v3462
      %v3518 = vunpack.c.l.b16 %v3463
      %v3519 = vunpack.c.l.b16 %v3464
      %v3520 = vunpack.c.l.b16 %v3465
      %v3521 = vunpack.c.l.b16 %v3466
      %v3522 = vunpack.c.l.b16 %v3467
      %v3523 = vunpack.c.l.b16 %v3468
      %v3524 = vunpack.c.l.b16 %v3469
      %v3525 = vunpack.c.l.b16 %v3470
      %v3526 = vunpack.c.l.b16 %v3471
      %v3527 = vunpack.c.l.b16 %v3472
      %v3528 = vunpack.c.l.b16 %v3473
      %v3529 = vunpack.c.l.b16 %v3474
      %v3530 = vunpack.c.l.b16 %v3475
      %v3531 = vunpack.c.l.b16 %v3476
      %v3532 = vunpack.c.l.b16 %v3477
      %v3533 = vpack.c.b16 %v3514, %v3513
      %v3534 = vpack.c.b16 %v3516, %v3515
      %v3535 = vpack.c.b16 %v3518, %v3517
      %v3536 = vpack.c.b16 %v3520, %v3519
      %v3537 = vpack.c.b16 %v3522, %v3521
      %v3538 = vpack.c.b16 %v3524, %v3523
      %v3539 = vpack.c.b16 %v3526, %v3525
      %v3540 = vpack.c.b16 %v3528, %v3527
      %v3541 = vpack.c.b16 %v3530, %v3529
      %v3542 = vpack.c.b16 %v3532, %v3531
      %v3557 = vunpack.c.l.b16 %v3479
      %v3558 = vunpack.c.l.b16 %v3480
      %v3559 = vunpack.c.l.b16 %v3481
      %v3560 = vunpack.c.l.b16 %v3482
      %v3561 = vunpack.c.l.b16 %v3483
      %v3562 = vunpack.c.l.b16 %v3484
      %v3563 = vunpack.c.l.b16 %v3485
      %v3564 = vunpack.c.l.b16 %v3486
      %v3565 = vunpack.c.l.b16 %v3487
      %v3566 = vunpack.c.l.b16 %v3488
      %v3567 = vunpack.c.l.b16 %v3489
      %v3568 = vunpack.c.l.b16 %v3490
      %v3569 = vunpack.c.l.b16 %v3491
      %v3570 = vunpack.c.l.b16 %v3492
      %v3571 = vpack.c.b16 %v3558, %v3557
      %v3572 = vpack.c.b16 %v3560, %v3559
      %v3573 = vpack.c.b16 %v3562, %v3561
      %v3574 = vpack.c.b16 %v3564, %v3563
      %v3575 = vpack.c.b16 %v3566, %v3565
      %v3576 = vpack.c.b16 %v3568, %v3567
      %v3577 = vpack.c.b16 %v3570, %v3569
      %v3586 = vsel %vm3023, %v3533, 0
      %v3589 = vsel %vm3023, %v3534, 0
      %v3592 = vsel %vm3023, %v3535, 0
      %v3595 = vsel %vm3023, %v3536, 0
      %v3598 = vsel %vm3023, %v3537, 0
      %v3601 = vsel %vm3023, %v3538, 0
      %v3604 = vsel %vm3023, %v3539, 0
      %v3607 = vsel %vm3023, %v3540, 0
      %v3610 = vsel %vm3023, %v3541, 0
      %v3613 = vsel %vm3023, %v3542, 0
      %3615 = vmatpush.bf16.msra.mxu0 0
      %3616 = vmatpush.bf16.msra.mxu0 %v3577
      %3617 = vmatpush.bf16.msra.mxu0 %v3576
      %3618 = vmatpush.bf16.msra.mxu0 %v3575
      %3619 = vmatpush.bf16.msra.mxu0 %v3574
      %3620 = vmatpush.bf16.msra.mxu0 %v3573
      %3621 = vmatpush.bf16.msra.mxu0 %v3572
      %3622 = vmatpush.bf16.msra.mxu0 %v3571
      %3623 = vmatmul.bf16.gmra.mxu0 %v3586
      %v3624 = vpop.f32.mrf.mxu0
      %v3625 = vadd.f32 0.0, %v3624
      %v3626 = vpop.f32.mrf.mxu0
      %v3627 = vadd.f32 0.0, %v3626
      %3628 = vmatmul.bf16.gmra.mxu0 %v3589
      %v3629 = vpop.f32.mrf.mxu0
      %v3630 = vadd.f32 0.0, %v3629
      %v3631 = vpop.f32.mrf.mxu0
      %v3632 = vadd.f32 0.0, %v3631
      %3633 = vmatmul.bf16.gmra.mxu0 %v3592
      %v3634 = vpop.f32.mrf.mxu0
      %v3635 = vadd.f32 0.0, %v3634
      %v3636 = vpop.f32.mrf.mxu0
      %v3637 = vadd.f32 0.0, %v3636
      %3638 = vmatmul.bf16.gmra.mxu0 %v3595
      %v3639 = vpop.f32.mrf.mxu0
      %v3640 = vadd.f32 0.0, %v3639
      %v3641 = vpop.f32.mrf.mxu0
      %v3642 = vadd.f32 0.0, %v3641
      %3643 = vmatmul.bf16.gmra.mxu0 %v3598
      %v3644 = vpop.f32.mrf.mxu0
      %v3645 = vadd.f32 0.0, %v3644
      %v3646 = vpop.f32.mrf.mxu0
      %v3647 = vadd.f32 0.0, %v3646
      %3648 = vmatmul.bf16.gmra.mxu0 %v3601
      %v3649 = vpop.f32.mrf.mxu0
      %v3650 = vadd.f32 0.0, %v3649
      %v3651 = vpop.f32.mrf.mxu0
      %v3652 = vadd.f32 0.0, %v3651
      %3653 = vmatmul.bf16.gmra.mxu0 %v3604
      %v3654 = vpop.f32.mrf.mxu0
      %v3655 = vadd.f32 0.0, %v3654
      %v3656 = vpop.f32.mrf.mxu0
      %v3657 = vadd.f32 0.0, %v3656
      %3658 = vmatmul.bf16.gmra.mxu0 %v3607
      %v3659 = vpop.f32.mrf.mxu0
      %v3660 = vadd.f32 0.0, %v3659
      %v3661 = vpop.f32.mrf.mxu0
      %v3662 = vadd.f32 0.0, %v3661
      %3663 = vmatmul.bf16.gmra.mxu0 %v3610
      %v3664 = vpop.f32.mrf.mxu0
      %v3665 = vadd.f32 0.0, %v3664
      %v3666 = vpop.f32.mrf.mxu0
      %v3667 = vadd.f32 0.0, %v3666
      %3668 = vmatmul.bf16.gmra.mxu0 %v3613
      %v3669 = vpop.f32.mrf.mxu0
      %v3670 = vadd.f32 0.0, %v3669
      %v3671 = vpop.f32.mrf.mxu0
      %v3672 = vadd.f32 0.0, %v3671
      %3673 = vdwg.mxu0
      %v3674 = vadd.f32 %v3438, %v3625
      %v3675 = vadd.f32 %v3439, %v3627
      %v3676 = vadd.f32 %v3440, %v3630
      %v3677 = vadd.f32 %v3441, %v3632
      %v3678 = vadd.f32 %v3442, %v3635
      %v3679 = vadd.f32 %v3443, %v3637
      %v3680 = vadd.f32 %v3444, %v3640
      %v3681 = vadd.f32 %v3445, %v3642
      %v3682 = vadd.f32 %v3446, %v3645
      %v3683 = vadd.f32 %v3447, %v3647
      %v3684 = vadd.f32 %v3448, %v3650
      %v3685 = vadd.f32 %v3449, %v3652
      %v3686 = vadd.f32 %v3450, %v3655
      %v3687 = vadd.f32 %v3451, %v3657
      %v3688 = vadd.f32 %v3452, %v3660
      %v3689 = vadd.f32 %v3453, %v3662
      %v3690 = vadd.f32 %v3454, %v3665
      %v3691 = vadd.f32 %v3455, %v3667
      %v3692 = vadd.f32 %v3456, %v3670
      %v3693 = vadd.f32 %v3457, %v3672
      %v3694 = vld [vmem:[%s10] sm:$0x1]
      %v3696 = vperm.slane %v3694, 0
      %v3698 = vadd.f32 %v3674, %v3696
      %v3699 = vadd.f32 %v3675, %v3696
      %v3700 = vadd.f32 %v3676, %v3696
      %v3701 = vadd.f32 %v3677, %v3696
      %v3702 = vadd.f32 %v3678, %v3696
      %v3703 = vadd.f32 %v3679, %v3696
      %v3704 = vadd.f32 %v3680, %v3696
      %v3705 = vadd.f32 %v3681, %v3696
      %v3706 = vadd.f32 %v3682, %v3696
      %v3707 = vadd.f32 %v3683, %v3696
      %v3708 = vadd.f32 %v3684, %v3696
      %v3709 = vadd.f32 %v3685, %v3696
      %v3710 = vadd.f32 %v3686, %v3696
      %v3711 = vadd.f32 %v3687, %v3696
      %v3712 = vadd.f32 %v3688, %v3696
      %v3713 = vadd.f32 %v3689, %v3696
      %v3714 = vadd.f32 %v3690, %v3696
      %v3715 = vadd.f32 %v3691, %v3696
      %v3716 = vadd.f32 %v3692, %v3696
      %v3717 = vadd.f32 %v3693, %v3696
      %v3718 = vmul.f32 %v3698, 0.01
      %v3719 = vmul.f32 %v3699, 0.01
      %v3720 = vmul.f32 %v3700, 0.01
      %v3721 = vmul.f32 %v3701, 0.01
      %v3722 = vmul.f32 %v3702, 0.01
      %v3723 = vmul.f32 %v3703, 0.01
      %v3724 = vmul.f32 %v3704, 0.01
      %v3725 = vmul.f32 %v3705, 0.01
      %v3726 = vmul.f32 %v3706, 0.01
      %v3727 = vmul.f32 %v3707, 0.01
      %v3728 = vmul.f32 %v3708, 0.01
      %v3729 = vmul.f32 %v3709, 0.01
      %v3730 = vmul.f32 %v3710, 0.01
      %v3731 = vmul.f32 %v3711, 0.01
      %v3732 = vmul.f32 %v3712, 0.01
      %v3733 = vmul.f32 %v3713, 0.01
      %v3734 = vmul.f32 %v3714, 0.01
      %v3735 = vmul.f32 %v3715, 0.01
      %v3736 = vmul.f32 %v3716, 0.01
      %v3737 = vmul.f32 %v3717, 0.01
      %v3738 = vmax.f32 %v3698, %v3718
      %v3739 = vmax.f32 %v3699, %v3719
      %v3740 = vmax.f32 %v3700, %v3720
      %v3741 = vmax.f32 %v3701, %v3721
      %v3742 = vmax.f32 %v3702, %v3722
      %v3743 = vmax.f32 %v3703, %v3723
      %v3744 = vmax.f32 %v3704, %v3724
      %v3745 = vmax.f32 %v3705, %v3725
      %v3746 = vmax.f32 %v3706, %v3726
      %v3747 = vmax.f32 %v3707, %v3727
      %v3748 = vmax.f32 %v3708, %v3728
      %v3749 = vmax.f32 %v3709, %v3729
      %v3750 = vmax.f32 %v3710, %v3730
      %v3751 = vmax.f32 %v3711, %v3731
      %v3752 = vmax.f32 %v3712, %v3732
      %v3753 = vmax.f32 %v3713, %v3733
      %v3754 = vmax.f32 %v3714, %v3734
      %v3755 = vmax.f32 %v3715, %v3735
      %v3756 = vmax.f32 %v3716, %v3736
      %v3757 = vmax.f32 %v3717, %v3737
      %v3758 = vpack.c.bf16 %v3738, %v3738
      %v3759 = vpack.c.bf16 %v3739, %v3739
      %v3760 = vpack.c.bf16 %v3740, %v3740
      %v3761 = vpack.c.bf16 %v3741, %v3741
      %v3762 = vpack.c.bf16 %v3742, %v3742
      %v3763 = vpack.c.bf16 %v3743, %v3743
      %v3764 = vpack.c.bf16 %v3744, %v3744
      %v3765 = vpack.c.bf16 %v3745, %v3745
      %v3766 = vpack.c.bf16 %v3746, %v3746
      %v3767 = vpack.c.bf16 %v3747, %v3747
      %v3768 = vpack.c.bf16 %v3748, %v3748
      %v3769 = vpack.c.bf16 %v3749, %v3749
      %v3770 = vpack.c.bf16 %v3750, %v3750
      %v3771 = vpack.c.bf16 %v3751, %v3751
      %v3772 = vpack.c.bf16 %v3752, %v3752
      %v3773 = vpack.c.bf16 %v3753, %v3753
      %v3774 = vpack.c.bf16 %v3754, %v3754
      %v3775 = vpack.c.bf16 %v3755, %v3755
      %v3776 = vpack.c.bf16 %v3756, %v3756
      %v3777 = vpack.c.bf16 %v3757, %v3757
      %3778 = vst.msk [vmem:[#allocation5 + $0x18] sm:$0xf] %vm455, %v3758
      %3779 = vst.msk [vmem:[#allocation5 + $0x1c] sm:$0xf] %vm455, %v3759
      %3780 = vst.msk [vmem:[#allocation5 + $0x20] sm:$0xf] %vm455, %v3760
      %3781 = vst.msk [vmem:[#allocation5 + $0x24] sm:$0xf] %vm455, %v3761
      %3782 = vst.msk [vmem:[#allocation5 + $0x28] sm:$0xf] %vm455, %v3762
      %3783 = vst.msk [vmem:[#allocation5 + $0x2c] sm:$0xf] %vm455, %v3763
      %3784 = vst.msk [vmem:[#allocation5 + $0x30] sm:$0xf] %vm455, %v3764
      %3785 = vst.msk [vmem:[#allocation5 + $0x34] sm:$0xf] %vm455, %v3765
      %3786 = vst.msk [vmem:[#allocation5 + $0x38] sm:$0xf] %vm455, %v3766
      %3787 = vst.msk [vmem:[#allocation5 + $0x3c] sm:$0xf] %vm455, %v3767
      %3788 = vst.msk [vmem:[#allocation5 + $0x40] sm:$0xf] %vm455, %v3768
      %3789 = vst.msk [vmem:[#allocation5 + $0x44] sm:$0xf] %vm455, %v3769
      %3790 = vst.msk [vmem:[#allocation5 + $0x48] sm:$0xf] %vm455, %v3770
      %3791 = vst.msk [vmem:[#allocation5 + $0x4c] sm:$0xf] %vm455, %v3771
      %3792 = vst.msk [vmem:[#allocation5 + $0x50] sm:$0xf] %vm455, %v3772
      %3793 = vst.msk [vmem:[#allocation5 + $0x54] sm:$0xf] %vm455, %v3773
      %3794 = vst.msk [vmem:[#allocation5 + $0x58] sm:$0xf] %vm455, %v3774
      %3795 = vst.msk [vmem:[#allocation5 + $0x5c] sm:$0xf] %vm455, %v3775
      %3796 = vst.msk [vmem:[#allocation5 + $0x60] sm:$0xf] %vm455, %v3776
      %3797 = vst.msk [vmem:[#allocation5 + $0x64] sm:$0xf] %vm455, %v3777
      %v3798 = vld [vmem:[#allocation5] sm:$0xf]
      %v3799 = vld [vmem:[#allocation5 + $0x4] sm:$0xf]
      %v3800 = vld [vmem:[#allocation5 + $0x8] sm:$0xf]
      %v3801 = vld [vmem:[#allocation5 + $0xc] sm:$0xf]
      %v3802 = vld [vmem:[#allocation5 + $0x10] sm:$0xf]
      %v3803 = vld [vmem:[#allocation5 + $0x14] sm:$0xf]
      %v3804 = vld [vmem:[#allocation5 + $0x18] sm:$0xf]
      %v3805 = vld [vmem:[#allocation5 + $0x1c] sm:$0xf]
      %v3806 = vld [vmem:[#allocation5 + $0x20] sm:$0xf]
      %v3807 = vld [vmem:[#allocation5 + $0x24] sm:$0xf]
      %v3808 = vld [vmem:[#allocation5 + $0x28] sm:$0xf]
      %v3809 = vld [vmem:[#allocation5 + $0x2c] sm:$0xf]
      %v3810 = vld [vmem:[#allocation5 + $0x30] sm:$0xf]
      %v3811 = vld [vmem:[#allocation5 + $0x34] sm:$0xf]
      %v3812 = vld [vmem:[#allocation5 + $0x38] sm:$0xf]
      %v3813 = vld [vmem:[#allocation5 + $0x3c] sm:$0xf]
      %v3814 = vld [vmem:[#allocation5 + $0x40] sm:$0xf]
      %v3815 = vld [vmem:[#allocation5 + $0x44] sm:$0xf]
      %v3816 = vld [vmem:[#allocation5 + $0x48] sm:$0xf]
      %v3817 = vld [vmem:[#allocation5 + $0x4c] sm:$0xf]
      %v3818 = vld [vmem:[#allocation5 + $0x50] sm:$0xf]
      %v3819 = vld [vmem:[#allocation5 + $0x54] sm:$0xf]
      %v3820 = vld [vmem:[#allocation5 + $0x58] sm:$0xf]
      %v3821 = vld [vmem:[#allocation5 + $0x5c] sm:$0xf]
      %v3822 = vld [vmem:[#allocation5 + $0x60] sm:$0xf]
      %v3823 = vld [vmem:[#allocation5 + $0x64] sm:$0xf]
      %v3824 = vld [vmem:[%s5] sm:$0xf]
      %v3825 = vld [vmem:[%s5 + $0x4] sm:$0xf]
      %v3826 = vld [vmem:[%s5 + $0x8] sm:$0xf]
      %v3827 = vld [vmem:[%s5 + $0xc] sm:$0xf]
      %v3828 = vld [vmem:[%s5 + $0x10] sm:$0xf]
      %v3829 = vld [vmem:[%s5 + $0x14] sm:$0xf]
      %v3830 = vld [vmem:[%s5 + $0x18] sm:$0xf]
      %v3831 = vld [vmem:[%s5 + $0x1c] sm:$0xf]
      %v3832 = vld [vmem:[%s5 + $0x20] sm:$0xf]
      %v3833 = vld [vmem:[%s5 + $0x24] sm:$0xf]
      %v3834 = vld [vmem:[#allocation5 + $0x68] sm:$0xf]
      %v3835 = vld [vmem:[#allocation5 + $0x6c] sm:$0xf]
      %s3836 = scalar_lea.vmem %s5, 40
      %v3837 = vld [vmem:[%s3836] sm:$0xf]
      %v3838 = vld [vmem:[%s3836 + $0x4] sm:$0xf]
      %v3839 = vld [vmem:[%s3836 + $0x8] sm:$0xf]
      %v3840 = vld [vmem:[%s3836 + $0xc] sm:$0xf]
      %v3841 = vld [vmem:[%s3836 + $0x10] sm:$0xf]
      %v3842 = vld [vmem:[%s3836 + $0x14] sm:$0xf]
      %v3843 = vld [vmem:[%s3836 + $0x18] sm:$0xf]
      %v3844 = vld [vmem:[%s3836 + $0x1c] sm:$0xf]
      %v3845 = vld [vmem:[%s3836 + $0x20] sm:$0xf]
      %v3846 = vld [vmem:[%s3836 + $0x24] sm:$0xf]
      %v3873 = vunpack.c.l.b16 %v3800
      %v3874 = vunpack.c.l.b16 %v3801
      %v3875 = vunpack.c.l.b16 %v3802
      %v3876 = vunpack.c.l.b16 %v3803
      %v3877 = vunpack.c.l.b16 %v3804
      %v3878 = vunpack.c.l.b16 %v3805
      %v3879 = vunpack.c.l.b16 %v3806
      %v3880 = vunpack.c.l.b16 %v3807
      %v3881 = vunpack.c.l.b16 %v3808
      %v3882 = vunpack.c.l.b16 %v3809
      %v3883 = vunpack.c.l.b16 %v3810
      %v3884 = vunpack.c.l.b16 %v3811
      %v3885 = vunpack.c.l.b16 %v3812
      %v3886 = vunpack.c.l.b16 %v3813
      %v3887 = vunpack.c.l.b16 %v3814
      %v3888 = vunpack.c.l.b16 %v3815
      %v3889 = vunpack.c.l.b16 %v3816
      %v3890 = vunpack.c.l.b16 %v3817
      %v3891 = vunpack.c.l.b16 %v3818
      %v3892 = vunpack.c.l.b16 %v3819
      %v3893 = vunpack.c.l.b16 %v3820
      %v3894 = vunpack.c.l.b16 %v3821
      %v3895 = vunpack.c.l.b16 %v3822
      %v3896 = vunpack.c.l.b16 %v3823
      %v3897 = vunpack.c.l.b16 %v3834
      %v3898 = vunpack.c.l.b16 %v3835
      %v3899 = vpack.c.b16 %v3874, %v3873
      %v3900 = vpack.c.b16 %v3876, %v3875
      %v3901 = vpack.c.b16 %v3878, %v3877
      %v3902 = vpack.c.b16 %v3880, %v3879
      %v3903 = vpack.c.b16 %v3882, %v3881
      %v3904 = vpack.c.b16 %v3884, %v3883
      %v3905 = vpack.c.b16 %v3886, %v3885
      %v3906 = vpack.c.b16 %v3888, %v3887
      %v3907 = vpack.c.b16 %v3890, %v3889
      %v3908 = vpack.c.b16 %v3892, %v3891
      %v3909 = vpack.c.b16 %v3894, %v3893
      %v3910 = vpack.c.b16 %v3896, %v3895
      %v3911 = vpack.c.b16 %v3898, %v3897
      %v3922 = vunpack.c.l.b16 %v3837
      %v3923 = vunpack.c.l.b16 %v3838
      %v3924 = vunpack.c.l.b16 %v3839
      %v3925 = vunpack.c.l.b16 %v3840
      %v3926 = vunpack.c.l.b16 %v3841
      %v3927 = vunpack.c.l.b16 %v3842
      %v3928 = vunpack.c.l.b16 %v3843
      %v3929 = vunpack.c.l.b16 %v3844
      %v3930 = vunpack.c.l.b16 %v3845
      %v3931 = vunpack.c.l.b16 %v3846
      %v3932 = vpack.c.b16 %v3923, %v3922
      %v3933 = vpack.c.b16 %v3925, %v3924
      %v3934 = vpack.c.b16 %v3927, %v3926
      %v3935 = vpack.c.b16 %v3929, %v3928
      %v3936 = vpack.c.b16 %v3931, %v3930
      %v3943 = vsel %vm2320, %v3899, 0
      %v3946 = vsel %vm2320, %v3900, 0
      %v3949 = vsel %vm2320, %v3901, 0
      %v3952 = vsel %vm2320, %v3902, 0
      %v3955 = vsel %vm2320, %v3903, 0
      %v3958 = vsel %vm2320, %v3904, 0
      %v3961 = vsel %vm2320, %v3905, 0
      %v3964 = vsel %vm2320, %v3906, 0
      %v3967 = vsel %vm2320, %v3907, 0
      %v3970 = vsel %vm2320, %v3908, 0
      %v3973 = vsel %vm2320, %v3909, 0
      %v3976 = vsel %vm2320, %v3910, 0
      %v3979 = vsel %vm2320, %v3911, 0
      %3981 = vmatpush.bf16.msra.mxu0 0
      %3982 = vmatpush.bf16.msra.mxu0 0
      %3983 = vmatpush.bf16.msra.mxu0 0
      %3984 = vmatpush.bf16.msra.mxu0 %v3936
      %3985 = vmatpush.bf16.msra.mxu0 %v3935
      %3986 = vmatpush.bf16.msra.mxu0 %v3934
      %3987 = vmatpush.bf16.msra.mxu0 %v3933
      %3988 = vmatpush.bf16.msra.mxu0 %v3932
      %3989 = vmatmul.bf16.gmra.mxu0 %v3943
      %v3990 = vpop.f32.mrf.mxu0
      %v3991 = vadd.f32 0.0, %v3990
      %v3992 = vpop.f32.mrf.mxu0
      %v3993 = vadd.f32 0.0, %v3992
      %3994 = vmatmul.bf16.gmra.mxu0 %v3946
      %v3995 = vpop.f32.mrf.mxu0
      %v3996 = vadd.f32 0.0, %v3995
      %v3997 = vpop.f32.mrf.mxu0
      %v3998 = vadd.f32 0.0, %v3997
      %3999 = vmatmul.bf16.gmra.mxu0 %v3949
      %v4000 = vpop.f32.mrf.mxu0
      %v4001 = vadd.f32 0.0, %v4000
      %v4002 = vpop.f32.mrf.mxu0
      %v4003 = vadd.f32 0.0, %v4002
      %4004 = vmatmul.bf16.gmra.mxu0 %v3952
      %v4005 = vpop.f32.mrf.mxu0
      %v4006 = vadd.f32 0.0, %v4005
      %v4007 = vpop.f32.mrf.mxu0
      %v4008 = vadd.f32 0.0, %v4007
      %4009 = vmatmul.bf16.gmra.mxu0 %v3955
      %v4010 = vpop.f32.mrf.mxu0
      %v4011 = vadd.f32 0.0, %v4010
      %v4012 = vpop.f32.mrf.mxu0
      %v4013 = vadd.f32 0.0, %v4012
      %4014 = vmatmul.bf16.gmra.mxu0 %v3958
      %v4015 = vpop.f32.mrf.mxu0
      %v4016 = vadd.f32 0.0, %v4015
      %v4017 = vpop.f32.mrf.mxu0
      %v4018 = vadd.f32 0.0, %v4017
      %4019 = vmatmul.bf16.gmra.mxu0 %v3961
      %v4020 = vpop.f32.mrf.mxu0
      %v4021 = vadd.f32 0.0, %v4020
      %v4022 = vpop.f32.mrf.mxu0
      %v4023 = vadd.f32 0.0, %v4022
      %4024 = vmatmul.bf16.gmra.mxu0 %v3964
      %v4025 = vpop.f32.mrf.mxu0
      %v4026 = vadd.f32 0.0, %v4025
      %v4027 = vpop.f32.mrf.mxu0
      %v4028 = vadd.f32 0.0, %v4027
      %4029 = vmatmul.bf16.gmra.mxu0 %v3967
      %v4030 = vpop.f32.mrf.mxu0
      %v4031 = vadd.f32 0.0, %v4030
      %v4032 = vpop.f32.mrf.mxu0
      %v4033 = vadd.f32 0.0, %v4032
      %4034 = vmatmul.bf16.gmra.mxu0 %v3970
      %v4035 = vpop.f32.mrf.mxu0
      %v4036 = vadd.f32 0.0, %v4035
      %v4037 = vpop.f32.mrf.mxu0
      %v4038 = vadd.f32 0.0, %v4037
      %4039 = vmatmul.bf16.gmra.mxu0 %v3973
      %v4040 = vpop.f32.mrf.mxu0
      %v4041 = vadd.f32 0.0, %v4040
      %v4042 = vpop.f32.mrf.mxu0
      %v4043 = vadd.f32 0.0, %v4042
      %4044 = vmatmul.bf16.gmra.mxu0 %v3976
      %v4045 = vpop.f32.mrf.mxu0
      %v4046 = vadd.f32 0.0, %v4045
      %v4047 = vpop.f32.mrf.mxu0
      %v4048 = vadd.f32 0.0, %v4047
      %4049 = vmatmul.bf16.gmra.mxu0 %v3979
      %v4050 = vpop.f32.mrf.mxu0
      %v4051 = vadd.f32 0.0, %v4050
      %v4052 = vpop.f32.mrf.mxu0
      %v4053 = vadd.f32 0.0, %v4052
      %4054 = vdwg.mxu0
      %v4057 = vunpack.c.l.b16 %v3798
      %v4058 = vunpack.c.l.b16 %v3799
      %v4059 = vpack.c.b16 %v4058, %v4057
      %v4070 = vunpack.c.l.b16 %v3824
      %v4071 = vunpack.c.l.b16 %v3825
      %v4072 = vunpack.c.l.b16 %v3826
      %v4073 = vunpack.c.l.b16 %v3827
      %v4074 = vunpack.c.l.b16 %v3828
      %v4075 = vunpack.c.l.b16 %v3829
      %v4076 = vunpack.c.l.b16 %v3830
      %v4077 = vunpack.c.l.b16 %v3831
      %v4078 = vunpack.c.l.b16 %v3832
      %v4079 = vunpack.c.l.b16 %v3833
      %v4080 = vpack.c.b16 %v4071, %v4070
      %v4081 = vpack.c.b16 %v4073, %v4072
      %v4082 = vpack.c.b16 %v4075, %v4074
      %v4083 = vpack.c.b16 %v4077, %v4076
      %v4084 = vpack.c.b16 %v4079, %v4078
      %v4091 = vsel %vm2320, %v4059, 0
      %4093 = vmatpush.bf16.msra.mxu0 0
      %4094 = vmatpush.bf16.msra.mxu0 0
      %4095 = vmatpush.bf16.msra.mxu0 0
      %4096 = vmatpush.bf16.msra.mxu0 %v4084
      %4097 = vmatpush.bf16.msra.mxu0 %v4083
      %4098 = vmatpush.bf16.msra.mxu0 %v4082
      %4099 = vmatpush.bf16.msra.mxu0 %v4081
      %4100 = vmatpush.bf16.msra.mxu0 %v4080
      %4101 = vmatmul.bf16.gmra.mxu0 %v4091
      %v4102 = vpop.f32.mrf.mxu0
      %v4103 = vadd.f32 %v3991, %v4102
      %v4104 = vpop.f32.mrf.mxu0
      %v4105 = vadd.f32 %v3993, %v4104
      %4106 = vmatmul.bf16.gmra.mxu0 %v3943
      %v4107 = vpop.f32.mrf.mxu0
      %v4108 = vadd.f32 %v3996, %v4107
      %v4109 = vpop.f32.mrf.mxu0
      %v4110 = vadd.f32 %v3998, %v4109
      %4111 = vmatmul.bf16.gmra.mxu0 %v3946
      %v4112 = vpop.f32.mrf.mxu0
      %v4113 = vadd.f32 %v4001, %v4112
      %v4114 = vpop.f32.mrf.mxu0
      %v4115 = vadd.f32 %v4003, %v4114
      %4116 = vmatmul.bf16.gmra.mxu0 %v3949
      %v4117 = vpop.f32.mrf.mxu0
      %v4118 = vadd.f32 %v4006, %v4117
      %v4119 = vpop.f32.mrf.mxu0
      %v4120 = vadd.f32 %v4008, %v4119
      %4121 = vmatmul.bf16.gmra.mxu0 %v3952
      %v4122 = vpop.f32.mrf.mxu0
      %v4123 = vadd.f32 %v4011, %v4122
      %v4124 = vpop.f32.mrf.mxu0
      %v4125 = vadd.f32 %v4013, %v4124
      %4126 = vmatmul.bf16.gmra.mxu0 %v3955
      %v4127 = vpop.f32.mrf.mxu0
      %v4128 = vadd.f32 %v4016, %v4127
      %v4129 = vpop.f32.mrf.mxu0
      %v4130 = vadd.f32 %v4018, %v4129
      %4131 = vmatmul.bf16.gmra.mxu0 %v3958
      %v4132 = vpop.f32.mrf.mxu0
      %v4133 = vadd.f32 %v4021, %v4132
      %v4134 = vpop.f32.mrf.mxu0
      %v4135 = vadd.f32 %v4023, %v4134
      %4136 = vmatmul.bf16.gmra.mxu0 %v3961
      %v4137 = vpop.f32.mrf.mxu0
      %v4138 = vadd.f32 %v4026, %v4137
      %v4139 = vpop.f32.mrf.mxu0
      %v4140 = vadd.f32 %v4028, %v4139
      %4141 = vmatmul.bf16.gmra.mxu0 %v3964
      %v4142 = vpop.f32.mrf.mxu0
      %v4143 = vadd.f32 %v4031, %v4142
      %v4144 = vpop.f32.mrf.mxu0
      %v4145 = vadd.f32 %v4033, %v4144
      %4146 = vmatmul.bf16.gmra.mxu0 %v3967
      %v4147 = vpop.f32.mrf.mxu0
      %v4148 = vadd.f32 %v4036, %v4147
      %v4149 = vpop.f32.mrf.mxu0
      %v4150 = vadd.f32 %v4038, %v4149
      %4151 = vmatmul.bf16.gmra.mxu0 %v3970
      %v4152 = vpop.f32.mrf.mxu0
      %v4153 = vadd.f32 %v4041, %v4152
      %v4154 = vpop.f32.mrf.mxu0
      %v4155 = vadd.f32 %v4043, %v4154
      %4156 = vmatmul.bf16.gmra.mxu0 %v3973
      %v4157 = vpop.f32.mrf.mxu0
      %v4158 = vadd.f32 %v4046, %v4157
      %v4159 = vpop.f32.mrf.mxu0
      %v4160 = vadd.f32 %v4048, %v4159
      %4161 = vmatmul.bf16.gmra.mxu0 %v3976
      %v4162 = vpop.f32.mrf.mxu0
      %v4163 = vadd.f32 %v4051, %v4162
      %v4164 = vpop.f32.mrf.mxu0
      %v4165 = vadd.f32 %v4053, %v4164
      %4166 = vdwg.mxu0
      %v4167 = vld [vmem:[#allocation5 + $0x10] sm:$0xf]
      %v4168 = vld [vmem:[#allocation5 + $0x14] sm:$0xf]
      %v4169 = vld [vmem:[#allocation5 + $0x18] sm:$0xf]
      %v4170 = vld [vmem:[#allocation5 + $0x1c] sm:$0xf]
      %v4171 = vld [vmem:[#allocation5 + $0x20] sm:$0xf]
      %v4172 = vld [vmem:[#allocation5 + $0x24] sm:$0xf]
      %v4173 = vld [vmem:[#allocation5 + $0x28] sm:$0xf]
      %v4174 = vld [vmem:[#allocation5 + $0x2c] sm:$0xf]
      %v4175 = vld [vmem:[#allocation5 + $0x30] sm:$0xf]
      %v4176 = vld [vmem:[#allocation5 + $0x34] sm:$0xf]
      %v4177 = vld [vmem:[#allocation5 + $0x38] sm:$0xf]
      %v4178 = vld [vmem:[#allocation5 + $0x3c] sm:$0xf]
      %v4179 = vld [vmem:[#allocation5 + $0x40] sm:$0xf]
      %v4180 = vld [vmem:[#allocation5 + $0x44] sm:$0xf]
      %v4181 = vld [vmem:[#allocation5 + $0x48] sm:$0xf]
      %v4182 = vld [vmem:[#allocation5 + $0x4c] sm:$0xf]
      %v4183 = vld [vmem:[#allocation5 + $0x50] sm:$0xf]
      %v4184 = vld [vmem:[#allocation5 + $0x54] sm:$0xf]
      %v4185 = vld [vmem:[#allocation5 + $0x58] sm:$0xf]
      %v4186 = vld [vmem:[#allocation5 + $0x5c] sm:$0xf]
      %v4187 = vld [vmem:[#allocation5 + $0x60] sm:$0xf]
      %v4188 = vld [vmem:[#allocation5 + $0x64] sm:$0xf]
      %v4189 = vld [vmem:[#allocation5 + $0x68] sm:$0xf]
      %v4190 = vld [vmem:[#allocation5 + $0x6c] sm:$0xf]
      %v4191 = vld [vmem:[#allocation5 + $0x70] sm:$0xf]
      %v4192 = vld [vmem:[#allocation5 + $0x74] sm:$0xf]
      %s4193 = scalar_lea.vmem %s5, 80
      %v4194 = vld [vmem:[%s4193] sm:$0xf]
      %v4195 = vld [vmem:[%s4193 + $0x4] sm:$0xf]
      %v4196 = vld [vmem:[%s4193 + $0x8] sm:$0xf]
      %v4197 = vld [vmem:[%s4193 + $0xc] sm:$0xf]
      %v4198 = vld [vmem:[%s4193 + $0x10] sm:$0xf]
      %v4199 = vld [vmem:[%s4193 + $0x14] sm:$0xf]
      %v4200 = vld [vmem:[%s4193 + $0x18] sm:$0xf]
      %v4201 = vld [vmem:[%s4193 + $0x1c] sm:$0xf]
      %v4202 = vld [vmem:[%s4193 + $0x20] sm:$0xf]
      %v4203 = vld [vmem:[%s4193 + $0x24] sm:$0xf]
      %v4230 = vunpack.c.l.b16 %v4167
      %v4231 = vunpack.c.l.b16 %v4168
      %v4232 = vunpack.c.l.b16 %v4169
      %v4233 = vunpack.c.l.b16 %v4170
      %v4234 = vunpack.c.l.b16 %v4171
      %v4235 = vunpack.c.l.b16 %v4172
      %v4236 = vunpack.c.l.b16 %v4173
      %v4237 = vunpack.c.l.b16 %v4174
      %v4238 = vunpack.c.l.b16 %v4175
      %v4239 = vunpack.c.l.b16 %v4176
      %v4240 = vunpack.c.l.b16 %v4177
      %v4241 = vunpack.c.l.b16 %v4178
      %v4242 = vunpack.c.l.b16 %v4179
      %v4243 = vunpack.c.l.b16 %v4180
      %v4244 = vunpack.c.l.b16 %v4181
      %v4245 = vunpack.c.l.b16 %v4182
      %v4246 = vunpack.c.l.b16 %v4183
      %v4247 = vunpack.c.l.b16 %v4184
      %v4248 = vunpack.c.l.b16 %v4185
      %v4249 = vunpack.c.l.b16 %v4186
      %v4250 = vunpack.c.l.b16 %v4187
      %v4251 = vunpack.c.l.b16 %v4188
      %v4252 = vunpack.c.l.b16 %v4189
      %v4253 = vunpack.c.l.b16 %v4190
      %v4254 = vunpack.c.l.b16 %v4191
      %v4255 = vunpack.c.l.b16 %v4192
      %v4256 = vpack.c.b16 %v4231, %v4230
      %v4257 = vpack.c.b16 %v4233, %v4232
      %v4258 = vpack.c.b16 %v4235, %v4234
      %v4259 = vpack.c.b16 %v4237, %v4236
      %v4260 = vpack.c.b16 %v4239, %v4238
      %v4261 = vpack.c.b16 %v4241, %v4240
      %v4262 = vpack.c.b16 %v4243, %v4242
      %v4263 = vpack.c.b16 %v4245, %v4244
      %v4264 = vpack.c.b16 %v4247, %v4246
      %v4265 = vpack.c.b16 %v4249, %v4248
      %v4266 = vpack.c.b16 %v4251, %v4250
      %v4267 = vpack.c.b16 %v4253, %v4252
      %v4268 = vpack.c.b16 %v4255, %v4254
      %v4279 = vunpack.c.l.b16 %v4194
      %v4280 = vunpack.c.l.b16 %v4195
      %v4281 = vunpack.c.l.b16 %v4196
      %v4282 = vunpack.c.l.b16 %v4197
      %v4283 = vunpack.c.l.b16 %v4198
      %v4284 = vunpack.c.l.b16 %v4199
      %v4285 = vunpack.c.l.b16 %v4200
      %v4286 = vunpack.c.l.b16 %v4201
      %v4287 = vunpack.c.l.b16 %v4202
      %v4288 = vunpack.c.l.b16 %v4203
      %v4289 = vpack.c.b16 %v4280, %v4279
      %v4290 = vpack.c.b16 %v4282, %v4281
      %v4291 = vpack.c.b16 %v4284, %v4283
      %v4292 = vpack.c.b16 %v4286, %v4285
      %v4293 = vpack.c.b16 %v4288, %v4287
      %v4300 = vsel %vm2320, %v4256, 0
      %v4303 = vsel %vm2320, %v4257, 0
      %v4306 = vsel %vm2320, %v4258, 0
      %v4309 = vsel %vm2320, %v4259, 0
      %v4312 = vsel %vm2320, %v4260, 0
      %v4315 = vsel %vm2320, %v4261, 0
      %v4318 = vsel %vm2320, %v4262, 0
      %v4321 = vsel %vm2320, %v4263, 0
      %v4324 = vsel %vm2320, %v4264, 0
      %v4327 = vsel %vm2320, %v4265, 0
      %v4330 = vsel %vm2320, %v4266, 0
      %v4333 = vsel %vm2320, %v4267, 0
      %v4336 = vsel %vm2320, %v4268, 0
      %4338 = vmatpush.bf16.msra.mxu0 0
      %4339 = vmatpush.bf16.msra.mxu0 0
      %4340 = vmatpush.bf16.msra.mxu0 0
      %4341 = vmatpush.bf16.msra.mxu0 %v4293
      %4342 = vmatpush.bf16.msra.mxu0 %v4292
      %4343 = vmatpush.bf16.msra.mxu0 %v4291
      %4344 = vmatpush.bf16.msra.mxu0 %v4290
      %4345 = vmatpush.bf16.msra.mxu0 %v4289
      %4346 = vmatmul.bf16.gmra.mxu0 %v4300
      %v4347 = vpop.f32.mrf.mxu0
      %v4348 = vadd.f32 0.0, %v4347
      %v4349 = vpop.f32.mrf.mxu0
      %v4350 = vadd.f32 0.0, %v4349
      %4351 = vmatmul.bf16.gmra.mxu0 %v4303
      %v4352 = vpop.f32.mrf.mxu0
      %v4353 = vadd.f32 0.0, %v4352
      %v4354 = vpop.f32.mrf.mxu0
      %v4355 = vadd.f32 0.0, %v4354
      %4356 = vmatmul.bf16.gmra.mxu0 %v4306
      %v4357 = vpop.f32.mrf.mxu0
      %v4358 = vadd.f32 0.0, %v4357
      %v4359 = vpop.f32.mrf.mxu0
      %v4360 = vadd.f32 0.0, %v4359
      %4361 = vmatmul.bf16.gmra.mxu0 %v4309
      %v4362 = vpop.f32.mrf.mxu0
      %v4363 = vadd.f32 0.0, %v4362
      %v4364 = vpop.f32.mrf.mxu0
      %v4365 = vadd.f32 0.0, %v4364
      %4366 = vmatmul.bf16.gmra.mxu0 %v4312
      %v4367 = vpop.f32.mrf.mxu0
      %v4368 = vadd.f32 0.0, %v4367
      %v4369 = vpop.f32.mrf.mxu0
      %v4370 = vadd.f32 0.0, %v4369
      %4371 = vmatmul.bf16.gmra.mxu0 %v4315
      %v4372 = vpop.f32.mrf.mxu0
      %v4373 = vadd.f32 0.0, %v4372
      %v4374 = vpop.f32.mrf.mxu0
      %v4375 = vadd.f32 0.0, %v4374
      %4376 = vmatmul.bf16.gmra.mxu0 %v4318
      %v4377 = vpop.f32.mrf.mxu0
      %v4378 = vadd.f32 0.0, %v4377
      %v4379 = vpop.f32.mrf.mxu0
      %v4380 = vadd.f32 0.0, %v4379
      %4381 = vmatmul.bf16.gmra.mxu0 %v4321
      %v4382 = vpop.f32.mrf.mxu0
      %v4383 = vadd.f32 0.0, %v4382
      %v4384 = vpop.f32.mrf.mxu0
      %v4385 = vadd.f32 0.0, %v4384
      %4386 = vmatmul.bf16.gmra.mxu0 %v4324
      %v4387 = vpop.f32.mrf.mxu0
      %v4388 = vadd.f32 0.0, %v4387
      %v4389 = vpop.f32.mrf.mxu0
      %v4390 = vadd.f32 0.0, %v4389
      %4391 = vmatmul.bf16.gmra.mxu0 %v4327
      %v4392 = vpop.f32.mrf.mxu0
      %v4393 = vadd.f32 0.0, %v4392
      %v4394 = vpop.f32.mrf.mxu0
      %v4395 = vadd.f32 0.0, %v4394
      %4396 = vmatmul.bf16.gmra.mxu0 %v4330
      %v4397 = vpop.f32.mrf.mxu0
      %v4398 = vadd.f32 0.0, %v4397
      %v4399 = vpop.f32.mrf.mxu0
      %v4400 = vadd.f32 0.0, %v4399
      %4401 = vmatmul.bf16.gmra.mxu0 %v4333
      %v4402 = vpop.f32.mrf.mxu0
      %v4403 = vadd.f32 0.0, %v4402
      %v4404 = vpop.f32.mrf.mxu0
      %v4405 = vadd.f32 0.0, %v4404
      %4406 = vmatmul.bf16.gmra.mxu0 %v4336
      %v4407 = vpop.f32.mrf.mxu0
      %v4408 = vadd.f32 0.0, %v4407
      %v4409 = vpop.f32.mrf.mxu0
      %v4410 = vadd.f32 0.0, %v4409
      %4411 = vdwg.mxu0
      %v4412 = vadd.f32 %v4103, %v4348
      %v4413 = vadd.f32 %v4105, %v4350
      %v4414 = vadd.f32 %v4108, %v4353
      %v4415 = vadd.f32 %v4110, %v4355
      %v4416 = vadd.f32 %v4113, %v4358
      %v4417 = vadd.f32 %v4115, %v4360
      %v4418 = vadd.f32 %v4118, %v4363
      %v4419 = vadd.f32 %v4120, %v4365
      %v4420 = vadd.f32 %v4123, %v4368
      %v4421 = vadd.f32 %v4125, %v4370
      %v4422 = vadd.f32 %v4128, %v4373
      %v4423 = vadd.f32 %v4130, %v4375
      %v4424 = vadd.f32 %v4133, %v4378
      %v4425 = vadd.f32 %v4135, %v4380
      %v4426 = vadd.f32 %v4138, %v4383
      %v4427 = vadd.f32 %v4140, %v4385
      %v4428 = vadd.f32 %v4143, %v4388
      %v4429 = vadd.f32 %v4145, %v4390
      %v4430 = vadd.f32 %v4148, %v4393
      %v4431 = vadd.f32 %v4150, %v4395
      %v4432 = vadd.f32 %v4153, %v4398
      %v4433 = vadd.f32 %v4155, %v4400
      %v4434 = vadd.f32 %v4158, %v4403
      %v4435 = vadd.f32 %v4160, %v4405
      %v4436 = vadd.f32 %v4163, %v4408
      %v4437 = vadd.f32 %v4165, %v4410
      %v4438 = vld [vmem:[#allocation5 + $0x18] sm:$0xf]
      %v4439 = vld [vmem:[#allocation5 + $0x1c] sm:$0xf]
      %v4440 = vld [vmem:[#allocation5 + $0x20] sm:$0xf]
      %v4441 = vld [vmem:[#allocation5 + $0x24] sm:$0xf]
      %v4442 = vld [vmem:[#allocation5 + $0x28] sm:$0xf]
      %v4443 = vld [vmem:[#allocation5 + $0x2c] sm:$0xf]
      %v4444 = vld [vmem:[#allocation5 + $0x30] sm:$0xf]
      %v4445 = vld [vmem:[#allocation5 + $0x34] sm:$0xf]
      %v4446 = vld [vmem:[#allocation5 + $0x38] sm:$0xf]
      %v4447 = vld [vmem:[#allocation5 + $0x3c] sm:$0xf]
      %v4448 = vld [vmem:[#allocation5 + $0x40] sm:$0xf]
      %v4449 = vld [vmem:[#allocation5 + $0x44] sm:$0xf]
      %v4450 = vld [vmem:[#allocation5 + $0x48] sm:$0xf]
      %v4451 = vld [vmem:[#allocation5 + $0x4c] sm:$0xf]
      %v4452 = vld [vmem:[#allocation5 + $0x50] sm:$0xf]
      %v4453 = vld [vmem:[#allocation5 + $0x54] sm:$0xf]
      %v4454 = vld [vmem:[#allocation5 + $0x58] sm:$0xf]
      %v4455 = vld [vmem:[#allocation5 + $0x5c] sm:$0xf]
      %v4456 = vld [vmem:[#allocation5 + $0x60] sm:$0xf]
      %v4457 = vld [vmem:[#allocation5 + $0x64] sm:$0xf]
      %v4458 = vld [vmem:[#allocation5 + $0x68] sm:$0xf]
      %v4459 = vld [vmem:[#allocation5 + $0x6c] sm:$0xf]
      %v4460 = vld [vmem:[#allocation5 + $0x70] sm:$0xf]
      %v4461 = vld [vmem:[#allocation5 + $0x74] sm:$0xf]
      %v4462 = vld [vmem:[#allocation5 + $0x78] sm:$0xf]
      %v4463 = vld [vmem:[#allocation5 + $0x7c] sm:$0xf]
      %s4464 = scalar_lea.vmem %s5, 120
      %v4465 = vld [vmem:[%s4464] sm:$0xf]
      %v4466 = vld [vmem:[%s4464 + $0x4] sm:$0xf]
      %v4467 = vld [vmem:[%s4464 + $0x8] sm:$0xf]
      %v4468 = vld [vmem:[%s4464 + $0xc] sm:$0xf]
      %v4469 = vld [vmem:[%s4464 + $0x10] sm:$0xf]
      %v4470 = vld [vmem:[%s4464 + $0x14] sm:$0xf]
      %v4471 = vld [vmem:[%s4464 + $0x18] sm:$0xf]
      %v4472 = vld [vmem:[%s4464 + $0x1c] sm:$0xf]
      %v4473 = vld [vmem:[%s4464 + $0x20] sm:$0xf]
      %v4474 = vld [vmem:[%s4464 + $0x24] sm:$0xf]
      %v4501 = vunpack.c.l.b16 %v4438
      %v4502 = vunpack.c.l.b16 %v4439
      %v4503 = vunpack.c.l.b16 %v4440
      %v4504 = vunpack.c.l.b16 %v4441
      %v4505 = vunpack.c.l.b16 %v4442
      %v4506 = vunpack.c.l.b16 %v4443
      %v4507 = vunpack.c.l.b16 %v4444
      %v4508 = vunpack.c.l.b16 %v4445
      %v4509 = vunpack.c.l.b16 %v4446
      %v4510 = vunpack.c.l.b16 %v4447
      %v4511 = vunpack.c.l.b16 %v4448
      %v4512 = vunpack.c.l.b16 %v4449
      %v4513 = vunpack.c.l.b16 %v4450
      %v4514 = vunpack.c.l.b16 %v4451
      %v4515 = vunpack.c.l.b16 %v4452
      %v4516 = vunpack.c.l.b16 %v4453
      %v4517 = vunpack.c.l.b16 %v4454
      %v4518 = vunpack.c.l.b16 %v4455
      %v4519 = vunpack.c.l.b16 %v4456
      %v4520 = vunpack.c.l.b16 %v4457
      %v4521 = vunpack.c.l.b16 %v4458
      %v4522 = vunpack.c.l.b16 %v4459
      %v4523 = vunpack.c.l.b16 %v4460
      %v4524 = vunpack.c.l.b16 %v4461
      %v4525 = vunpack.c.l.b16 %v4462
      %v4526 = vunpack.c.l.b16 %v4463
      %v4527 = vpack.c.b16 %v4502, %v4501
      %v4528 = vpack.c.b16 %v4504, %v4503
      %v4529 = vpack.c.b16 %v4506, %v4505
      %v4530 = vpack.c.b16 %v4508, %v4507
      %v4531 = vpack.c.b16 %v4510, %v4509
      %v4532 = vpack.c.b16 %v4512, %v4511
      %v4533 = vpack.c.b16 %v4514, %v4513
      %v4534 = vpack.c.b16 %v4516, %v4515
      %v4535 = vpack.c.b16 %v4518, %v4517
      %v4536 = vpack.c.b16 %v4520, %v4519
      %v4537 = vpack.c.b16 %v4522, %v4521
      %v4538 = vpack.c.b16 %v4524, %v4523
      %v4539 = vpack.c.b16 %v4526, %v4525
      %v4550 = vunpack.c.l.b16 %v4465
      %v4551 = vunpack.c.l.b16 %v4466
      %v4552 = vunpack.c.l.b16 %v4467
      %v4553 = vunpack.c.l.b16 %v4468
      %v4554 = vunpack.c.l.b16 %v4469
      %v4555 = vunpack.c.l.b16 %v4470
      %v4556 = vunpack.c.l.b16 %v4471
      %v4557 = vunpack.c.l.b16 %v4472
      %v4558 = vunpack.c.l.b16 %v4473
      %v4559 = vunpack.c.l.b16 %v4474
      %v4560 = vpack.c.b16 %v4551, %v4550
      %v4561 = vpack.c.b16 %v4553, %v4552
      %v4562 = vpack.c.b16 %v4555, %v4554
      %v4563 = vpack.c.b16 %v4557, %v4556
      %v4564 = vpack.c.b16 %v4559, %v4558
      %v4571 = vsel %vm2320, %v4527, 0
      %v4574 = vsel %vm2320, %v4528, 0
      %v4577 = vsel %vm2320, %v4529, 0
      %v4580 = vsel %vm2320, %v4530, 0
      %v4583 = vsel %vm2320, %v4531, 0
      %v4586 = vsel %vm2320, %v4532, 0
      %v4589 = vsel %vm2320, %v4533, 0
      %v4592 = vsel %vm2320, %v4534, 0
      %v4595 = vsel %vm2320, %v4535, 0
      %v4598 = vsel %vm2320, %v4536, 0
      %v4601 = vsel %vm2320, %v4537, 0
      %v4604 = vsel %vm2320, %v4538, 0
      %v4607 = vsel %vm2320, %v4539, 0
      %4609 = vmatpush.bf16.msra.mxu0 0
      %4610 = vmatpush.bf16.msra.mxu0 0
      %4611 = vmatpush.bf16.msra.mxu0 0
      %4612 = vmatpush.bf16.msra.mxu0 %v4564
      %4613 = vmatpush.bf16.msra.mxu0 %v4563
      %4614 = vmatpush.bf16.msra.mxu0 %v4562
      %4615 = vmatpush.bf16.msra.mxu0 %v4561
      %4616 = vmatpush.bf16.msra.mxu0 %v4560
      %4617 = vmatmul.bf16.gmra.mxu0 %v4571
      %v4618 = vpop.f32.mrf.mxu0
      %v4619 = vadd.f32 0.0, %v4618
      %v4620 = vpop.f32.mrf.mxu0
      %v4621 = vadd.f32 0.0, %v4620
      %4622 = vmatmul.bf16.gmra.mxu0 %v4574
      %v4623 = vpop.f32.mrf.mxu0
      %v4624 = vadd.f32 0.0, %v4623
      %v4625 = vpop.f32.mrf.mxu0
      %v4626 = vadd.f32 0.0, %v4625
      %4627 = vmatmul.bf16.gmra.mxu0 %v4577
      %v4628 = vpop.f32.mrf.mxu0
      %v4629 = vadd.f32 0.0, %v4628
      %v4630 = vpop.f32.mrf.mxu0
      %v4631 = vadd.f32 0.0, %v4630
      %4632 = vmatmul.bf16.gmra.mxu0 %v4580
      %v4633 = vpop.f32.mrf.mxu0
      %v4634 = vadd.f32 0.0, %v4633
      %v4635 = vpop.f32.mrf.mxu0
      %v4636 = vadd.f32 0.0, %v4635
      %4637 = vmatmul.bf16.gmra.mxu0 %v4583
      %v4638 = vpop.f32.mrf.mxu0
      %v4639 = vadd.f32 0.0, %v4638
      %v4640 = vpop.f32.mrf.mxu0
      %v4641 = vadd.f32 0.0, %v4640
      %4642 = vmatmul.bf16.gmra.mxu0 %v4586
      %v4643 = vpop.f32.mrf.mxu0
      %v4644 = vadd.f32 0.0, %v4643
      %v4645 = vpop.f32.mrf.mxu0
      %v4646 = vadd.f32 0.0, %v4645
      %4647 = vmatmul.bf16.gmra.mxu0 %v4589
      %v4648 = vpop.f32.mrf.mxu0
      %v4649 = vadd.f32 0.0, %v4648
      %v4650 = vpop.f32.mrf.mxu0
      %v4651 = vadd.f32 0.0, %v4650
      %4652 = vmatmul.bf16.gmra.mxu0 %v4592
      %v4653 = vpop.f32.mrf.mxu0
      %v4654 = vadd.f32 0.0, %v4653
      %v4655 = vpop.f32.mrf.mxu0
      %v4656 = vadd.f32 0.0, %v4655
      %4657 = vmatmul.bf16.gmra.mxu0 %v4595
      %v4658 = vpop.f32.mrf.mxu0
      %v4659 = vadd.f32 0.0, %v4658
      %v4660 = vpop.f32.mrf.mxu0
      %v4661 = vadd.f32 0.0, %v4660
      %4662 = vmatmul.bf16.gmra.mxu0 %v4598
      %v4663 = vpop.f32.mrf.mxu0
      %v4664 = vadd.f32 0.0, %v4663
      %v4665 = vpop.f32.mrf.mxu0
      %v4666 = vadd.f32 0.0, %v4665
      %4667 = vmatmul.bf16.gmra.mxu0 %v4601
      %v4668 = vpop.f32.mrf.mxu0
      %v4669 = vadd.f32 0.0, %v4668
      %v4670 = vpop.f32.mrf.mxu0
      %v4671 = vadd.f32 0.0, %v4670
      %4672 = vmatmul.bf16.gmra.mxu0 %v4604
      %v4673 = vpop.f32.mrf.mxu0
      %v4674 = vadd.f32 0.0, %v4673
      %v4675 = vpop.f32.mrf.mxu0
      %v4676 = vadd.f32 0.0, %v4675
      %4677 = vmatmul.bf16.gmra.mxu0 %v4607
      %v4678 = vpop.f32.mrf.mxu0
      %v4679 = vadd.f32 0.0, %v4678
      %v4680 = vpop.f32.mrf.mxu0
      %v4681 = vadd.f32 0.0, %v4680
      %4682 = vdwg.mxu0
      %v4683 = vadd.f32 %v4412, %v4619
      %v4684 = vadd.f32 %v4413, %v4621
      %v4685 = vadd.f32 %v4414, %v4624
      %v4686 = vadd.f32 %v4415, %v4626
      %v4687 = vadd.f32 %v4416, %v4629
      %v4688 = vadd.f32 %v4417, %v4631
      %v4689 = vadd.f32 %v4418, %v4634
      %v4690 = vadd.f32 %v4419, %v4636
      %v4691 = vadd.f32 %v4420, %v4639
      %v4692 = vadd.f32 %v4421, %v4641
      %v4693 = vadd.f32 %v4422, %v4644
      %v4694 = vadd.f32 %v4423, %v4646
      %v4695 = vadd.f32 %v4424, %v4649
      %v4696 = vadd.f32 %v4425, %v4651
      %v4697 = vadd.f32 %v4426, %v4654
      %v4698 = vadd.f32 %v4427, %v4656
      %v4699 = vadd.f32 %v4428, %v4659
      %v4700 = vadd.f32 %v4429, %v4661
      %v4701 = vadd.f32 %v4430, %v4664
      %v4702 = vadd.f32 %v4431, %v4666
      %v4703 = vadd.f32 %v4432, %v4669
      %v4704 = vadd.f32 %v4433, %v4671
      %v4705 = vadd.f32 %v4434, %v4674
      %v4706 = vadd.f32 %v4435, %v4676
      %v4707 = vadd.f32 %v4436, %v4679
      %v4708 = vadd.f32 %v4437, %v4681
      %v4709 = vld [vmem:[%s11] sm:$0x1]
      %v4711 = vperm.slane %v4709, 0
      %v4713 = vadd.f32 %v4683, %v4711
      %v4714 = vadd.f32 %v4684, %v4711
      %v4715 = vadd.f32 %v4685, %v4711
      %v4716 = vadd.f32 %v4686, %v4711
      %v4717 = vadd.f32 %v4687, %v4711
      %v4718 = vadd.f32 %v4688, %v4711
      %v4719 = vadd.f32 %v4689, %v4711
      %v4720 = vadd.f32 %v4690, %v4711
      %v4721 = vadd.f32 %v4691, %v4711
      %v4722 = vadd.f32 %v4692, %v4711
      %v4723 = vadd.f32 %v4693, %v4711
      %v4724 = vadd.f32 %v4694, %v4711
      %v4725 = vadd.f32 %v4695, %v4711
      %v4726 = vadd.f32 %v4696, %v4711
      %v4727 = vadd.f32 %v4697, %v4711
      %v4728 = vadd.f32 %v4698, %v4711
      %v4729 = vadd.f32 %v4699, %v4711
      %v4730 = vadd.f32 %v4700, %v4711
      %v4731 = vadd.f32 %v4701, %v4711
      %v4732 = vadd.f32 %v4702, %v4711
      %v4733 = vadd.f32 %v4703, %v4711
      %v4734 = vadd.f32 %v4704, %v4711
      %v4735 = vadd.f32 %v4705, %v4711
      %v4736 = vadd.f32 %v4706, %v4711
      %v4737 = vadd.f32 %v4707, %v4711
      %v4738 = vadd.f32 %v4708, %v4711
      %v4739 = vmul.f32 %v4713, 0.01
      %v4740 = vmul.f32 %v4714, 0.01
      %v4741 = vmul.f32 %v4715, 0.01
      %v4742 = vmul.f32 %v4716, 0.01
      %v4743 = vmul.f32 %v4717, 0.01
      %v4744 = vmul.f32 %v4718, 0.01
      %v4745 = vmul.f32 %v4719, 0.01
      %v4746 = vmul.f32 %v4720, 0.01
      %v4747 = vmul.f32 %v4721, 0.01
      %v4748 = vmul.f32 %v4722, 0.01
      %v4749 = vmul.f32 %v4723, 0.01
      %v4750 = vmul.f32 %v4724, 0.01
      %v4751 = vmul.f32 %v4725, 0.01
      %v4752 = vmul.f32 %v4726, 0.01
      %v4753 = vmul.f32 %v4727, 0.01
      %v4754 = vmul.f32 %v4728, 0.01
      %v4755 = vmul.f32 %v4729, 0.01
      %v4756 = vmul.f32 %v4730, 0.01
      %v4757 = vmul.f32 %v4731, 0.01
      %v4758 = vmul.f32 %v4732, 0.01
      %v4759 = vmul.f32 %v4733, 0.01
      %v4760 = vmul.f32 %v4734, 0.01
      %v4761 = vmul.f32 %v4735, 0.01
      %v4762 = vmul.f32 %v4736, 0.01
      %v4763 = vmul.f32 %v4737, 0.01
      %v4764 = vmul.f32 %v4738, 0.01
      %v4765 = vmax.f32 %v4713, %v4739
      %v4766 = vmax.f32 %v4714, %v4740
      %v4767 = vmax.f32 %v4715, %v4741
      %v4768 = vmax.f32 %v4716, %v4742
      %v4769 = vmax.f32 %v4717, %v4743
      %v4770 = vmax.f32 %v4718, %v4744
      %v4771 = vmax.f32 %v4719, %v4745
      %v4772 = vmax.f32 %v4720, %v4746
      %v4773 = vmax.f32 %v4721, %v4747
      %v4774 = vmax.f32 %v4722, %v4748
      %v4775 = vmax.f32 %v4723, %v4749
      %v4776 = vmax.f32 %v4724, %v4750
      %v4777 = vmax.f32 %v4725, %v4751
      %v4778 = vmax.f32 %v4726, %v4752
      %v4779 = vmax.f32 %v4727, %v4753
      %v4780 = vmax.f32 %v4728, %v4754
      %v4781 = vmax.f32 %v4729, %v4755
      %v4782 = vmax.f32 %v4730, %v4756
      %v4783 = vmax.f32 %v4731, %v4757
      %v4784 = vmax.f32 %v4732, %v4758
      %v4785 = vmax.f32 %v4733, %v4759
      %v4786 = vmax.f32 %v4734, %v4760
      %v4787 = vmax.f32 %v4735, %v4761
      %v4788 = vmax.f32 %v4736, %v4762
      %v4789 = vmax.f32 %v4737, %v4763
      %v4790 = vmax.f32 %v4738, %v4764
      %v4791 = vpack.c.bf16 %v4765, %v4765
      %v4792 = vpack.c.bf16 %v4766, %v4766
      %v4793 = vpack.c.bf16 %v4767, %v4767
      %v4794 = vpack.c.bf16 %v4768, %v4768
      %v4795 = vpack.c.bf16 %v4769, %v4769
      %v4796 = vpack.c.bf16 %v4770, %v4770
      %v4797 = vpack.c.bf16 %v4771, %v4771
      %v4798 = vpack.c.bf16 %v4772, %v4772
      %v4799 = vpack.c.bf16 %v4773, %v4773
      %v4800 = vpack.c.bf16 %v4774, %v4774
      %v4801 = vpack.c.bf16 %v4775, %v4775
      %v4802 = vpack.c.bf16 %v4776, %v4776
      %v4803 = vpack.c.bf16 %v4777, %v4777
      %v4804 = vpack.c.bf16 %v4778, %v4778
      %v4805 = vpack.c.bf16 %v4779, %v4779
      %v4806 = vpack.c.bf16 %v4780, %v4780
      %v4807 = vpack.c.bf16 %v4781, %v4781
      %v4808 = vpack.c.bf16 %v4782, %v4782
      %v4809 = vpack.c.bf16 %v4783, %v4783
      %v4810 = vpack.c.bf16 %v4784, %v4784
      %v4811 = vpack.c.bf16 %v4785, %v4785
      %v4812 = vpack.c.bf16 %v4786, %v4786
      %v4813 = vpack.c.bf16 %v4787, %v4787
      %v4814 = vpack.c.bf16 %v4788, %v4788
      %v4815 = vpack.c.bf16 %v4789, %v4789
      %v4816 = vpack.c.bf16 %v4790, %v4790
      %4817 = vst.msk [vmem:[#allocation6 + $0x18] sm:$0xf] %vm468, %v4791
      %4818 = vst.msk [vmem:[#allocation6 + $0x1c] sm:$0xf] %vm468, %v4792
      %4819 = vst.msk [vmem:[#allocation6 + $0x20] sm:$0xf] %vm468, %v4793
      %4820 = vst.msk [vmem:[#allocation6 + $0x24] sm:$0xf] %vm468, %v4794
      %4821 = vst.msk [vmem:[#allocation6 + $0x28] sm:$0xf] %vm468, %v4795
      %4822 = vst.msk [vmem:[#allocation6 + $0x2c] sm:$0xf] %vm468, %v4796
      %4823 = vst.msk [vmem:[#allocation6 + $0x30] sm:$0xf] %vm468, %v4797
      %4824 = vst.msk [vmem:[#allocation6 + $0x34] sm:$0xf] %vm468, %v4798
      %4825 = vst.msk [vmem:[#allocation6 + $0x38] sm:$0xf] %vm468, %v4799
      %4826 = vst.msk [vmem:[#allocation6 + $0x3c] sm:$0xf] %vm468, %v4800
      %4827 = vst.msk [vmem:[#allocation6 + $0x40] sm:$0xf] %vm468, %v4801
      %4828 = vst.msk [vmem:[#allocation6 + $0x44] sm:$0xf] %vm468, %v4802
      %4829 = vst.msk [vmem:[#allocation6 + $0x48] sm:$0xf] %vm468, %v4803
      %4830 = vst.msk [vmem:[#allocation6 + $0x4c] sm:$0xf] %vm468, %v4804
      %4831 = vst.msk [vmem:[#allocation6 + $0x50] sm:$0xf] %vm468, %v4805
      %4832 = vst.msk [vmem:[#allocation6 + $0x54] sm:$0xf] %vm468, %v4806
      %4833 = vst.msk [vmem:[#allocation6 + $0x58] sm:$0xf] %vm468, %v4807
      %4834 = vst.msk [vmem:[#allocation6 + $0x5c] sm:$0xf] %vm468, %v4808
      %4835 = vst.msk [vmem:[#allocation6 + $0x60] sm:$0xf] %vm468, %v4809
      %4836 = vst.msk [vmem:[#allocation6 + $0x64] sm:$0xf] %vm468, %v4810
      %4837 = vst.msk [vmem:[#allocation6 + $0x68] sm:$0xf] %vm468, %v4811
      %4838 = vst.msk [vmem:[#allocation6 + $0x6c] sm:$0xf] %vm468, %v4812
      %4839 = vst.msk [vmem:[#allocation6 + $0x70] sm:$0xf] %vm468, %v4813
      %4840 = vst.msk [vmem:[#allocation6 + $0x74] sm:$0xf] %vm468, %v4814
      %4841 = vst.msk [vmem:[#allocation6 + $0x78] sm:$0xf] %vm468, %v4815
      %4842 = vst.msk [vmem:[#allocation6 + $0x7c] sm:$0xf] %vm468, %v4816
      %v4843 = vld [vmem:[#allocation6] sm:$0xf]
      %v4844 = vld [vmem:[#allocation6 + $0x4] sm:$0xf]
      %v4845 = vld [vmem:[#allocation6 + $0x8] sm:$0xf]
      %v4846 = vld [vmem:[#allocation6 + $0xc] sm:$0xf]
      %v4847 = vld [vmem:[#allocation6 + $0x10] sm:$0xf]
      %v4848 = vld [vmem:[#allocation6 + $0x14] sm:$0xf]
      %v4849 = vld [vmem:[#allocation6 + $0x18] sm:$0xf]
      %v4850 = vld [vmem:[#allocation6 + $0x1c] sm:$0xf]
      %v4851 = vld [vmem:[#allocation6 + $0x20] sm:$0xf]
      %v4852 = vld [vmem:[#allocation6 + $0x24] sm:$0xf]
      %v4853 = vld [vmem:[#allocation6 + $0x28] sm:$0xf]
      %v4854 = vld [vmem:[#allocation6 + $0x2c] sm:$0xf]
      %v4855 = vld [vmem:[#allocation6 + $0x30] sm:$0xf]
      %v4856 = vld [vmem:[#allocation6 + $0x34] sm:$0xf]
      %v4857 = vld [vmem:[#allocation6 + $0x38] sm:$0xf]
      %v4858 = vld [vmem:[#allocation6 + $0x3c] sm:$0xf]
      %v4859 = vld [vmem:[#allocation6 + $0x40] sm:$0xf]
      %v4860 = vld [vmem:[#allocation6 + $0x44] sm:$0xf]
      %v4861 = vld [vmem:[#allocation6 + $0x48] sm:$0xf]
      %v4862 = vld [vmem:[#allocation6 + $0x4c] sm:$0xf]
      %v4863 = vld [vmem:[#allocation6 + $0x50] sm:$0xf]
      %v4864 = vld [vmem:[#allocation6 + $0x54] sm:$0xf]
      %v4865 = vld [vmem:[#allocation6 + $0x58] sm:$0xf]
      %v4866 = vld [vmem:[#allocation6 + $0x5c] sm:$0xf]
      %v4867 = vld [vmem:[#allocation6 + $0x60] sm:$0xf]
      %v4868 = vld [vmem:[#allocation6 + $0x64] sm:$0xf]
      %v4869 = vld [vmem:[#allocation6 + $0x68] sm:$0xf]
      %v4870 = vld [vmem:[#allocation6 + $0x6c] sm:$0xf]
      %v4871 = vld [vmem:[#allocation6 + $0x70] sm:$0xf]
      %v4872 = vld [vmem:[#allocation6 + $0x74] sm:$0xf]
      %v4873 = vld [vmem:[#allocation6 + $0x78] sm:$0xf]
      %v4874 = vld [vmem:[#allocation6 + $0x7c] sm:$0xf]
      %v4875 = vld [vmem:[%s6] sm:$0xf]
      %v4876 = vld [vmem:[%s6 + $0x4] sm:$0xf]
      %v4877 = vld [vmem:[%s6 + $0x8] sm:$0xf]
      %v4878 = vld [vmem:[%s6 + $0xc] sm:$0xf]
      %v4879 = vld [vmem:[%s6 + $0x10] sm:$0xf]
      %v4880 = vld [vmem:[%s6 + $0x14] sm:$0xf]
      %v4881 = vld [vmem:[%s6 + $0x18] sm:$0x3]
      %v4882 = vld [vmem:[#allocation6 + $0x80] sm:$0xf]
      %v4883 = vld [vmem:[#allocation6 + $0x84] sm:$0xf]
      %s4884 = scalar_lea.vmem %s6, 28
      %v4885 = vld [vmem:[%s4884] sm:$0xf]
      %v4886 = vld [vmem:[%s4884 + $0x4] sm:$0xf]
      %v4887 = vld [vmem:[%s4884 + $0x8] sm:$0xf]
      %v4888 = vld [vmem:[%s4884 + $0xc] sm:$0xf]
      %v4889 = vld [vmem:[%s4884 + $0x10] sm:$0xf]
      %v4890 = vld [vmem:[%s4884 + $0x14] sm:$0xf]
      %v4891 = vld [vmem:[%s4884 + $0x18] sm:$0x3]
      %v4924 = vunpack.c.l.b16 %v4845
      %v4925 = vunpack.c.l.b16 %v4846
      %v4926 = vunpack.c.l.b16 %v4847
      %v4927 = vunpack.c.l.b16 %v4848
      %v4928 = vunpack.c.l.b16 %v4849
      %v4929 = vunpack.c.l.b16 %v4850
      %v4930 = vunpack.c.l.b16 %v4851
      %v4931 = vunpack.c.l.b16 %v4852
      %v4932 = vunpack.c.l.b16 %v4853
      %v4933 = vunpack.c.l.b16 %v4854
      %v4934 = vunpack.c.l.b16 %v4855
      %v4935 = vunpack.c.l.b16 %v4856
      %v4936 = vunpack.c.l.b16 %v4857
      %v4937 = vunpack.c.l.b16 %v4858
      %v4938 = vunpack.c.l.b16 %v4859
      %v4939 = vunpack.c.l.b16 %v4860
      %v4940 = vunpack.c.l.b16 %v4861
      %v4941 = vunpack.c.l.b16 %v4862
      %v4942 = vunpack.c.l.b16 %v4863
      %v4943 = vunpack.c.l.b16 %v4864
      %v4944 = vunpack.c.l.b16 %v4865
      %v4945 = vunpack.c.l.b16 %v4866
      %v4946 = vunpack.c.l.b16 %v4867
      %v4947 = vunpack.c.l.b16 %v4868
      %v4948 = vunpack.c.l.b16 %v4869
      %v4949 = vunpack.c.l.b16 %v4870
      %v4950 = vunpack.c.l.b16 %v4871
      %v4951 = vunpack.c.l.b16 %v4872
      %v4952 = vunpack.c.l.b16 %v4873
      %v4953 = vunpack.c.l.b16 %v4874
      %v4954 = vunpack.c.l.b16 %v4882
      %v4955 = vunpack.c.l.b16 %v4883
      %v4956 = vpack.c.b16 %v4925, %v4924
      %v4957 = vpack.c.b16 %v4927, %v4926
      %v4958 = vpack.c.b16 %v4929, %v4928
      %v4959 = vpack.c.b16 %v4931, %v4930
      %v4960 = vpack.c.b16 %v4933, %v4932
      %v4961 = vpack.c.b16 %v4935, %v4934
      %v4962 = vpack.c.b16 %v4937, %v4936
      %v4963 = vpack.c.b16 %v4939, %v4938
      %v4964 = vpack.c.b16 %v4941, %v4940
      %v4965 = vpack.c.b16 %v4943, %v4942
      %v4966 = vpack.c.b16 %v4945, %v4944
      %v4967 = vpack.c.b16 %v4947, %v4946
      %v4968 = vpack.c.b16 %v4949, %v4948
      %v4969 = vpack.c.b16 %v4951, %v4950
      %v4970 = vpack.c.b16 %v4953, %v4952
      %v4971 = vpack.c.b16 %v4955, %v4954
      %v4979 = vunpack.c.l.b16 %v4885
      %v4980 = vunpack.c.l.b16 %v4886
      %v4981 = vunpack.c.l.b16 %v4887
      %v4982 = vunpack.c.l.b16 %v4888
      %v4983 = vunpack.c.l.b16 %v4889
      %v4984 = vunpack.c.l.b16 %v4890
      %v4985 = vunpack.c.l.b16 %v4891
      %v4986 = vpack.c.b16 %v4980, %v4979
      %v4987 = vpack.c.b16 %v4982, %v4981
      %v4988 = vpack.c.b16 %v4984, %v4983
      %v4989 = vpack.c.b16 %v4985, %v4985
      %v4994 = vsel %vm1507, %v4956, 0
      %v4997 = vsel %vm1507, %v4957, 0
      %v5000 = vsel %vm1507, %v4958, 0
      %v5003 = vsel %vm1507, %v4959, 0
      %v5006 = vsel %vm1507, %v4960, 0
      %v5009 = vsel %vm1507, %v4961, 0
      %v5012 = vsel %vm1507, %v4962, 0
      %v5015 = vsel %vm1507, %v4963, 0
      %v5018 = vsel %vm1507, %v4964, 0
      %v5021 = vsel %vm1507, %v4965, 0
      %v5024 = vsel %vm1507, %v4966, 0
      %v5027 = vsel %vm1507, %v4967, 0
      %v5030 = vsel %vm1507, %v4968, 0
      %v5033 = vsel %vm1507, %v4969, 0
      %v5036 = vsel %vm1507, %v4970, 0
      %v5039 = vsel %vm1507, %v4971, 0
      %v5042 = vsel %vm1538, %v4989, 0
      %5044 = vmatpush.bf16.msra.mxu0 0
      %5045 = vmatpush.bf16.msra.mxu0 0
      %5046 = vmatpush.bf16.msra.mxu0 0
      %5047 = vmatpush.bf16.msra.mxu0 0
      %5048 = vmatpush.bf16.msra.mxu0 %v5042
      %5049 = vmatpush.bf16.msra.mxu0 %v4988
      %5050 = vmatpush.bf16.msra.mxu0 %v4987
      %5051 = vmatpush.bf16.msra.mxu0 %v4986
      %5052 = vmatmul.bf16.gmra.mxu0 %v4994
      %v5053 = vpop.f32.mrf.mxu0
      %v5054 = vadd.f32 0.0, %v5053
      %v5055 = vpop.f32.mrf.mxu0
      %v5056 = vadd.f32 0.0, %v5055
      %5057 = vmatmul.bf16.gmra.mxu0 %v4997
      %v5058 = vpop.f32.mrf.mxu0
      %v5059 = vadd.f32 0.0, %v5058
      %v5060 = vpop.f32.mrf.mxu0
      %v5061 = vadd.f32 0.0, %v5060
      %5062 = vmatmul.bf16.gmra.mxu0 %v5000
      %v5063 = vpop.f32.mrf.mxu0
      %v5064 = vadd.f32 0.0, %v5063
      %v5065 = vpop.f32.mrf.mxu0
      %v5066 = vadd.f32 0.0, %v5065
      %5067 = vmatmul.bf16.gmra.mxu0 %v5003
      %v5068 = vpop.f32.mrf.mxu0
      %v5069 = vadd.f32 0.0, %v5068
      %v5070 = vpop.f32.mrf.mxu0
      %v5071 = vadd.f32 0.0, %v5070
      %5072 = vmatmul.bf16.gmra.mxu0 %v5006
      %v5073 = vpop.f32.mrf.mxu0
      %v5074 = vadd.f32 0.0, %v5073
      %v5075 = vpop.f32.mrf.mxu0
      %v5076 = vadd.f32 0.0, %v5075
      %5077 = vmatmul.bf16.gmra.mxu0 %v5009
      %v5078 = vpop.f32.mrf.mxu0
      %v5079 = vadd.f32 0.0, %v5078
      %v5080 = vpop.f32.mrf.mxu0
      %v5081 = vadd.f32 0.0, %v5080
      %5082 = vmatmul.bf16.gmra.mxu0 %v5012
      %v5083 = vpop.f32.mrf.mxu0
      %v5084 = vadd.f32 0.0, %v5083
      %v5085 = vpop.f32.mrf.mxu0
      %v5086 = vadd.f32 0.0, %v5085
      %5087 = vmatmul.bf16.gmra.mxu0 %v5015
      %v5088 = vpop.f32.mrf.mxu0
      %v5089 = vadd.f32 0.0, %v5088
      %v5090 = vpop.f32.mrf.mxu0
      %v5091 = vadd.f32 0.0, %v5090
      %5092 = vmatmul.bf16.gmra.mxu0 %v5018
      %v5093 = vpop.f32.mrf.mxu0
      %v5094 = vadd.f32 0.0, %v5093
      %v5095 = vpop.f32.mrf.mxu0
      %v5096 = vadd.f32 0.0, %v5095
      %5097 = vmatmul.bf16.gmra.mxu0 %v5021
      %v5098 = vpop.f32.mrf.mxu0
      %v5099 = vadd.f32 0.0, %v5098
      %v5100 = vpop.f32.mrf.mxu0
      %v5101 = vadd.f32 0.0, %v5100
      %5102 = vmatmul.bf16.gmra.mxu0 %v5024
      %v5103 = vpop.f32.mrf.mxu0
      %v5104 = vadd.f32 0.0, %v5103
      %v5105 = vpop.f32.mrf.mxu0
      %v5106 = vadd.f32 0.0, %v5105
      %5107 = vmatmul.bf16.gmra.mxu0 %v5027
      %v5108 = vpop.f32.mrf.mxu0
      %v5109 = vadd.f32 0.0, %v5108
      %v5110 = vpop.f32.mrf.mxu0
      %v5111 = vadd.f32 0.0, %v5110
      %5112 = vmatmul.bf16.gmra.mxu0 %v5030
      %v5113 = vpop.f32.mrf.mxu0
      %v5114 = vadd.f32 0.0, %v5113
      %v5115 = vpop.f32.mrf.mxu0
      %v5116 = vadd.f32 0.0, %v5115
      %5117 = vmatmul.bf16.gmra.mxu0 %v5033
      %v5118 = vpop.f32.mrf.mxu0
      %v5119 = vadd.f32 0.0, %v5118
      %v5120 = vpop.f32.mrf.mxu0
      %v5121 = vadd.f32 0.0, %v5120
      %5122 = vmatmul.bf16.gmra.mxu0 %v5036
      %v5123 = vpop.f32.mrf.mxu0
      %v5124 = vadd.f32 0.0, %v5123
      %v5125 = vpop.f32.mrf.mxu0
      %v5126 = vadd.f32 0.0, %v5125
      %5127 = vmatmul.bf16.gmra.mxu0 %v5039
      %v5128 = vpop.f32.mrf.mxu0
      %v5129 = vadd.f32 0.0, %v5128
      %v5130 = vpop.f32.mrf.mxu0
      %v5131 = vadd.f32 0.0, %v5130
      %5132 = vdwg.mxu0
      %v5135 = vunpack.c.l.b16 %v4843
      %v5136 = vunpack.c.l.b16 %v4844
      %v5137 = vpack.c.b16 %v5136, %v5135
      %v5145 = vunpack.c.l.b16 %v4875
      %v5146 = vunpack.c.l.b16 %v4876
      %v5147 = vunpack.c.l.b16 %v4877
      %v5148 = vunpack.c.l.b16 %v4878
      %v5149 = vunpack.c.l.b16 %v4879
      %v5150 = vunpack.c.l.b16 %v4880
      %v5151 = vunpack.c.l.b16 %v4881
      %v5152 = vpack.c.b16 %v5146, %v5145
      %v5153 = vpack.c.b16 %v5148, %v5147
      %v5154 = vpack.c.b16 %v5150, %v5149
      %v5155 = vpack.c.b16 %v5151, %v5151
      %v5160 = vsel %vm1507, %v5137, 0
      %v5163 = vsel %vm1538, %v5155, 0
      %5165 = vmatpush.bf16.msra.mxu0 0
      %5166 = vmatpush.bf16.msra.mxu0 0
      %5167 = vmatpush.bf16.msra.mxu0 0
      %5168 = vmatpush.bf16.msra.mxu0 0
      %5169 = vmatpush.bf16.msra.mxu0 %v5163
      %5170 = vmatpush.bf16.msra.mxu0 %v5154
      %5171 = vmatpush.bf16.msra.mxu0 %v5153
      %5172 = vmatpush.bf16.msra.mxu0 %v5152
      %5173 = vmatmul.bf16.gmra.mxu0 %v5160
      %v5174 = vpop.f32.mrf.mxu0
      %v5175 = vadd.f32 %v5054, %v5174
      %v5176 = vpop.f32.mrf.mxu0
      %v5177 = vadd.f32 %v5056, %v5176
      %5178 = vmatmul.bf16.gmra.mxu0 %v4994
      %v5179 = vpop.f32.mrf.mxu0
      %v5180 = vadd.f32 %v5059, %v5179
      %v5181 = vpop.f32.mrf.mxu0
      %v5182 = vadd.f32 %v5061, %v5181
      %5183 = vmatmul.bf16.gmra.mxu0 %v4997
      %v5184 = vpop.f32.mrf.mxu0
      %v5185 = vadd.f32 %v5064, %v5184
      %v5186 = vpop.f32.mrf.mxu0
      %v5187 = vadd.f32 %v5066, %v5186
      %5188 = vmatmul.bf16.gmra.mxu0 %v5000
      %v5189 = vpop.f32.mrf.mxu0
      %v5190 = vadd.f32 %v5069, %v5189
      %v5191 = vpop.f32.mrf.mxu0
      %v5192 = vadd.f32 %v5071, %v5191
      %5193 = vmatmul.bf16.gmra.mxu0 %v5003
      %v5194 = vpop.f32.mrf.mxu0
      %v5195 = vadd.f32 %v5074, %v5194
      %v5196 = vpop.f32.mrf.mxu0
      %v5197 = vadd.f32 %v5076, %v5196
      %5198 = vmatmul.bf16.gmra.mxu0 %v5006
      %v5199 = vpop.f32.mrf.mxu0
      %v5200 = vadd.f32 %v5079, %v5199
      %v5201 = vpop.f32.mrf.mxu0
      %v5202 = vadd.f32 %v5081, %v5201
      %5203 = vmatmul.bf16.gmra.mxu0 %v5009
      %v5204 = vpop.f32.mrf.mxu0
      %v5205 = vadd.f32 %v5084, %v5204
      %v5206 = vpop.f32.mrf.mxu0
      %v5207 = vadd.f32 %v5086, %v5206
      %5208 = vmatmul.bf16.gmra.mxu0 %v5012
      %v5209 = vpop.f32.mrf.mxu0
      %v5210 = vadd.f32 %v5089, %v5209
      %v5211 = vpop.f32.mrf.mxu0
      %v5212 = vadd.f32 %v5091, %v5211
      %5213 = vmatmul.bf16.gmra.mxu0 %v5015
      %v5214 = vpop.f32.mrf.mxu0
      %v5215 = vadd.f32 %v5094, %v5214
      %v5216 = vpop.f32.mrf.mxu0
      %v5217 = vadd.f32 %v5096, %v5216
      %5218 = vmatmul.bf16.gmra.mxu0 %v5018
      %v5219 = vpop.f32.mrf.mxu0
      %v5220 = vadd.f32 %v5099, %v5219
      %v5221 = vpop.f32.mrf.mxu0
      %v5222 = vadd.f32 %v5101, %v5221
      %5223 = vmatmul.bf16.gmra.mxu0 %v5021
      %v5224 = vpop.f32.mrf.mxu0
      %v5225 = vadd.f32 %v5104, %v5224
      %v5226 = vpop.f32.mrf.mxu0
      %v5227 = vadd.f32 %v5106, %v5226
      %5228 = vmatmul.bf16.gmra.mxu0 %v5024
      %v5229 = vpop.f32.mrf.mxu0
      %v5230 = vadd.f32 %v5109, %v5229
      %v5231 = vpop.f32.mrf.mxu0
      %v5232 = vadd.f32 %v5111, %v5231
      %5233 = vmatmul.bf16.gmra.mxu0 %v5027
      %v5234 = vpop.f32.mrf.mxu0
      %v5235 = vadd.f32 %v5114, %v5234
      %v5236 = vpop.f32.mrf.mxu0
      %v5237 = vadd.f32 %v5116, %v5236
      %5238 = vmatmul.bf16.gmra.mxu0 %v5030
      %v5239 = vpop.f32.mrf.mxu0
      %v5240 = vadd.f32 %v5119, %v5239
      %v5241 = vpop.f32.mrf.mxu0
      %v5242 = vadd.f32 %v5121, %v5241
      %5243 = vmatmul.bf16.gmra.mxu0 %v5033
      %v5244 = vpop.f32.mrf.mxu0
      %v5245 = vadd.f32 %v5124, %v5244
      %v5246 = vpop.f32.mrf.mxu0
      %v5247 = vadd.f32 %v5126, %v5246
      %5248 = vmatmul.bf16.gmra.mxu0 %v5036
      %v5249 = vpop.f32.mrf.mxu0
      %v5250 = vadd.f32 %v5129, %v5249
      %v5251 = vpop.f32.mrf.mxu0
      %v5252 = vadd.f32 %v5131, %v5251
      %5253 = vdwg.mxu0
      %v5254 = vld [vmem:[#allocation6 + $0x10] sm:$0xf]
      %v5255 = vld [vmem:[#allocation6 + $0x14] sm:$0xf]
      %v5256 = vld [vmem:[#allocation6 + $0x18] sm:$0xf]
      %v5257 = vld [vmem:[#allocation6 + $0x1c] sm:$0xf]
      %v5258 = vld [vmem:[#allocation6 + $0x20] sm:$0xf]
      %v5259 = vld [vmem:[#allocation6 + $0x24] sm:$0xf]
      %v5260 = vld [vmem:[#allocation6 + $0x28] sm:$0xf]
      %v5261 = vld [vmem:[#allocation6 + $0x2c] sm:$0xf]
      %v5262 = vld [vmem:[#allocation6 + $0x30] sm:$0xf]
      %v5263 = vld [vmem:[#allocation6 + $0x34] sm:$0xf]
      %v5264 = vld [vmem:[#allocation6 + $0x38] sm:$0xf]
      %v5265 = vld [vmem:[#allocation6 + $0x3c] sm:$0xf]
      %v5266 = vld [vmem:[#allocation6 + $0x40] sm:$0xf]
      %v5267 = vld [vmem:[#allocation6 + $0x44] sm:$0xf]
      %v5268 = vld [vmem:[#allocation6 + $0x48] sm:$0xf]
      %v5269 = vld [vmem:[#allocation6 + $0x4c] sm:$0xf]
      %v5270 = vld [vmem:[#allocation6 + $0x50] sm:$0xf]
      %v5271 = vld [vmem:[#allocation6 + $0x54] sm:$0xf]
      %v5272 = vld [vmem:[#allocation6 + $0x58] sm:$0xf]
      %v5273 = vld [vmem:[#allocation6 + $0x5c] sm:$0xf]
      %v5274 = vld [vmem:[#allocation6 + $0x60] sm:$0xf]
      %v5275 = vld [vmem:[#allocation6 + $0x64] sm:$0xf]
      %v5276 = vld [vmem:[#allocation6 + $0x68] sm:$0xf]
      %v5277 = vld [vmem:[#allocation6 + $0x6c] sm:$0xf]
      %v5278 = vld [vmem:[#allocation6 + $0x70] sm:$0xf]
      %v5279 = vld [vmem:[#allocation6 + $0x74] sm:$0xf]
      %v5280 = vld [vmem:[#allocation6 + $0x78] sm:$0xf]
      %v5281 = vld [vmem:[#allocation6 + $0x7c] sm:$0xf]
      %v5282 = vld [vmem:[#allocation6 + $0x80] sm:$0xf]
      %v5283 = vld [vmem:[#allocation6 + $0x84] sm:$0xf]
      %v5284 = vld [vmem:[#allocation6 + $0x88] sm:$0xf]
      %v5285 = vld [vmem:[#allocation6 + $0x8c] sm:$0xf]
      %s5286 = scalar_lea.vmem %s6, 56
      %v5287 = vld [vmem:[%s5286] sm:$0xf]
      %v5288 = vld [vmem:[%s5286 + $0x4] sm:$0xf]
      %v5289 = vld [vmem:[%s5286 + $0x8] sm:$0xf]
      %v5290 = vld [vmem:[%s5286 + $0xc] sm:$0xf]
      %v5291 = vld [vmem:[%s5286 + $0x10] sm:$0xf]
      %v5292 = vld [vmem:[%s5286 + $0x14] sm:$0xf]
      %v5293 = vld [vmem:[%s5286 + $0x18] sm:$0x3]
      %v5326 = vunpack.c.l.b16 %v5254
      %v5327 = vunpack.c.l.b16 %v5255
      %v5328 = vunpack.c.l.b16 %v5256
      %v5329 = vunpack.c.l.b16 %v5257
      %v5330 = vunpack.c.l.b16 %v5258
      %v5331 = vunpack.c.l.b16 %v5259
      %v5332 = vunpack.c.l.b16 %v5260
      %v5333 = vunpack.c.l.b16 %v5261
      %v5334 = vunpack.c.l.b16 %v5262
      %v5335 = vunpack.c.l.b16 %v5263
      %v5336 = vunpack.c.l.b16 %v5264
      %v5337 = vunpack.c.l.b16 %v5265
      %v5338 = vunpack.c.l.b16 %v5266
      %v5339 = vunpack.c.l.b16 %v5267
      %v5340 = vunpack.c.l.b16 %v5268
      %v5341 = vunpack.c.l.b16 %v5269
      %v5342 = vunpack.c.l.b16 %v5270
      %v5343 = vunpack.c.l.b16 %v5271
      %v5344 = vunpack.c.l.b16 %v5272
      %v5345 = vunpack.c.l.b16 %v5273
      %v5346 = vunpack.c.l.b16 %v5274
      %v5347 = vunpack.c.l.b16 %v5275
      %v5348 = vunpack.c.l.b16 %v5276
      %v5349 = vunpack.c.l.b16 %v5277
      %v5350 = vunpack.c.l.b16 %v5278
      %v5351 = vunpack.c.l.b16 %v5279
      %v5352 = vunpack.c.l.b16 %v5280
      %v5353 = vunpack.c.l.b16 %v5281
      %v5354 = vunpack.c.l.b16 %v5282
      %v5355 = vunpack.c.l.b16 %v5283
      %v5356 = vunpack.c.l.b16 %v5284
      %v5357 = vunpack.c.l.b16 %v5285
      %v5358 = vpack.c.b16 %v5327, %v5326
      %v5359 = vpack.c.b16 %v5329, %v5328
      %v5360 = vpack.c.b16 %v5331, %v5330
      %v5361 = vpack.c.b16 %v5333, %v5332
      %v5362 = vpack.c.b16 %v5335, %v5334
      %v5363 = vpack.c.b16 %v5337, %v5336
      %v5364 = vpack.c.b16 %v5339, %v5338
      %v5365 = vpack.c.b16 %v5341, %v5340
      %v5366 = vpack.c.b16 %v5343, %v5342
      %v5367 = vpack.c.b16 %v5345, %v5344
      %v5368 = vpack.c.b16 %v5347, %v5346
      %v5369 = vpack.c.b16 %v5349, %v5348
      %v5370 = vpack.c.b16 %v5351, %v5350
      %v5371 = vpack.c.b16 %v5353, %v5352
      %v5372 = vpack.c.b16 %v5355, %v5354
      %v5373 = vpack.c.b16 %v5357, %v5356
      %v5381 = vunpack.c.l.b16 %v5287
      %v5382 = vunpack.c.l.b16 %v5288
      %v5383 = vunpack.c.l.b16 %v5289
      %v5384 = vunpack.c.l.b16 %v5290
      %v5385 = vunpack.c.l.b16 %v5291
      %v5386 = vunpack.c.l.b16 %v5292
      %v5387 = vunpack.c.l.b16 %v5293
      %v5388 = vpack.c.b16 %v5382, %v5381
      %v5389 = vpack.c.b16 %v5384, %v5383
      %v5390 = vpack.c.b16 %v5386, %v5385
      %v5391 = vpack.c.b16 %v5387, %v5387
      %v5396 = vsel %vm1507, %v5358, 0
      %v5399 = vsel %vm1507, %v5359, 0
      %v5402 = vsel %vm1507, %v5360, 0
      %v5405 = vsel %vm1507, %v5361, 0
      %v5408 = vsel %vm1507, %v5362, 0
      %v5411 = vsel %vm1507, %v5363, 0
      %v5414 = vsel %vm1507, %v5364, 0
      %v5417 = vsel %vm1507, %v5365, 0
      %v5420 = vsel %vm1507, %v5366, 0
      %v5423 = vsel %vm1507, %v5367, 0
      %v5426 = vsel %vm1507, %v5368, 0
      %v5429 = vsel %vm1507, %v5369, 0
      %v5432 = vsel %vm1507, %v5370, 0
      %v5435 = vsel %vm1507, %v5371, 0
      %v5438 = vsel %vm1507, %v5372, 0
      %v5441 = vsel %vm1507, %v5373, 0
      %v5444 = vsel %vm1538, %v5391, 0
      %5446 = vmatpush.bf16.msra.mxu0 0
      %5447 = vmatpush.bf16.msra.mxu0 0
      %5448 = vmatpush.bf16.msra.mxu0 0
      %5449 = vmatpush.bf16.msra.mxu0 0
      %5450 = vmatpush.bf16.msra.mxu0 %v5444
      %5451 = vmatpush.bf16.msra.mxu0 %v5390
      %5452 = vmatpush.bf16.msra.mxu0 %v5389
      %5453 = vmatpush.bf16.msra.mxu0 %v5388
      %5454 = vmatmul.bf16.gmra.mxu0 %v5396
      %v5455 = vpop.f32.mrf.mxu0
      %v5456 = vadd.f32 0.0, %v5455
      %v5457 = vpop.f32.mrf.mxu0
      %v5458 = vadd.f32 0.0, %v5457
      %5459 = vmatmul.bf16.gmra.mxu0 %v5399
      %v5460 = vpop.f32.mrf.mxu0
      %v5461 = vadd.f32 0.0, %v5460
      %v5462 = vpop.f32.mrf.mxu0
      %v5463 = vadd.f32 0.0, %v5462
      %5464 = vmatmul.bf16.gmra.mxu0 %v5402
      %v5465 = vpop.f32.mrf.mxu0
      %v5466 = vadd.f32 0.0, %v5465
      %v5467 = vpop.f32.mrf.mxu0
      %v5468 = vadd.f32 0.0, %v5467
      %5469 = vmatmul.bf16.gmra.mxu0 %v5405
      %v5470 = vpop.f32.mrf.mxu0
      %v5471 = vadd.f32 0.0, %v5470
      %v5472 = vpop.f32.mrf.mxu0
      %v5473 = vadd.f32 0.0, %v5472
      %5474 = vmatmul.bf16.gmra.mxu0 %v5408
      %v5475 = vpop.f32.mrf.mxu0
      %v5476 = vadd.f32 0.0, %v5475
      %v5477 = vpop.f32.mrf.mxu0
      %v5478 = vadd.f32 0.0, %v5477
      %5479 = vmatmul.bf16.gmra.mxu0 %v5411
      %v5480 = vpop.f32.mrf.mxu0
      %v5481 = vadd.f32 0.0, %v5480
      %v5482 = vpop.f32.mrf.mxu0
      %v5483 = vadd.f32 0.0, %v5482
      %5484 = vmatmul.bf16.gmra.mxu0 %v5414
      %v5485 = vpop.f32.mrf.mxu0
      %v5486 = vadd.f32 0.0, %v5485
      %v5487 = vpop.f32.mrf.mxu0
      %v5488 = vadd.f32 0.0, %v5487
      %5489 = vmatmul.bf16.gmra.mxu0 %v5417
      %v5490 = vpop.f32.mrf.mxu0
      %v5491 = vadd.f32 0.0, %v5490
      %v5492 = vpop.f32.mrf.mxu0
      %v5493 = vadd.f32 0.0, %v5492
      %5494 = vmatmul.bf16.gmra.mxu0 %v5420
      %v5495 = vpop.f32.mrf.mxu0
      %v5496 = vadd.f32 0.0, %v5495
      %v5497 = vpop.f32.mrf.mxu0
      %v5498 = vadd.f32 0.0, %v5497
      %5499 = vmatmul.bf16.gmra.mxu0 %v5423
      %v5500 = vpop.f32.mrf.mxu0
      %v5501 = vadd.f32 0.0, %v5500
      %v5502 = vpop.f32.mrf.mxu0
      %v5503 = vadd.f32 0.0, %v5502
      %5504 = vmatmul.bf16.gmra.mxu0 %v5426
      %v5505 = vpop.f32.mrf.mxu0
      %v5506 = vadd.f32 0.0, %v5505
      %v5507 = vpop.f32.mrf.mxu0
      %v5508 = vadd.f32 0.0, %v5507
      %5509 = vmatmul.bf16.gmra.mxu0 %v5429
      %v5510 = vpop.f32.mrf.mxu0
      %v5511 = vadd.f32 0.0, %v5510
      %v5512 = vpop.f32.mrf.mxu0
      %v5513 = vadd.f32 0.0, %v5512
      %5514 = vmatmul.bf16.gmra.mxu0 %v5432
      %v5515 = vpop.f32.mrf.mxu0
      %v5516 = vadd.f32 0.0, %v5515
      %v5517 = vpop.f32.mrf.mxu0
      %v5518 = vadd.f32 0.0, %v5517
      %5519 = vmatmul.bf16.gmra.mxu0 %v5435
      %v5520 = vpop.f32.mrf.mxu0
      %v5521 = vadd.f32 0.0, %v5520
      %v5522 = vpop.f32.mrf.mxu0
      %v5523 = vadd.f32 0.0, %v5522
      %5524 = vmatmul.bf16.gmra.mxu0 %v5438
      %v5525 = vpop.f32.mrf.mxu0
      %v5526 = vadd.f32 0.0, %v5525
      %v5527 = vpop.f32.mrf.mxu0
      %v5528 = vadd.f32 0.0, %v5527
      %5529 = vmatmul.bf16.gmra.mxu0 %v5441
      %v5530 = vpop.f32.mrf.mxu0
      %v5531 = vadd.f32 0.0, %v5530
      %v5532 = vpop.f32.mrf.mxu0
      %v5533 = vadd.f32 0.0, %v5532
      %5534 = vdwg.mxu0
      %v5535 = vadd.f32 %v5175, %v5456
      %v5536 = vadd.f32 %v5177, %v5458
      %v5537 = vadd.f32 %v5180, %v5461
      %v5538 = vadd.f32 %v5182, %v5463
      %v5539 = vadd.f32 %v5185, %v5466
      %v5540 = vadd.f32 %v5187, %v5468
      %v5541 = vadd.f32 %v5190, %v5471
      %v5542 = vadd.f32 %v5192, %v5473
      %v5543 = vadd.f32 %v5195, %v5476
      %v5544 = vadd.f32 %v5197, %v5478
      %v5545 = vadd.f32 %v5200, %v5481
      %v5546 = vadd.f32 %v5202, %v5483
      %v5547 = vadd.f32 %v5205, %v5486
      %v5548 = vadd.f32 %v5207, %v5488
      %v5549 = vadd.f32 %v5210, %v5491
      %v5550 = vadd.f32 %v5212, %v5493
      %v5551 = vadd.f32 %v5215, %v5496
      %v5552 = vadd.f32 %v5217, %v5498
      %v5553 = vadd.f32 %v5220, %v5501
      %v5554 = vadd.f32 %v5222, %v5503
      %v5555 = vadd.f32 %v5225, %v5506
      %v5556 = vadd.f32 %v5227, %v5508
      %v5557 = vadd.f32 %v5230, %v5511
      %v5558 = vadd.f32 %v5232, %v5513
      %v5559 = vadd.f32 %v5235, %v5516
      %v5560 = vadd.f32 %v5237, %v5518
      %v5561 = vadd.f32 %v5240, %v5521
      %v5562 = vadd.f32 %v5242, %v5523
      %v5563 = vadd.f32 %v5245, %v5526
      %v5564 = vadd.f32 %v5247, %v5528
      %v5565 = vadd.f32 %v5250, %v5531
      %v5566 = vadd.f32 %v5252, %v5533
      %v5567 = vld [vmem:[#allocation6 + $0x18] sm:$0xf]
      %v5568 = vld [vmem:[#allocation6 + $0x1c] sm:$0xf]
      %v5569 = vld [vmem:[#allocation6 + $0x20] sm:$0xf]
      %v5570 = vld [vmem:[#allocation6 + $0x24] sm:$0xf]
      %v5571 = vld [vmem:[#allocation6 + $0x28] sm:$0xf]
      %v5572 = vld [vmem:[#allocation6 + $0x2c] sm:$0xf]
      %v5573 = vld [vmem:[#allocation6 + $0x30] sm:$0xf]
      %v5574 = vld [vmem:[#allocation6 + $0x34] sm:$0xf]
      %v5575 = vld [vmem:[#allocation6 + $0x38] sm:$0xf]
      %v5576 = vld [vmem:[#allocation6 + $0x3c] sm:$0xf]
      %v5577 = vld [vmem:[#allocation6 + $0x40] sm:$0xf]
      %v5578 = vld [vmem:[#allocation6 + $0x44] sm:$0xf]
      %v5579 = vld [vmem:[#allocation6 + $0x48] sm:$0xf]
      %v5580 = vld [vmem:[#allocation6 + $0x4c] sm:$0xf]
      %v5581 = vld [vmem:[#allocation6 + $0x50] sm:$0xf]
      %v5582 = vld [vmem:[#allocation6 + $0x54] sm:$0xf]
      %v5583 = vld [vmem:[#allocation6 + $0x58] sm:$0xf]
      %v5584 = vld [vmem:[#allocation6 + $0x5c] sm:$0xf]
      %v5585 = vld [vmem:[#allocation6 + $0x60] sm:$0xf]
      %v5586 = vld [vmem:[#allocation6 + $0x64] sm:$0xf]
      %v5587 = vld [vmem:[#allocation6 + $0x68] sm:$0xf]
      %v5588 = vld [vmem:[#allocation6 + $0x6c] sm:$0xf]
      %v5589 = vld [vmem:[#allocation6 + $0x70] sm:$0xf]
      %v5590 = vld [vmem:[#allocation6 + $0x74] sm:$0xf]
      %v5591 = vld [vmem:[#allocation6 + $0x78] sm:$0xf]
      %v5592 = vld [vmem:[#allocation6 + $0x7c] sm:$0xf]
      %v5593 = vld [vmem:[#allocation6 + $0x80] sm:$0xf]
      %v5594 = vld [vmem:[#allocation6 + $0x84] sm:$0xf]
      %v5595 = vld [vmem:[#allocation6 + $0x88] sm:$0xf]
      %v5596 = vld [vmem:[#allocation6 + $0x8c] sm:$0xf]
      %v5597 = vld [vmem:[#allocation6 + $0x90] sm:$0xf]
      %v5598 = vld [vmem:[#allocation6 + $0x94] sm:$0xf]
      %s5599 = scalar_lea.vmem %s6, 84
      %v5600 = vld [vmem:[%s5599] sm:$0xf]
      %v5601 = vld [vmem:[%s5599 + $0x4] sm:$0xf]
      %v5602 = vld [vmem:[%s5599 + $0x8] sm:$0xf]
      %v5603 = vld [vmem:[%s5599 + $0xc] sm:$0xf]
      %v5604 = vld [vmem:[%s5599 + $0x10] sm:$0xf]
      %v5605 = vld [vmem:[%s5599 + $0x14] sm:$0xf]
      %v5606 = vld [vmem:[%s5599 + $0x18] sm:$0x3]
      %v5639 = vunpack.c.l.b16 %v5567
      %v5640 = vunpack.c.l.b16 %v5568
      %v5641 = vunpack.c.l.b16 %v5569
      %v5642 = vunpack.c.l.b16 %v5570
      %v5643 = vunpack.c.l.b16 %v5571
      %v5644 = vunpack.c.l.b16 %v5572
      %v5645 = vunpack.c.l.b16 %v5573
      %v5646 = vunpack.c.l.b16 %v5574
      %v5647 = vunpack.c.l.b16 %v5575
      %v5648 = vunpack.c.l.b16 %v5576
      %v5649 = vunpack.c.l.b16 %v5577
      %v5650 = vunpack.c.l.b16 %v5578
      %v5651 = vunpack.c.l.b16 %v5579
      %v5652 = vunpack.c.l.b16 %v5580
      %v5653 = vunpack.c.l.b16 %v5581
      %v5654 = vunpack.c.l.b16 %v5582
      %v5655 = vunpack.c.l.b16 %v5583
      %v5656 = vunpack.c.l.b16 %v5584
      %v5657 = vunpack.c.l.b16 %v5585
      %v5658 = vunpack.c.l.b16 %v5586
      %v5659 = vunpack.c.l.b16 %v5587
      %v5660 = vunpack.c.l.b16 %v5588
      %v5661 = vunpack.c.l.b16 %v5589
      %v5662 = vunpack.c.l.b16 %v5590
      %v5663 = vunpack.c.l.b16 %v5591
      %v5664 = vunpack.c.l.b16 %v5592
      %v5665 = vunpack.c.l.b16 %v5593
      %v5666 = vunpack.c.l.b16 %v5594
      %v5667 = vunpack.c.l.b16 %v5595
      %v5668 = vunpack.c.l.b16 %v5596
      %v5669 = vunpack.c.l.b16 %v5597
      %v5670 = vunpack.c.l.b16 %v5598
      %v5671 = vpack.c.b16 %v5640, %v5639
      %v5672 = vpack.c.b16 %v5642, %v5641
      %v5673 = vpack.c.b16 %v5644, %v5643
      %v5674 = vpack.c.b16 %v5646, %v5645
      %v5675 = vpack.c.b16 %v5648, %v5647
      %v5676 = vpack.c.b16 %v5650, %v5649
      %v5677 = vpack.c.b16 %v5652, %v5651
      %v5678 = vpack.c.b16 %v5654, %v5653
      %v5679 = vpack.c.b16 %v5656, %v5655
      %v5680 = vpack.c.b16 %v5658, %v5657
      %v5681 = vpack.c.b16 %v5660, %v5659
      %v5682 = vpack.c.b16 %v5662, %v5661
      %v5683 = vpack.c.b16 %v5664, %v5663
      %v5684 = vpack.c.b16 %v5666, %v5665
      %v5685 = vpack.c.b16 %v5668, %v5667
      %v5686 = vpack.c.b16 %v5670, %v5669
      %v5694 = vunpack.c.l.b16 %v5600
      %v5695 = vunpack.c.l.b16 %v5601
      %v5696 = vunpack.c.l.b16 %v5602
      %v5697 = vunpack.c.l.b16 %v5603
      %v5698 = vunpack.c.l.b16 %v5604
      %v5699 = vunpack.c.l.b16 %v5605
      %v5700 = vunpack.c.l.b16 %v5606
      %v5701 = vpack.c.b16 %v5695, %v5694
      %v5702 = vpack.c.b16 %v5697, %v5696
      %v5703 = vpack.c.b16 %v5699, %v5698
      %v5704 = vpack.c.b16 %v5700, %v5700
      %v5709 = vsel %vm1507, %v5671, 0
      %v5712 = vsel %vm1507, %v5672, 0
      %v5715 = vsel %vm1507, %v5673, 0
      %v5718 = vsel %vm1507, %v5674, 0
      %v5721 = vsel %vm1507, %v5675, 0
      %v5724 = vsel %vm1507, %v5676, 0
      %v5727 = vsel %vm1507, %v5677, 0
      %v5730 = vsel %vm1507, %v5678, 0
      %v5733 = vsel %vm1507, %v5679, 0
      %v5736 = vsel %vm1507, %v5680, 0
      %v5739 = vsel %vm1507, %v5681, 0
      %v5742 = vsel %vm1507, %v5682, 0
      %v5745 = vsel %vm1507, %v5683, 0
      %v5748 = vsel %vm1507, %v5684, 0
      %v5751 = vsel %vm1507, %v5685, 0
      %v5754 = vsel %vm1507, %v5686, 0
      %v5757 = vsel %vm1538, %v5704, 0
      %5759 = vmatpush.bf16.msra.mxu0 0
      %5760 = vmatpush.bf16.msra.mxu0 0
      %5761 = vmatpush.bf16.msra.mxu0 0
      %5762 = vmatpush.bf16.msra.mxu0 0
      %5763 = vmatpush.bf16.msra.mxu0 %v5757
      %5764 = vmatpush.bf16.msra.mxu0 %v5703
      %5765 = vmatpush.bf16.msra.mxu0 %v5702
      %5766 = vmatpush.bf16.msra.mxu0 %v5701
      %5767 = vmatmul.bf16.gmra.mxu0 %v5709
      %v5768 = vpop.f32.mrf.mxu0
      %v5769 = vadd.f32 0.0, %v5768
      %v5770 = vpop.f32.mrf.mxu0
      %v5771 = vadd.f32 0.0, %v5770
      %5772 = vmatmul.bf16.gmra.mxu0 %v5712
      %v5773 = vpop.f32.mrf.mxu0
      %v5774 = vadd.f32 0.0, %v5773
      %v5775 = vpop.f32.mrf.mxu0
      %v5776 = vadd.f32 0.0, %v5775
      %5777 = vmatmul.bf16.gmra.mxu0 %v5715
      %v5778 = vpop.f32.mrf.mxu0
      %v5779 = vadd.f32 0.0, %v5778
      %v5780 = vpop.f32.mrf.mxu0
      %v5781 = vadd.f32 0.0, %v5780
      %5782 = vmatmul.bf16.gmra.mxu0 %v5718
      %v5783 = vpop.f32.mrf.mxu0
      %v5784 = vadd.f32 0.0, %v5783
      %v5785 = vpop.f32.mrf.mxu0
      %v5786 = vadd.f32 0.0, %v5785
      %5787 = vmatmul.bf16.gmra.mxu0 %v5721
      %v5788 = vpop.f32.mrf.mxu0
      %v5789 = vadd.f32 0.0, %v5788
      %v5790 = vpop.f32.mrf.mxu0
      %v5791 = vadd.f32 0.0, %v5790
      %5792 = vmatmul.bf16.gmra.mxu0 %v5724
      %v5793 = vpop.f32.mrf.mxu0
      %v5794 = vadd.f32 0.0, %v5793
      %v5795 = vpop.f32.mrf.mxu0
      %v5796 = vadd.f32 0.0, %v5795
      %5797 = vmatmul.bf16.gmra.mxu0 %v5727
      %v5798 = vpop.f32.mrf.mxu0
      %v5799 = vadd.f32 0.0, %v5798
      %v5800 = vpop.f32.mrf.mxu0
      %v5801 = vadd.f32 0.0, %v5800
      %5802 = vmatmul.bf16.gmra.mxu0 %v5730
      %v5803 = vpop.f32.mrf.mxu0
      %v5804 = vadd.f32 0.0, %v5803
      %v5805 = vpop.f32.mrf.mxu0
      %v5806 = vadd.f32 0.0, %v5805
      %5807 = vmatmul.bf16.gmra.mxu0 %v5733
      %v5808 = vpop.f32.mrf.mxu0
      %v5809 = vadd.f32 0.0, %v5808
      %v5810 = vpop.f32.mrf.mxu0
      %v5811 = vadd.f32 0.0, %v5810
      %5812 = vmatmul.bf16.gmra.mxu0 %v5736
      %v5813 = vpop.f32.mrf.mxu0
      %v5814 = vadd.f32 0.0, %v5813
      %v5815 = vpop.f32.mrf.mxu0
      %v5816 = vadd.f32 0.0, %v5815
      %5817 = vmatmul.bf16.gmra.mxu0 %v5739
      %v5818 = vpop.f32.mrf.mxu0
      %v5819 = vadd.f32 0.0, %v5818
      %v5820 = vpop.f32.mrf.mxu0
      %v5821 = vadd.f32 0.0, %v5820
      %5822 = vmatmul.bf16.gmra.mxu0 %v5742
      %v5823 = vpop.f32.mrf.mxu0
      %v5824 = vadd.f32 0.0, %v5823
      %v5825 = vpop.f32.mrf.mxu0
      %v5826 = vadd.f32 0.0, %v5825
      %5827 = vmatmul.bf16.gmra.mxu0 %v5745
      %v5828 = vpop.f32.mrf.mxu0
      %v5829 = vadd.f32 0.0, %v5828
      %v5830 = vpop.f32.mrf.mxu0
      %v5831 = vadd.f32 0.0, %v5830
      %5832 = vmatmul.bf16.gmra.mxu0 %v5748
      %v5833 = vpop.f32.mrf.mxu0
      %v5834 = vadd.f32 0.0, %v5833
      %v5835 = vpop.f32.mrf.mxu0
      %v5836 = vadd.f32 0.0, %v5835
      %5837 = vmatmul.bf16.gmra.mxu0 %v5751
      %v5838 = vpop.f32.mrf.mxu0
      %v5839 = vadd.f32 0.0, %v5838
      %v5840 = vpop.f32.mrf.mxu0
      %v5841 = vadd.f32 0.0, %v5840
      %5842 = vmatmul.bf16.gmra.mxu0 %v5754
      %v5843 = vpop.f32.mrf.mxu0
      %v5844 = vadd.f32 0.0, %v5843
      %v5845 = vpop.f32.mrf.mxu0
      %v5846 = vadd.f32 0.0, %v5845
      %5847 = vdwg.mxu0
      %v5848 = vadd.f32 %v5535, %v5769
      %v5849 = vadd.f32 %v5536, %v5771
      %v5850 = vadd.f32 %v5537, %v5774
      %v5851 = vadd.f32 %v5538, %v5776
      %v5852 = vadd.f32 %v5539, %v5779
      %v5853 = vadd.f32 %v5540, %v5781
      %v5854 = vadd.f32 %v5541, %v5784
      %v5855 = vadd.f32 %v5542, %v5786
      %v5856 = vadd.f32 %v5543, %v5789
      %v5857 = vadd.f32 %v5544, %v5791
      %v5858 = vadd.f32 %v5545, %v5794
      %v5859 = vadd.f32 %v5546, %v5796
      %v5860 = vadd.f32 %v5547, %v5799
      %v5861 = vadd.f32 %v5548, %v5801
      %v5862 = vadd.f32 %v5549, %v5804
      %v5863 = vadd.f32 %v5550, %v5806
      %v5864 = vadd.f32 %v5551, %v5809
      %v5865 = vadd.f32 %v5552, %v5811
      %v5866 = vadd.f32 %v5553, %v5814
      %v5867 = vadd.f32 %v5554, %v5816
      %v5868 = vadd.f32 %v5555, %v5819
      %v5869 = vadd.f32 %v5556, %v5821
      %v5870 = vadd.f32 %v5557, %v5824
      %v5871 = vadd.f32 %v5558, %v5826
      %v5872 = vadd.f32 %v5559, %v5829
      %v5873 = vadd.f32 %v5560, %v5831
      %v5874 = vadd.f32 %v5561, %v5834
      %v5875 = vadd.f32 %v5562, %v5836
      %v5876 = vadd.f32 %v5563, %v5839
      %v5877 = vadd.f32 %v5564, %v5841
      %v5878 = vadd.f32 %v5565, %v5844
      %v5879 = vadd.f32 %v5566, %v5846
      %v5880 = vld [vmem:[%s12] sm:$0x1]
      %v5882 = vperm.slane %v5880, 0
      %v5884 = vadd.f32 %v5848, %v5882
      %v5885 = vadd.f32 %v5849, %v5882
      %v5886 = vadd.f32 %v5850, %v5882
      %v5887 = vadd.f32 %v5851, %v5882
      %v5888 = vadd.f32 %v5852, %v5882
      %v5889 = vadd.f32 %v5853, %v5882
      %v5890 = vadd.f32 %v5854, %v5882
      %v5891 = vadd.f32 %v5855, %v5882
      %v5892 = vadd.f32 %v5856, %v5882
      %v5893 = vadd.f32 %v5857, %v5882
      %v5894 = vadd.f32 %v5858, %v5882
      %v5895 = vadd.f32 %v5859, %v5882
      %v5896 = vadd.f32 %v5860, %v5882
      %v5897 = vadd.f32 %v5861, %v5882
      %v5898 = vadd.f32 %v5862, %v5882
      %v5899 = vadd.f32 %v5863, %v5882
      %v5900 = vadd.f32 %v5864, %v5882
      %v5901 = vadd.f32 %v5865, %v5882
      %v5902 = vadd.f32 %v5866, %v5882
      %v5903 = vadd.f32 %v5867, %v5882
      %v5904 = vadd.f32 %v5868, %v5882
      %v5905 = vadd.f32 %v5869, %v5882
      %v5906 = vadd.f32 %v5870, %v5882
      %v5907 = vadd.f32 %v5871, %v5882
      %v5908 = vadd.f32 %v5872, %v5882
      %v5909 = vadd.f32 %v5873, %v5882
      %v5910 = vadd.f32 %v5874, %v5882
      %v5911 = vadd.f32 %v5875, %v5882
      %v5912 = vadd.f32 %v5876, %v5882
      %v5913 = vadd.f32 %v5877, %v5882
      %v5914 = vadd.f32 %v5878, %v5882
      %v5915 = vadd.f32 %v5879, %v5882
      %5916 = vst.msk [vmem:[%s440] sm:$0xff] %vm585, %v5884
      %5917 = vst.msk [vmem:[%s440 + $0x8] sm:$0xff] %vm585, %v5885
      %5918 = vst.msk [vmem:[%s440 + $0x10] sm:$0xff] %vm585, %v5886
      %5919 = vst.msk [vmem:[%s440 + $0x18] sm:$0xff] %vm585, %v5887
      %5920 = vst.msk [vmem:[%s440 + $0x20] sm:$0xff] %vm585, %v5888
      %5921 = vst.msk [vmem:[%s440 + $0x28] sm:$0xff] %vm585, %v5889
      %5922 = vst.msk [vmem:[%s440 + $0x30] sm:$0xff] %vm585, %v5890
      %5923 = vst.msk [vmem:[%s440 + $0x38] sm:$0xff] %vm585, %v5891
      %5924 = vst.msk [vmem:[%s440 + $0x40] sm:$0xff] %vm585, %v5892
      %5925 = vst.msk [vmem:[%s440 + $0x48] sm:$0xff] %vm585, %v5893
      %5926 = vst.msk [vmem:[%s440 + $0x50] sm:$0xff] %vm585, %v5894
      %5927 = vst.msk [vmem:[%s440 + $0x58] sm:$0xff] %vm585, %v5895
      %5928 = vst.msk [vmem:[%s440 + $0x60] sm:$0xff] %vm585, %v5896
      %5929 = vst.msk [vmem:[%s440 + $0x68] sm:$0xff] %vm585, %v5897
      %5930 = vst.msk [vmem:[%s440 + $0x70] sm:$0xff] %vm585, %v5898
      %5931 = vst.msk [vmem:[%s440 + $0x78] sm:$0xff] %vm585, %v5899
      %5932 = vst.msk [vmem:[%s440 + $0x80] sm:$0xff] %vm585, %v5900
      %5933 = vst.msk [vmem:[%s440 + $0x88] sm:$0xff] %vm585, %v5901
      %5934 = vst.msk [vmem:[%s440 + $0x90] sm:$0xff] %vm585, %v5902
      %5935 = vst.msk [vmem:[%s440 + $0x98] sm:$0xff] %vm585, %v5903
      %5936 = vst.msk [vmem:[%s440 + $0xa0] sm:$0xff] %vm585, %v5904
      %5937 = vst.msk [vmem:[%s440 + $0xa8] sm:$0xff] %vm585, %v5905
      %5938 = vst.msk [vmem:[%s440 + $0xb0] sm:$0xff] %vm585, %v5906
      %5939 = vst.msk [vmem:[%s440 + $0xb8] sm:$0xff] %vm585, %v5907
      %5940 = vst.msk [vmem:[%s440 + $0xc0] sm:$0xff] %vm585, %v5908
      %5941 = vst.msk [vmem:[%s440 + $0xc8] sm:$0xff] %vm585, %v5909
      %5942 = vst.msk [vmem:[%s440 + $0xd0] sm:$0xff] %vm585, %v5910
      %5943 = vst.msk [vmem:[%s440 + $0xd8] sm:$0xff] %vm585, %v5911
      %5944 = vst.msk [vmem:[%s440 + $0xe0] sm:$0xff] %vm585, %v5912
      %5945 = vst.msk [vmem:[%s440 + $0xe8] sm:$0xff] %vm585, %v5913
      %5946 = vst.msk [vmem:[%s440 + $0xf0] sm:$0xff] %vm585, %v5914
      %5947 = vst.msk [vmem:[%s440 + $0xf8] sm:$0xff] %vm585, %v5915
      %p5948 = scmp.lt.s32.totalorder %s24, 1
      %s5949 = scalar_select %p5948, %s24, 1
      %s5950 = smul.addr %s5949, 32
      %s5951 = smul.addr %s5950, 8
      %s5952 = scalar_lea.vmem %s13, %s5951
      // Predicated region
      $region73: #{autoencoder_forward.1} parent=71 // pred_check
        %p5953 = pneg %p320
      $region74: #{autoencoder_forward.1} parent=71 // pred_check_branch
        %5955 = sbr.rel (%p5953) target = $region76
      $region75: #{autoencoder_forward.1} parent=71 // pred_region
        _
      $region76: #{autoencoder_forward.1} parent=71 // pred_fallthru
        _
    $region72: #{autoencoder_forward.1} parent=5 // pred_fallthru
      _
    %p5956 = scmp.le.s32.totalorder 2, %s19
    // Predicated region
    $region77: #{autoencoder_forward.1} parent=5 // pred_check
      %p5957 = pneg %p5956
    $region78: #{autoencoder_forward.1} parent=5 // pred_check_branch
      %5959 = sbr.rel (%p5957) target = $region80
    $region79: #{autoencoder_forward.1} parent=5 // pred_region
      %s5960 = ssub.s32 %s19, 2
      // Predicated region
      $region81: #{autoencoder_forward.1} parent=79 // pred_check
        %p5961 = pneg %p326
      $region82: #{autoencoder_forward.1} parent=79 // pred_check_branch
        %5963 = sbr.rel (%p5961) target = $region84
      $region83: #{autoencoder_forward.1} parent=79 // pred_region
        %p5964 = scmp.lt.s32.totalorder %s25, 1
        %s5965 = scalar_select %p5964, %s25, 1
        %s5966 = smul.addr %s5965, 32
        %s5967 = smul.addr %s5966, 8
        %s5968 = scalar_lea.vmem %s13, %s5967
      $region84: #{autoencoder_forward.1} parent=79 // pred_fallthru
        _
    $region80: #{autoencoder_forward.1} parent=5 // pred_fallthru
      _
  $region6: #{autoencoder_forward.1} parent=0 // loop_footer
    %s23 = sadd.s32 1, %s19
  $region7: #{autoencoder_forward.1} parent=0 // loop_footer_branch
    %18 = sbr.rel target = $region3
  $region8: #{autoencoder_forward.1} parent=0 // loop_exit
    _

</llo_original>
